<compile_context>
chip_gen: v5e
topology: v5e:2x2
jax: 0.10.0
libtpu: 0.0.40
codegen_flags: <defaults>
</compile_context>

<pallas_src>
import jax
import jax.numpy as jnp
from jax.experimental import pallas as pl
from jax.experimental.pallas import tpu as pltpu

EPS = 1e-5  # nn.BatchNorm2d default eps

# Fixed geometry implied by the module (Linear(1024, 64) after 256ch 2x2 map).
C_IN, C1, C2 = 16, 256, 256
H_IN = W_IN = 4            # conv1 input spatial
H1 = W1 = 4                # conv1 output spatial (padding=1)
H2 = W2 = 2                # conv2 output spatial (valid 3x3)
HID = 64


# ---------------------------------------------------------------------------
# Fused kernel
# ---------------------------------------------------------------------------
def _critic_fused_kernel(
    xw_ref,                      # (B*16, 144) bf16  conv1 im2col, rows=(h,w,b), cols=(tap,cin)
    w1_ref,                      # (144, 256)  bf16
    b1_ref, g1_ref, be1_ref,     # (1, 256)    f32
    w2_hbm,                      # (2304, 256) bf16  (memory_space=ANY, DMA'd manually)
    b2_ref, g2_ref, be2_ref,     # (1, 256)    f32
    wl1_hbm,                     # (4, 256, 64) bf16 (memory_space=ANY, DMA'd manually)
    bl1_ref,                     # (1, 64)     f32
    wl2_ref,                     # (1, 64)     f32
    bl2_ref,                     # (1, 1)      f32
    o_ref,                       # (B, 1)      f32
    y1_ref,                      # scratch (B*16, 256) f32  BN1 output, rows=(h,w,b)
    w2_vmem,                     # scratch (2304, 256) bf16
    wl1_vmem,                    # scratch (4, 256, 64) bf16
    dma_sem,                     # scratch DMA semaphores (2,)
):
    B = o_ref.shape[0]

    # ---- kick off the stage-2/3 weight DMAs; they overlap conv1 + BN1 ------
    w2_cp = pltpu.make_async_copy(w2_hbm, w2_vmem, dma_sem.at[0])
    wl1_cp = pltpu.make_async_copy(wl1_hbm, wl1_vmem, dma_sem.at[1])
    w2_cp.start()
    wl1_cp.start()

    # ---- conv1: one deep MXU dot -> bias -> ReLU -> BN1 (batch stats) ------
    acc1 = jnp.dot(xw_ref[...], w1_ref[...], preferred_element_type=jnp.float32)
    y = jnp.maximum(acc1 + b1_ref[...], 0.0)
    n1 = float(B * H1 * W1)
    mean1 = jnp.sum(y, axis=0, keepdims=True) * (1.0 / n1)
    yc = y - mean1
    var1 = jnp.sum(yc * yc, axis=0, keepdims=True) * (1.0 / n1)   # two-pass var
    y1_ref[...] = yc * (jax.lax.rsqrt(var1 + EPS) * g1_ref[...]) + be1_ref[...]

    # ---- conv2: lane-dense im2col from contiguous row blocks, 2 deep dots --
    # y1 rows are ordered (h, w, b); for tap (i, j) and output row ho, the
    # needed rows {(ho+i, j..j+1, all b)} are one contiguous (2B)-row block.
    w2_cp.wait()
    rb = W1 * B                              # rows per h-group of y1 (= 4B)

    def tap_windows(ho):
        pieces = []
        for i in range(3):
            for j in range(3):
                start = (ho + i) * rb + j * B
                pieces.append(y1_ref[pl.ds(start, 2 * B), :])     # (2B, 256)
        # (2B, 2304): lane block t = i*3+j holds tap t; rows ordered (wo, b)
        return jnp.concatenate(pieces, axis=-1).astype(jnp.bfloat16)

    w2m = w2_vmem[...]
    acc_t = jnp.dot(tap_windows(0), w2m, preferred_element_type=jnp.float32)  # ho=0
    acc_b = jnp.dot(tap_windows(1), w2m, preferred_element_type=jnp.float32)  # ho=1

    yt = jnp.maximum(acc_t + b2_ref[...], 0.0)
    yb = jnp.maximum(acc_b + b2_ref[...], 0.0)
    n2 = float(B * H2 * W2)
    mean2 = (jnp.sum(yt, axis=0, keepdims=True)
             + jnp.sum(yb, axis=0, keepdims=True)) * (1.0 / n2)
    yt_c = yt - mean2
    yb_c = yb - mean2
    var2 = (jnp.sum(yt_c * yt_c, axis=0, keepdims=True)
            + jnp.sum(yb_c * yb_c, axis=0, keepdims=True)) * (1.0 / n2)
    scale2 = jax.lax.rsqrt(var2 + EPS) * g2_ref[...]
    zt = yt_c * scale2 + be2_ref[...]        # rows: s=0 then s=1, each ordered by b
    zb = yb_c * scale2 + be2_ref[...]        # rows: s=2 then s=3

    # ---- MLP head: flatten permutation folded into wl1, 4 accumulated dots -
    wl1_cp.wait()
    h = jnp.dot(zt[0:B].astype(jnp.bfloat16), wl1_vmem[0],
                preferred_element_type=jnp.float32)                        # s=0
    h = h + jnp.dot(zt[B:2 * B].astype(jnp.bfloat16), wl1_vmem[1],
                    preferred_element_type=jnp.float32)                    # s=1
    h = h + jnp.dot(zb[0:B].astype(jnp.bfloat16), wl1_vmem[2],
                    preferred_element_type=jnp.float32)                    # s=2
    h = h + jnp.dot(zb[B:2 * B].astype(jnp.bfloat16), wl1_vmem[3],
                    preferred_element_type=jnp.float32)                    # s=3
    h = jnp.maximum(h + bl1_ref[...], 0.0)
    # linear2 (64 -> 1): VPU/XLU lane reduction instead of a 1-wide MXU matmul
    o_ref[...] = jnp.sum(h * wl2_ref[...], axis=1, keepdims=True) + bl2_ref[...]


# ---------------------------------------------------------------------------
# One-time parameter layout preparation (hoisted out of the hot path)
# ---------------------------------------------------------------------------
def prepare_params(p):
    return {
        # conv weights: (Cout, Cin, kh, kw) -> (tap*Cin, Cout), bf16 for the MXU
        "w1": jnp.transpose(p["w1"], (2, 3, 1, 0))
                 .reshape(9 * C_IN, C1).astype(jnp.bfloat16),
        "b1": p["b1"].reshape(1, C1).astype(jnp.float32),
        "g1": p["g1"].reshape(1, C1).astype(jnp.float32),
        "be1": p["be1"].reshape(1, C1).astype(jnp.float32),
        "w2": jnp.transpose(p["w2"], (2, 3, 1, 0))
                 .reshape(9 * C1, C2).astype(jnp.bfloat16),
        "b2": p["b2"].reshape(1, C2).astype(jnp.float32),
        "g2": p["g2"].reshape(1, C2).astype(jnp.float32),
        "be2": p["be2"].reshape(1, C2).astype(jnp.float32),
        # linear1: torch flatten index k = c*4 + s; fold into weight:
        # wl1[s, c, o] = lw1[o, c*4 + s]
        "wl1": jnp.transpose(p["lw1"].reshape(HID, C2, H2 * W2), (2, 1, 0))
                  .astype(jnp.bfloat16),
        "bl1": p["lb1"].reshape(1, HID).astype(jnp.float32),
        "wl2": p["lw2"].reshape(1, HID).astype(jnp.float32),
        "bl2": p["lb2"].reshape(1, 1).astype(jnp.float32),
    }


# ---------------------------------------------------------------------------
# Forward wrapper: conv1 im2col (tiny) done in XLA, one fused kernel call
# ---------------------------------------------------------------------------
def critic_forward(x, pp):
    B, C, H, W = x.shape
    assert (C, H, W) == (C_IN, H_IN, W_IN)

    x_nhwc = jnp.transpose(x, (0, 2, 3, 1)).astype(jnp.float32)   # (B,4,4,16)
    x_pad = jnp.pad(x_nhwc, ((0, 0), (1, 1), (1, 1), (0, 0)))     # (B,6,6,16)
    # conv1 im2col: columns = (tap, cin); rows ordered (h, w, b) so the conv2
    # gather inside the kernel becomes contiguous row blocks.
    patches = jnp.concatenate(
        [x_pad[:, i:i + H1, j:j + W1, :] for i in range(3) for j in range(3)],
        axis=-1)                                                  # (B,4,4,144)
    xw = jnp.transpose(patches, (1, 2, 0, 3)).reshape(H1 * W1 * B, 9 * C_IN)
    xw = xw.astype(jnp.bfloat16)

    vmem = pl.BlockSpec(memory_space=pltpu.MemorySpace.VMEM)
    hbm = pl.BlockSpec(memory_space=pl.ANY)
    in_specs = [
        vmem, vmem, vmem, vmem, vmem,      # xw, w1, b1, g1, be1
        hbm, vmem, vmem, vmem,             # w2 (manual DMA), b2, g2, be2
        hbm, vmem, vmem, vmem,             # wl1 (manual DMA), bl1, wl2, bl2
    ]

    out = pl.pallas_call(
        _critic_fused_kernel,
        out_shape=jax.ShapeDtypeStruct((B, 1), jnp.float32),
        in_specs=in_specs,
        out_specs=vmem,
        scratch_shapes=[
            pltpu.VMEM((B * H1 * W1, C1), jnp.float32),     # y1 (conv1+BN1 out)
            pltpu.VMEM((9 * C1, C2), jnp.bfloat16),         # w2 staging
            pltpu.VMEM((H2 * W2, C2, HID), jnp.bfloat16),   # wl1 staging
            pltpu.SemaphoreType.DMA((2,)),
        ],
    )(
        xw,
        pp["w1"], pp["b1"], pp["g1"], pp["be1"],
        pp["w2"], pp["b2"], pp["g2"], pp["be2"],
        pp["wl1"], pp["bl1"], pp["wl2"], pp["bl2"],
    )
    return out


# ---------------------------------------------------------------------------
# Parameter init (PyTorch layouts, deterministic)
# ---------------------------------------------------------------------------
def init_params(key):
    ks = jax.random.split(key, 8)
    return {
        # conv1: Conv2d(16, 256, 3, padding=1)
        "w1": jax.random.normal(ks[0], (256, 16, 3, 3), jnp.float32) * 0.05,
        "b1": jax.random.normal(ks[1], (256,), jnp.float32) * 0.01,
        "g1": jnp.ones((256,), jnp.float32),
        "be1": jnp.zeros((256,), jnp.float32),
        # conv2: Conv2d(256, 256, 3)
        "w2": jax.random.normal(ks[2], (256, 256, 3, 3), jnp.float32) * 0.02,
        "b2": jax.random.normal(ks[3], (256,), jnp.float32) * 0.01,
        "g2": jnp.ones((256,), jnp.float32),
        "be2": jnp.zeros((256,), jnp.float32),
        # linear1: Linear(1024, 64)  (torch layout (out, in))
        "lw1": jax.random.normal(ks[4], (64, 1024), jnp.float32) * 0.03,
        "lb1": jax.random.normal(ks[5], (64,), jnp.float32) * 0.01,
        # linear2: Linear(64, 1)
        "lw2": jax.random.normal(ks[6], (1, 64), jnp.float32) * 0.1,
        "lb2": jax.random.normal(ks[7], (1,), jnp.float32) * 0.01,
    }


if __name__ == "__main__":
    key = jax.random.PRNGKey(0)
    pkey, xkey = jax.random.split(key)
    params = init_params(pkey)
    pp = prepare_params(params)          # one-time weight re-layout + bf16 cast
    # Linear(1024, 64) after a 256-channel 2x2 feature map => input spatial 4x4.
    x = jax.random.normal(xkey, (2, 16, 4, 4), jnp.float32)      # NCHW
    fwd = jax.jit(critic_forward)
    out = jax.block_until_ready(fwd(x, pp))
    assert out.shape == (2, 1) and out.dtype == jnp.float32
    print("KERNEL_OK")
</pallas_src>

<mosaic_0001>
module attributes {stable_mosaic.version = 11 : i64} {
  func.func @_critic_fused_kernel(%arg0: memref<32x144xbf16, #tpu.memory_space<vmem>>, %arg1: memref<144x256xbf16, #tpu.memory_space<vmem>>, %arg2: memref<1x256xf32, #tpu.memory_space<vmem>>, %arg3: memref<1x256xf32, #tpu.memory_space<vmem>>, %arg4: memref<1x256xf32, #tpu.memory_space<vmem>>, %arg5: memref<2304x256xbf16, #tpu.memory_space<any>>, %arg6: memref<1x256xf32, #tpu.memory_space<vmem>>, %arg7: memref<1x256xf32, #tpu.memory_space<vmem>>, %arg8: memref<1x256xf32, #tpu.memory_space<vmem>>, %arg9: memref<4x256x64xbf16, #tpu.memory_space<any>>, %arg10: memref<1x64xf32, #tpu.memory_space<vmem>>, %arg11: memref<1x64xf32, #tpu.memory_space<vmem>>, %arg12: memref<1x1xf32, #tpu.memory_space<vmem>>, %arg13: memref<2x1xf32, #tpu.memory_space<vmem>>, %arg14: memref<32x256xf32, #tpu.memory_space<vmem>>, %arg15: memref<2304x256xbf16, #tpu.memory_space<vmem>>, %arg16: memref<4x256x64xbf16, #tpu.memory_space<vmem>>, %arg17: memref<2x!tpu.dma_semaphore, #tpu.memory_space<semaphore_mem>>) attributes {dimension_semantics = [], scalar_prefetch = 0 : i64, scratch_operands = 4 : i64, tpu.core_type = #tpu.core_type<tc>} {
    %c0_i32 = arith.constant 0 : i32
    %0 = tpu.memref_slice %arg17[%c0_i32] : memref<2x!tpu.dma_semaphore, #tpu.memory_space<semaphore_mem>> -> memref<1x!tpu.dma_semaphore, #tpu.memory_space<semaphore_mem>>
    %1 = tpu.memref_squeeze %0 : memref<1x!tpu.dma_semaphore, #tpu.memory_space<semaphore_mem>> -> memref<!tpu.dma_semaphore, #tpu.memory_space<semaphore_mem>>
    tpu.enqueue_dma source(%arg5 : memref<2304x256xbf16, #tpu.memory_space<any>>) target(%arg15 : memref<2304x256xbf16, #tpu.memory_space<vmem>>) target_semaphore(%1 : memref<!tpu.dma_semaphore, #tpu.memory_space<semaphore_mem>>)
    %c1_i32 = arith.constant 1 : i32
    %2 = tpu.memref_slice %arg17[%c1_i32] : memref<2x!tpu.dma_semaphore, #tpu.memory_space<semaphore_mem>> -> memref<1x!tpu.dma_semaphore, #tpu.memory_space<semaphore_mem>>
    %3 = tpu.memref_squeeze %2 : memref<1x!tpu.dma_semaphore, #tpu.memory_space<semaphore_mem>> -> memref<!tpu.dma_semaphore, #tpu.memory_space<semaphore_mem>>
    tpu.enqueue_dma source(%arg9 : memref<4x256x64xbf16, #tpu.memory_space<any>>) target(%arg16 : memref<4x256x64xbf16, #tpu.memory_space<vmem>>) target_semaphore(%3 : memref<!tpu.dma_semaphore, #tpu.memory_space<semaphore_mem>>)
    %c0 = arith.constant 0 : index
    %c0_0 = arith.constant 0 : index
    %4 = vector.load %arg0[%c0, %c0_0] : memref<32x144xbf16, #tpu.memory_space<vmem>>, vector<32x144xbf16>
    %c0_1 = arith.constant 0 : index
    %c0_2 = arith.constant 0 : index
    %5 = vector.load %arg1[%c0_1, %c0_2] : memref<144x256xbf16, #tpu.memory_space<vmem>>, vector<144x256xbf16>
    %cst = arith.constant dense<0.000000e+00> : vector<32x256xf32>
    %6 = tpu.matmul %4, %5, %cst {dimension_numbers = #tpu.dot_dimension_numbers<[1], [0], [0], [1], [0, 0, 1, 1], [], []>} : vector<32x144xbf16>, vector<144x256xbf16>, vector<32x256xf32> -> vector<32x256xf32>
    %c0_3 = arith.constant 0 : index
    %c0_4 = arith.constant 0 : index
    %7 = vector.load %arg2[%c0_3, %c0_4] : memref<1x256xf32, #tpu.memory_space<vmem>>, vector<1x256xf32>
    %8 = vector.broadcast %7 : vector<1x256xf32> to vector<32x256xf32>
    %9 = arith.addf %6, %8 : vector<32x256xf32>
    %cst_5 = arith.constant 0.000000e+00 : f32
    %10 = vector.broadcast %cst_5 : f32 to vector<32x256xf32>
    %11 = arith.maximumf %9, %10 : vector<32x256xf32>
    %cst_6 = arith.constant dense<0.000000e+00> : vector<256xf32>
    %12 = vector.multi_reduction <add>, %11, %cst_6 [0] : vector<32x256xf32> to vector<256xf32>
    %13 = vector.shape_cast %12 : vector<256xf32> to vector<1x256xf32>
    %cst_7 = arith.constant 3.125000e-02 : f32
    %14 = vector.broadcast %cst_7 : f32 to vector<1x256xf32>
    %15 = arith.mulf %13, %14 : vector<1x256xf32>
    %16 = vector.broadcast %15 : vector<1x256xf32> to vector<32x256xf32>
    %17 = arith.subf %11, %16 : vector<32x256xf32>
    %18 = arith.mulf %17, %17 : vector<32x256xf32>
    %cst_8 = arith.constant dense<0.000000e+00> : vector<256xf32>
    %19 = vector.multi_reduction <add>, %18, %cst_8 [0] : vector<32x256xf32> to vector<256xf32>
    %20 = vector.shape_cast %19 : vector<256xf32> to vector<1x256xf32>
    %cst_9 = arith.constant 3.125000e-02 : f32
    %21 = vector.broadcast %cst_9 : f32 to vector<1x256xf32>
    %22 = arith.mulf %20, %21 : vector<1x256xf32>
    %cst_10 = arith.constant 9.99999974E-6 : f32
    %23 = vector.broadcast %cst_10 : f32 to vector<1x256xf32>
    %24 = arith.addf %22, %23 : vector<1x256xf32>
    %25 = math.rsqrt %24 : vector<1x256xf32>
    %c0_11 = arith.constant 0 : index
    %c0_12 = arith.constant 0 : index
    %26 = vector.load %arg3[%c0_11, %c0_12] : memref<1x256xf32, #tpu.memory_space<vmem>>, vector<1x256xf32>
    %27 = arith.mulf %25, %26 : vector<1x256xf32>
    %28 = vector.broadcast %27 : vector<1x256xf32> to vector<32x256xf32>
    %29 = arith.mulf %17, %28 : vector<32x256xf32>
    %c0_13 = arith.constant 0 : index
    %c0_14 = arith.constant 0 : index
    %30 = vector.load %arg4[%c0_13, %c0_14] : memref<1x256xf32, #tpu.memory_space<vmem>>, vector<1x256xf32>
    %31 = vector.broadcast %30 : vector<1x256xf32> to vector<32x256xf32>
    %32 = arith.addf %29, %31 : vector<32x256xf32>
    %c0_15 = arith.constant 0 : index
    %c0_16 = arith.constant 0 : index
    %33 = vector.load %arg14[%c0_15, %c0_16] : memref<32x256xf32, #tpu.memory_space<vmem>>, vector<32x256xf32>
    tpu.vector_store %arg14[%c0_15, %c0_16], %32 {strides = array<i32>} : memref<32x256xf32, #tpu.memory_space<vmem>>, vector<32x256xf32>,
    %c0_i32_17 = arith.constant 0 : i32
    %34 = tpu.memref_slice %arg17[%c0_i32_17] : memref<2x!tpu.dma_semaphore, #tpu.memory_space<semaphore_mem>> -> memref<1x!tpu.dma_semaphore, #tpu.memory_space<semaphore_mem>>
    %35 = tpu.memref_squeeze %34 : memref<1x!tpu.dma_semaphore, #tpu.memory_space<semaphore_mem>> -> memref<!tpu.dma_semaphore, #tpu.memory_space<semaphore_mem>>
    tpu.wait_dma2 semaphore(%35 : memref<!tpu.dma_semaphore, #tpu.memory_space<semaphore_mem>>) src(%arg5 : memref<2304x256xbf16, #tpu.memory_space<any>>) dst(%arg15 : memref<2304x256xbf16, #tpu.memory_space<vmem>>)
    %c0_18 = arith.constant 0 : index
    %c0_19 = arith.constant 0 : index
    %36 = vector.load %arg15[%c0_18, %c0_19] : memref<2304x256xbf16, #tpu.memory_space<vmem>>, vector<2304x256xbf16>
    %c0_20 = arith.constant 0 : index
    %c0_21 = arith.constant 0 : index
    %37 = vector.load %arg14[%c0_20, %c0_21] : memref<32x256xf32, #tpu.memory_space<vmem>>, vector<4x256xf32>
    %c2 = arith.constant 2 : index
    %c0_22 = arith.constant 0 : index
    %38 = vector.load %arg14[%c2, %c0_22] : memref<32x256xf32, #tpu.memory_space<vmem>>, vector<4x256xf32>
    %c4 = arith.constant 4 : index
    %c0_23 = arith.constant 0 : index
    %39 = vector.load %arg14[%c4, %c0_23] : memref<32x256xf32, #tpu.memory_space<vmem>>, vector<4x256xf32>
    %c8 = arith.constant 8 : index
    %c0_24 = arith.constant 0 : index
    %40 = vector.load %arg14[%c8, %c0_24] : memref<32x256xf32, #tpu.memory_space<vmem>>, vector<4x256xf32>
    %c10 = arith.constant 10 : index
    %c0_25 = arith.constant 0 : index
    %41 = vector.load %arg14[%c10, %c0_25] : memref<32x256xf32, #tpu.memory_space<vmem>>, vector<4x256xf32>
    %c12 = arith.constant 12 : index
    %c0_26 = arith.constant 0 : index
    %42 = vector.load %arg14[%c12, %c0_26] : memref<32x256xf32, #tpu.memory_space<vmem>>, vector<4x256xf32>
    %c16 = arith.constant 16 : index
    %c0_27 = arith.constant 0 : index
    %43 = vector.load %arg14[%c16, %c0_27] : memref<32x256xf32, #tpu.memory_space<vmem>>, vector<4x256xf32>
    %c18 = arith.constant 18 : index
    %c0_28 = arith.constant 0 : index
    %44 = vector.load %arg14[%c18, %c0_28] : memref<32x256xf32, #tpu.memory_space<vmem>>, vector<4x256xf32>
    %c20 = arith.constant 20 : index
    %c0_29 = arith.constant 0 : index
    %45 = vector.load %arg14[%c20, %c0_29] : memref<32x256xf32, #tpu.memory_space<vmem>>, vector<4x256xf32>
    %46 = tpu.concatenate %37, %38, %39, %40, %41, %42, %43, %44, %45 in 1 : vector<4x256xf32>, vector<4x256xf32>, vector<4x256xf32>, vector<4x256xf32>, vector<4x256xf32>, vector<4x256xf32>, vector<4x256xf32>, vector<4x256xf32>, vector<4x256xf32> -> vector<4x2304xf32>
    %47 = arith.truncf %46 : vector<4x2304xf32> to vector<4x2304xbf16>
    %cst_30 = arith.constant dense<0.000000e+00> : vector<4x256xf32>
    %48 = tpu.matmul %47, %36, %cst_30 {dimension_numbers = #tpu.dot_dimension_numbers<[1], [0], [0], [1], [0, 0, 1, 1], [], []>} : vector<4x2304xbf16>, vector<2304x256xbf16>, vector<4x256xf32> -> vector<4x256xf32>
    %c8_31 = arith.constant 8 : index
    %c0_32 = arith.constant 0 : index
    %49 = vector.load %arg14[%c8_31, %c0_32] : memref<32x256xf32, #tpu.memory_space<vmem>>, vector<4x256xf32>
    %c10_33 = arith.constant 10 : index
    %c0_34 = arith.constant 0 : index
    %50 = vector.load %arg14[%c10_33, %c0_34] : memref<32x256xf32, #tpu.memory_space<vmem>>, vector<4x256xf32>
    %c12_35 = arith.constant 12 : index
    %c0_36 = arith.constant 0 : index
    %51 = vector.load %arg14[%c12_35, %c0_36] : memref<32x256xf32, #tpu.memory_space<vmem>>, vector<4x256xf32>
    %c16_37 = arith.constant 16 : index
    %c0_38 = arith.constant 0 : index
    %52 = vector.load %arg14[%c16_37, %c0_38] : memref<32x256xf32, #tpu.memory_space<vmem>>, vector<4x256xf32>
    %c18_39 = arith.constant 18 : index
    %c0_40 = arith.constant 0 : index
    %53 = vector.load %arg14[%c18_39, %c0_40] : memref<32x256xf32, #tpu.memory_space<vmem>>, vector<4x256xf32>
    %c20_41 = arith.constant 20 : index
    %c0_42 = arith.constant 0 : index
    %54 = vector.load %arg14[%c20_41, %c0_42] : memref<32x256xf32, #tpu.memory_space<vmem>>, vector<4x256xf32>
    %c24 = arith.constant 24 : index
    %c0_43 = arith.constant 0 : index
    %55 = vector.load %arg14[%c24, %c0_43] : memref<32x256xf32, #tpu.memory_space<vmem>>, vector<4x256xf32>
    %c26 = arith.constant 26 : index
    %c0_44 = arith.constant 0 : index
    %56 = vector.load %arg14[%c26, %c0_44] : memref<32x256xf32, #tpu.memory_space<vmem>>, vector<4x256xf32>
    %c28 = arith.constant 28 : index
    %c0_45 = arith.constant 0 : index
    %57 = vector.load %arg14[%c28, %c0_45] : memref<32x256xf32, #tpu.memory_space<vmem>>, vector<4x256xf32>
    %58 = tpu.concatenate %49, %50, %51, %52, %53, %54, %55, %56, %57 in 1 : vector<4x256xf32>, vector<4x256xf32>, vector<4x256xf32>, vector<4x256xf32>, vector<4x256xf32>, vector<4x256xf32>, vector<4x256xf32>, vector<4x256xf32>, vector<4x256xf32> -> vector<4x2304xf32>
    %59 = arith.truncf %58 : vector<4x2304xf32> to vector<4x2304xbf16>
    %cst_46 = arith.constant dense<0.000000e+00> : vector<4x256xf32>
    %60 = tpu.matmul %59, %36, %cst_46 {dimension_numbers = #tpu.dot_dimension_numbers<[1], [0], [0], [1], [0, 0, 1, 1], [], []>} : vector<4x2304xbf16>, vector<2304x256xbf16>, vector<4x256xf32> -> vector<4x256xf32>
    %c0_47 = arith.constant 0 : index
    %c0_48 = arith.constant 0 : index
    %61 = vector.load %arg6[%c0_47, %c0_48] : memref<1x256xf32, #tpu.memory_space<vmem>>, vector<1x256xf32>
    %62 = vector.broadcast %61 : vector<1x256xf32> to vector<4x256xf32>
    %63 = arith.addf %48, %62 : vector<4x256xf32>
    %cst_49 = arith.constant 0.000000e+00 : f32
    %64 = vector.broadcast %cst_49 : f32 to vector<4x256xf32>
    %65 = arith.maximumf %63, %64 : vector<4x256xf32>
    %c0_50 = arith.constant 0 : index
    %c0_51 = arith.constant 0 : index
    %66 = vector.load %arg6[%c0_50, %c0_51] : memref<1x256xf32, #tpu.memory_space<vmem>>, vector<1x256xf32>
    %67 = vector.broadcast %66 : vector<1x256xf32> to vector<4x256xf32>
    %68 = arith.addf %60, %67 : vector<4x256xf32>
    %cst_52 = arith.constant 0.000000e+00 : f32
    %69 = vector.broadcast %cst_52 : f32 to vector<4x256xf32>
    %70 = arith.maximumf %68, %69 : vector<4x256xf32>
    %cst_53 = arith.constant dense<0.000000e+00> : vector<256xf32>
    %71 = vector.multi_reduction <add>, %65, %cst_53 [0] : vector<4x256xf32> to vector<256xf32>
    %72 = vector.shape_cast %71 : vector<256xf32> to vector<1x256xf32>
    %cst_54 = arith.constant dense<0.000000e+00> : vector<256xf32>
    %73 = vector.multi_reduction <add>, %70, %cst_54 [0] : vector<4x256xf32> to vector<256xf32>
    %74 = vector.shape_cast %73 : vector<256xf32> to vector<1x256xf32>
    %75 = arith.addf %72, %74 : vector<1x256xf32>
    %cst_55 = arith.constant 1.250000e-01 : f32
    %76 = vector.broadcast %cst_55 : f32 to vector<1x256xf32>
    %77 = arith.mulf %75, %76 : vector<1x256xf32>
    %78 = vector.broadcast %77 : vector<1x256xf32> to vector<4x256xf32>
    %79 = arith.subf %65, %78 : vector<4x256xf32>
    %80 = vector.broadcast %77 : vector<1x256xf32> to vector<4x256xf32>
    %81 = arith.subf %70, %80 : vector<4x256xf32>
    %82 = arith.mulf %79, %79 : vector<4x256xf32>
    %cst_56 = arith.constant dense<0.000000e+00> : vector<256xf32>
    %83 = vector.multi_reduction <add>, %82, %cst_56 [0] : vector<4x256xf32> to vector<256xf32>
    %84 = vector.shape_cast %83 : vector<256xf32> to vector<1x256xf32>
    %85 = arith.mulf %81, %81 : vector<4x256xf32>
    %cst_57 = arith.constant dense<0.000000e+00> : vector<256xf32>
    %86 = vector.multi_reduction <add>, %85, %cst_57 [0] : vector<4x256xf32> to vector<256xf32>
    %87 = vector.shape_cast %86 : vector<256xf32> to vector<1x256xf32>
    %88 = arith.addf %84, %87 : vector<1x256xf32>
    %cst_58 = arith.constant 1.250000e-01 : f32
    %89 = vector.broadcast %cst_58 : f32 to vector<1x256xf32>
    %90 = arith.mulf %88, %89 : vector<1x256xf32>
    %cst_59 = arith.constant 9.99999974E-6 : f32
    %91 = vector.broadcast %cst_59 : f32 to vector<1x256xf32>
    %92 = arith.addf %90, %91 : vector<1x256xf32>
    %93 = math.rsqrt %92 : vector<1x256xf32>
    %c0_60 = arith.constant 0 : index
    %c0_61 = arith.constant 0 : index
    %94 = vector.load %arg7[%c0_60, %c0_61] : memref<1x256xf32, #tpu.memory_space<vmem>>, vector<1x256xf32>
    %95 = arith.mulf %93, %94 : vector<1x256xf32>
    %96 = vector.broadcast %95 : vector<1x256xf32> to vector<4x256xf32>
    %97 = arith.mulf %79, %96 : vector<4x256xf32>
    %c0_62 = arith.constant 0 : index
    %c0_63 = arith.constant 0 : index
    %98 = vector.load %arg8[%c0_62, %c0_63] : memref<1x256xf32, #tpu.memory_space<vmem>>, vector<1x256xf32>
    %99 = vector.broadcast %98 : vector<1x256xf32> to vector<4x256xf32>
    %100 = arith.addf %97, %99 : vector<4x256xf32>
    %101 = vector.broadcast %95 : vector<1x256xf32> to vector<4x256xf32>
    %102 = arith.mulf %81, %101 : vector<4x256xf32>
    %c0_64 = arith.constant 0 : index
    %c0_65 = arith.constant 0 : index
    %103 = vector.load %arg8[%c0_64, %c0_65] : memref<1x256xf32, #tpu.memory_space<vmem>>, vector<1x256xf32>
    %104 = vector.broadcast %103 : vector<1x256xf32> to vector<4x256xf32>
    %105 = arith.addf %102, %104 : vector<4x256xf32>
    %c1_i32_66 = arith.constant 1 : i32
    %106 = tpu.memref_slice %arg17[%c1_i32_66] : memref<2x!tpu.dma_semaphore, #tpu.memory_space<semaphore_mem>> -> memref<1x!tpu.dma_semaphore, #tpu.memory_space<semaphore_mem>>
    %107 = tpu.memref_squeeze %106 : memref<1x!tpu.dma_semaphore, #tpu.memory_space<semaphore_mem>> -> memref<!tpu.dma_semaphore, #tpu.memory_space<semaphore_mem>>
    tpu.wait_dma2 semaphore(%107 : memref<!tpu.dma_semaphore, #tpu.memory_space<semaphore_mem>>) src(%arg9 : memref<4x256x64xbf16, #tpu.memory_space<any>>) dst(%arg16 : memref<4x256x64xbf16, #tpu.memory_space<vmem>>)
    %108 = vector.extract_strided_slice %100 {offsets = [0, 0], sizes = [2, 256], strides = [1, 1]} : vector<4x256xf32> to vector<2x256xf32>
    %109 = arith.truncf %108 : vector<2x256xf32> to vector<2x256xbf16>
    %c0_67 = arith.constant 0 : index
    %c0_68 = arith.constant 0 : index
    %c0_69 = arith.constant 0 : index
    %110 = vector.load %arg16[%c0_67, %c0_68, %c0_69] : memref<4x256x64xbf16, #tpu.memory_space<vmem>>, vector<1x256x64xbf16>
    %111 = vector.shape_cast %110 : vector<1x256x64xbf16> to vector<256x64xbf16>
    %cst_70 = arith.constant dense<0.000000e+00> : vector<2x64xf32>
    %112 = tpu.matmul %109, %111, %cst_70 {dimension_numbers = #tpu.dot_dimension_numbers<[1], [0], [0], [1], [0, 0, 1, 1], [], []>} : vector<2x256xbf16>, vector<256x64xbf16>, vector<2x64xf32> -> vector<2x64xf32>
    %113 = vector.extract_strided_slice %100 {offsets = [2, 0], sizes = [2, 256], strides = [1, 1]} : vector<4x256xf32> to vector<2x256xf32>
    %114 = arith.truncf %113 : vector<2x256xf32> to vector<2x256xbf16>
    %c1 = arith.constant 1 : index
    %c0_71 = arith.constant 0 : index
    %c0_72 = arith.constant 0 : index
    %115 = vector.load %arg16[%c1, %c0_71, %c0_72] : memref<4x256x64xbf16, #tpu.memory_space<vmem>>, vector<1x256x64xbf16>
    %116 = vector.shape_cast %115 : vector<1x256x64xbf16> to vector<256x64xbf16>
    %cst_73 = arith.constant dense<0.000000e+00> : vector<2x64xf32>
    %117 = tpu.matmul %114, %116, %cst_73 {dimension_numbers = #tpu.dot_dimension_numbers<[1], [0], [0], [1], [0, 0, 1, 1], [], []>} : vector<2x256xbf16>, vector<256x64xbf16>, vector<2x64xf32> -> vector<2x64xf32>
    %118 = arith.addf %112, %117 : vector<2x64xf32>
    %119 = vector.extract_strided_slice %105 {offsets = [0, 0], sizes = [2, 256], strides = [1, 1]} : vector<4x256xf32> to vector<2x256xf32>
    %120 = arith.truncf %119 : vector<2x256xf32> to vector<2x256xbf16>
    %c2_74 = arith.constant 2 : index
    %c0_75 = arith.constant 0 : index
    %c0_76 = arith.constant 0 : index
    %121 = vector.load %arg16[%c2_74, %c0_75, %c0_76] : memref<4x256x64xbf16, #tpu.memory_space<vmem>>, vector<1x256x64xbf16>
    %122 = vector.shape_cast %121 : vector<1x256x64xbf16> to vector<256x64xbf16>
    %cst_77 = arith.constant dense<0.000000e+00> : vector<2x64xf32>
    %123 = tpu.matmul %120, %122, %cst_77 {dimension_numbers = #tpu.dot_dimension_numbers<[1], [0], [0], [1], [0, 0, 1, 1], [], []>} : vector<2x256xbf16>, vector<256x64xbf16>, vector<2x64xf32> -> vector<2x64xf32>
    %124 = arith.addf %118, %123 : vector<2x64xf32>
    %125 = vector.extract_strided_slice %105 {offsets = [2, 0], sizes = [2, 256], strides = [1, 1]} : vector<4x256xf32> to vector<2x256xf32>
    %126 = arith.truncf %125 : vector<2x256xf32> to vector<2x256xbf16>
    %c3 = arith.constant 3 : index
    %c0_78 = arith.constant 0 : index
    %c0_79 = arith.constant 0 : index
    %127 = vector.load %arg16[%c3, %c0_78, %c0_79] : memref<4x256x64xbf16, #tpu.memory_space<vmem>>, vector<1x256x64xbf16>
    %128 = vector.shape_cast %127 : vector<1x256x64xbf16> to vector<256x64xbf16>
    %cst_80 = arith.constant dense<0.000000e+00> : vector<2x64xf32>
    %129 = tpu.matmul %126, %128, %cst_80 {dimension_numbers = #tpu.dot_dimension_numbers<[1], [0], [0], [1], [0, 0, 1, 1], [], []>} : vector<2x256xbf16>, vector<256x64xbf16>, vector<2x64xf32> -> vector<2x64xf32>
    %130 = arith.addf %124, %129 : vector<2x64xf32>
    %c0_81 = arith.constant 0 : index
    %c0_82 = arith.constant 0 : index
    %131 = vector.load %arg10[%c0_81, %c0_82] : memref<1x64xf32, #tpu.memory_space<vmem>>, vector<1x64xf32>
    %132 = vector.broadcast %131 : vector<1x64xf32> to vector<2x64xf32>
    %133 = arith.addf %130, %132 : vector<2x64xf32>
    %cst_83 = arith.constant 0.000000e+00 : f32
    %134 = vector.broadcast %cst_83 : f32 to vector<2x64xf32>
    %135 = arith.maximumf %133, %134 : vector<2x64xf32>
    %c0_84 = arith.constant 0 : index
    %c0_85 = arith.constant 0 : index
    %136 = vector.load %arg11[%c0_84, %c0_85] : memref<1x64xf32, #tpu.memory_space<vmem>>, vector<1x64xf32>
    %137 = vector.broadcast %136 : vector<1x64xf32> to vector<2x64xf32>
    %138 = arith.mulf %135, %137 : vector<2x64xf32>
    %cst_86 = arith.constant dense<0.000000e+00> : vector<2xf32>
    %139 = vector.multi_reduction <add>, %138, %cst_86 [1] : vector<2x64xf32> to vector<2xf32>
    %140 = vector.shape_cast %139 : vector<2xf32> to vector<2x1xf32>
    %c0_87 = arith.constant 0 : index
    %c0_88 = arith.constant 0 : index
    %141 = vector.load %arg12[%c0_87, %c0_88] : memref<1x1xf32, #tpu.memory_space<vmem>>, vector<1x1xf32>
    %142 = vector.broadcast %141 : vector<1x1xf32> to vector<2x1xf32>
    %143 = arith.addf %140, %142 : vector<2x1xf32>
    %c0_89 = arith.constant 0 : index
    %c0_90 = arith.constant 0 : index
    %144 = vector.load %arg13[%c0_89, %c0_90] : memref<2x1xf32, #tpu.memory_space<vmem>>, vector<2x1xf32>
    tpu.vector_store %arg13[%c0_89, %c0_90], %143 {strides = array<i32>} : memref<2x1xf32, #tpu.memory_space<vmem>>, vector<2x1xf32>,
    return
  }
}

</mosaic_0001>

<llo_original>
// kernel: critic_forward.1
$region0: #{critic_forward.1}
  #allocation0 [shape = 'u32[]', space=smem, size = 0x4, offset = 0x4, fixed_abs, tag = 'smem constant byte address 0x4 - core index']
  #allocation1 [shape = 'u32[72,128]{1,0:T(1,128)}', space=vmem, size = 0x9000, scoped, tag = 'internal scratch']
  #allocation2 [shape = 'f32[32,256]{1,0:T(8,128)}', space=vmem, size = 0x8000, scoped, tag = 'scratch operand']
  #allocation3 [shape = 'bf16[2304,256]{1,0:T(8,128)(2,1)}', space=vmem, size = 0x120000, scoped, tag = 'scratch operand']
  #allocation4 [shape = 'bf16[4,256,64]{2,1,0:T(8,128)(2,1)}', space=vmem, size = 0x40000, scoped, tag = 'scratch operand']
  #allocation5 [shape = 's32[2]{0}', space=sflag, size = 0x8, scoped, tag = 'scratch operand']
  #allocation6 [shape = 'f32[1,1]{1,0:T(1,128)S(1)}', space=vmem, size = 0x200, scoped, tag = 'scoped memory for critic_forward.1']
  #allocation21 [shape = 's32[]', space=sflag, size = 0x4, offset = 0, fixed_abs, tag = 'sflag constant byte address 0x0 - dummy sync flag']
  #allocation22 [shape = 's32[]', space=sflag, size = 0x4, offset = 0, fixed_abs, tag = 'sflag constant byte address 0x0 - dummy sync flag']
  #allocation23 [shape = 'u32[]', space=smem, size = 0x4, offset = 0x44, fixed_abs, tag = 'smem constant byte address 0x44 - assertion arg 0']
  #allocation24 [shape = 'u32[]', space=smem, size = 0x4, offset = 0x48, fixed_abs, tag = 'smem constant byte address 0x48 - assertion arg 1']
  #allocation25 [shape = 's32[]', space=sflag, size = 0x4, offset = 0, fixed_abs, tag = 'sflag constant byte address 0x0 - dummy sync flag']
  %s0 = inlined_call_operand.vmem [shape: bf16[32,144], index: 0, kind: input, shape index: {}]
  %s1 = inlined_call_operand.hbm [shape: bf16[144,256], index: 1, kind: input, shape index: {}]
  %s2 = inlined_call_operand.hbm [shape: f32[1,256], index: 2, kind: input, shape index: {}]
  %s3 = inlined_call_operand.hbm [shape: f32[1,256], index: 3, kind: input, shape index: {}]
  %s4 = inlined_call_operand.hbm [shape: f32[1,256], index: 4, kind: input, shape index: {}]
  %s5 = inlined_call_operand.hbm [shape: bf16[2304,256], index: 5, kind: input, shape index: {}]
  %s6 = inlined_call_operand.hbm [shape: f32[1,256], index: 6, kind: input, shape index: {}]
  %s7 = inlined_call_operand.hbm [shape: f32[1,256], index: 7, kind: input, shape index: {}]
  %s8 = inlined_call_operand.hbm [shape: f32[1,256], index: 8, kind: input, shape index: {}]
  %s9 = inlined_call_operand.vmem [shape: bf16[4,256,64], index: 9, kind: input, shape index: {}]
  %s10 = inlined_call_operand.hbm [shape: f32[1,64], index: 10, kind: input, shape index: {}]
  %s11 = inlined_call_operand.hbm [shape: f32[1,64], index: 11, kind: input, shape index: {}]
  %s12 = inlined_call_operand.<no memory space> [shape: f32[1,1], index: 12, kind: input, shape index: {}]
  %s13 = inlined_call_operand.vmem [shape: f32[2,1], index: 13, kind: output, shape index: {}]
  %s14 = sld [smem:[#allocation0]]
  $region113: #{critic_forward.1} parent=0
    _
  %s16 = ssub.s32 1, %s14
  %s17 = scalar_select 0, %s16, %s14
  %v18 = vstv %s12
  %19 = vst [vmem:[#allocation6] sm:$0x1] %v18
  $region1: #{critic_forward.1} parent=0
    #allocation7 [shape = 'u8[73728]{0}', space=vmem, size = 0x12000, scoped, tag = 'input window, operand 1, single buffered']
    #allocation8 [shape = 's32[1]{0}', space=sflag, size = 0x4, scoped, tag = 'scoped memory for critic_forward.1']
    #allocation9 [shape = 'u8[1024]{0}', space=vmem, size = 0x400, scoped, tag = 'input window, operand 2, single buffered']
    #allocation10 [shape = 's32[1]{0}', space=sflag, size = 0x4, scoped, tag = 'scoped memory for critic_forward.1']
    #allocation11 [shape = 'u8[1024]{0}', space=vmem, size = 0x400, scoped, tag = 'input window, operand 3, single buffered']
    #allocation12 [shape = 'u8[1024]{0}', space=vmem, size = 0x400, scoped, tag = 'input window, operand 4, single buffered']
    #allocation13 [shape = 's32[1]{0}', space=sflag, size = 0x4, scoped, tag = 'scoped memory for critic_forward.1']
    #allocation14 [shape = 'u8[1024]{0}', space=vmem, size = 0x400, scoped, tag = 'input window, operand 6, single buffered']
    #allocation15 [shape = 'u8[1024]{0}', space=vmem, size = 0x400, scoped, tag = 'input window, operand 7, single buffered']
    #allocation16 [shape = 's32[1]{0}', space=sflag, size = 0x4, scoped, tag = 'scoped memory for critic_forward.1']
    #allocation17 [shape = 'u8[1024]{0}', space=vmem, size = 0x400, scoped, tag = 'input window, operand 8, single buffered']
    #allocation18 [shape = 'u8[512]{0}', space=vmem, size = 0x400, scoped, tag = 'input window, operand 10, single buffered']
    #allocation19 [shape = 's32[1]{0}', space=sflag, size = 0x4, scoped, tag = 'scoped memory for critic_forward.1']
    #allocation20 [shape = 'u8[512]{0}', space=vmem, size = 0x400, scoped, tag = 'input window, operand 11, single buffered']
    %20 = vsyncpa [#allocation8], 0
    %21 = vsyncpa [#allocation10], 0
    %22 = vsyncpa [#allocation13], 0
    %23 = vsyncpa [#allocation16], 0
    %24 = vsyncpa [#allocation19], 0
    // Predicated region
    $region2: #{critic_forward.1} parent=1 // pred_check
      _
    $region3: #{critic_forward.1} parent=1 // pred_check_branch
      %26 = sbr.rel (0) target = $region5
    $region4: #{critic_forward.1} parent=1 // pred_region
      _
    $region5: #{critic_forward.1} parent=1 // pred_fallthru
      _
    // Predicated region
    $region6: #{critic_forward.1} parent=1 // pred_check
      _
    $region7: #{critic_forward.1} parent=1 // pred_check_branch
      %28 = sbr.rel (0) target = $region9
    $region8: #{critic_forward.1} parent=1 // pred_region
      %30 = vsyncadd [#allocation8], 0
      %s31 = sshll.u32 %s1, 4
      %s32 = int_to_ptr.hbm [resolvable:$true] %s31
      %s33 = sshll.u32 [#allocation7], 4
      %s34 = int_to_ptr.vmem [resolvable:$true] %s33
      %39 = dma.hbm_to_vmem [thread:$0]  %s32, 2304, %s34, [#allocation8], 128, 128, 8
    $region9: #{critic_forward.1} parent=1 // pred_fallthru
      _
    // Predicated region
    $region10: #{critic_forward.1} parent=1 // pred_check
      _
    $region11: #{critic_forward.1} parent=1 // pred_check_branch
      %41 = sbr.rel (0) target = $region13
    $region12: #{critic_forward.1} parent=1 // pred_region
      %43 = vsyncadd [#allocation10], 0
      %s45 = sshll.u32 %s2, 4
      %s46 = int_to_ptr.hbm [resolvable:$true] %s45
      %s47 = sshll.u32 [#allocation9], 4
      %s48 = int_to_ptr.vmem [resolvable:$true] %s47
      %50 = dma.hbm_to_vmem [thread:$0]  %s46, 32, %s48, [#allocation10]
    $region13: #{critic_forward.1} parent=1 // pred_fallthru
      _
    // Predicated region
    $region14: #{critic_forward.1} parent=1 // pred_check
      _
    $region15: #{critic_forward.1} parent=1 // pred_check_branch
      %52 = sbr.rel (0) target = $region17
    $region16: #{critic_forward.1} parent=1 // pred_region
      %54 = vsyncadd [#allocation10], 0
      %s56 = sshll.u32 %s3, 4
      %s57 = int_to_ptr.hbm [resolvable:$true] %s56
      %s58 = sshll.u32 [#allocation11], 4
      %s59 = int_to_ptr.vmem [resolvable:$true] %s58
      %61 = dma.hbm_to_vmem [thread:$0]  %s57, 32, %s59, [#allocation10]
    $region17: #{critic_forward.1} parent=1 // pred_fallthru
      _
    // Predicated region
    $region18: #{critic_forward.1} parent=1 // pred_check
      _
    $region19: #{critic_forward.1} parent=1 // pred_check_branch
      %63 = sbr.rel (0) target = $region21
    $region20: #{critic_forward.1} parent=1 // pred_region
      %65 = vsyncadd [#allocation13], 0
      %s67 = sshll.u32 %s4, 4
      %s68 = int_to_ptr.hbm [resolvable:$true] %s67
      %s69 = sshll.u32 [#allocation12], 4
      %s70 = int_to_ptr.vmem [resolvable:$true] %s69
      %72 = dma.hbm_to_vmem [thread:$0]  %s68, 32, %s70, [#allocation13]
    $region21: #{critic_forward.1} parent=1 // pred_fallthru
      _
    // Predicated region
    $region22: #{critic_forward.1} parent=1 // pred_check
      _
    $region23: #{critic_forward.1} parent=1 // pred_check_branch
      %74 = sbr.rel (0) target = $region25
    $region24: #{critic_forward.1} parent=1 // pred_region
      %76 = vsyncadd [#allocation13], 0
      %s78 = sshll.u32 %s6, 4
      %s79 = int_to_ptr.hbm [resolvable:$true] %s78
      %s80 = sshll.u32 [#allocation14], 4
      %s81 = int_to_ptr.vmem [resolvable:$true] %s80
      %83 = dma.hbm_to_vmem [thread:$0]  %s79, 32, %s81, [#allocation13]
    $region25: #{critic_forward.1} parent=1 // pred_fallthru
      _
    // Predicated region
    $region26: #{critic_forward.1} parent=1 // pred_check
      _
    $region27: #{critic_forward.1} parent=1 // pred_check_branch
      %85 = sbr.rel (0) target = $region29
    $region28: #{critic_forward.1} parent=1 // pred_region
      %87 = vsyncadd [#allocation16], 0
      %s89 = sshll.u32 %s7, 4
      %s90 = int_to_ptr.hbm [resolvable:$true] %s89
      %s91 = sshll.u32 [#allocation15], 4
      %s92 = int_to_ptr.vmem [resolvable:$true] %s91
      %94 = dma.hbm_to_vmem [thread:$0]  %s90, 32, %s92, [#allocation16]
    $region29: #{critic_forward.1} parent=1 // pred_fallthru
      _
    // Predicated region
    $region30: #{critic_forward.1} parent=1 // pred_check
      _
    $region31: #{critic_forward.1} parent=1 // pred_check_branch
      %96 = sbr.rel (0) target = $region33
    $region32: #{critic_forward.1} parent=1 // pred_region
      %98 = vsyncadd [#allocation16], 0
      %s100 = sshll.u32 %s8, 4
      %s101 = int_to_ptr.hbm [resolvable:$true] %s100
      %s102 = sshll.u32 [#allocation17], 4
      %s103 = int_to_ptr.vmem [resolvable:$true] %s102
      %105 = dma.hbm_to_vmem [thread:$0]  %s101, 32, %s103, [#allocation16]
    $region33: #{critic_forward.1} parent=1 // pred_fallthru
      _
    // Predicated region
    $region34: #{critic_forward.1} parent=1 // pred_check
      _
    $region35: #{critic_forward.1} parent=1 // pred_check_branch
      %107 = sbr.rel (0) target = $region37
    $region36: #{critic_forward.1} parent=1 // pred_region
      %109 = vsyncadd [#allocation19], 0
      %s111 = sshll.u32 %s10, 4
      %s112 = int_to_ptr.hbm [resolvable:$true] %s111
      %s113 = sshll.u32 [#allocation18], 4
      %s114 = int_to_ptr.vmem [resolvable:$true] %s113
      %116 = dma.hbm_to_vmem [thread:$0]  %s112, 16, %s114, [#allocation19]
    $region37: #{critic_forward.1} parent=1 // pred_fallthru
      _
    // Predicated region
    $region38: #{critic_forward.1} parent=1 // pred_check
      _
    $region39: #{critic_forward.1} parent=1 // pred_check_branch
      %118 = sbr.rel (0) target = $region41
    $region40: #{critic_forward.1} parent=1 // pred_region
      %120 = vsyncadd [#allocation19], 0
      %s122 = sshll.u32 %s11, 4
      %s123 = int_to_ptr.hbm [resolvable:$true] %s122
      %s124 = sshll.u32 [#allocation20], 4
      %s125 = int_to_ptr.vmem [resolvable:$true] %s124
      %127 = dma.hbm_to_vmem [thread:$0]  %s123, 16, %s125, [#allocation19]
    $region41: #{critic_forward.1} parent=1 // pred_fallthru
      _
    // Predicated region
    $region42: #{critic_forward.1} parent=1 // pred_check
      _
    $region43: #{critic_forward.1} parent=1 // pred_check_branch
      %129 = sbr.rel (0) target = $region45
    $region44: #{critic_forward.1} parent=1 // pred_region
      _
    $region45: #{critic_forward.1} parent=1 // pred_fallthru
      _
    // Predicated region
    $region46: #{critic_forward.1} parent=1 // pred_check
      _
    $region47: #{critic_forward.1} parent=1 // pred_check_branch
      %131 = sbr.rel (0) target = $region49
    $region48: #{critic_forward.1} parent=1 // pred_region
      %133 = dma.done [#allocation8], 2304
    $region49: #{critic_forward.1} parent=1 // pred_fallthru
      _
    // Predicated region
    $region50: #{critic_forward.1} parent=1 // pred_check
      _
    $region51: #{critic_forward.1} parent=1 // pred_check_branch
      %135 = sbr.rel (0) target = $region53
    $region52: #{critic_forward.1} parent=1 // pred_region
      %137 = dma.done [#allocation10], 32
    $region53: #{critic_forward.1} parent=1 // pred_fallthru
      _
    // Predicated region
    $region54: #{critic_forward.1} parent=1 // pred_check
      _
    $region55: #{critic_forward.1} parent=1 // pred_check_branch
      %139 = sbr.rel (0) target = $region57
    $region56: #{critic_forward.1} parent=1 // pred_region
      %141 = dma.done [#allocation10], 32
    $region57: #{critic_forward.1} parent=1 // pred_fallthru
      _
    // Predicated region
    $region58: #{critic_forward.1} parent=1 // pred_check
      _
    $region59: #{critic_forward.1} parent=1 // pred_check_branch
      %143 = sbr.rel (0) target = $region61
    $region60: #{critic_forward.1} parent=1 // pred_region
      %145 = dma.done [#allocation13], 32
    $region61: #{critic_forward.1} parent=1 // pred_fallthru
      _
    // Predicated region
    $region62: #{critic_forward.1} parent=1 // pred_check
      _
    $region63: #{critic_forward.1} parent=1 // pred_check_branch
      %147 = sbr.rel (0) target = $region65
    $region64: #{critic_forward.1} parent=1 // pred_region
      %149 = dma.done [#allocation13], 32
    $region65: #{critic_forward.1} parent=1 // pred_fallthru
      _
    // Predicated region
    $region66: #{critic_forward.1} parent=1 // pred_check
      _
    $region67: #{critic_forward.1} parent=1 // pred_check_branch
      %151 = sbr.rel (0) target = $region69
    $region68: #{critic_forward.1} parent=1 // pred_region
      %153 = dma.done [#allocation16], 32
    $region69: #{critic_forward.1} parent=1 // pred_fallthru
      _
    // Predicated region
    $region70: #{critic_forward.1} parent=1 // pred_check
      _
    $region71: #{critic_forward.1} parent=1 // pred_check_branch
      %155 = sbr.rel (0) target = $region73
    $region72: #{critic_forward.1} parent=1 // pred_region
      %157 = dma.done [#allocation16], 32
    $region73: #{critic_forward.1} parent=1 // pred_fallthru
      _
    // Predicated region
    $region74: #{critic_forward.1} parent=1 // pred_check
      _
    $region75: #{critic_forward.1} parent=1 // pred_check_branch
      %159 = sbr.rel (0) target = $region77
    $region76: #{critic_forward.1} parent=1 // pred_region
      %161 = dma.done [#allocation19], 16
    $region77: #{critic_forward.1} parent=1 // pred_fallthru
      _
    // Predicated region
    $region78: #{critic_forward.1} parent=1 // pred_check
      _
    $region79: #{critic_forward.1} parent=1 // pred_check_branch
      %163 = sbr.rel (0) target = $region81
    $region80: #{critic_forward.1} parent=1 // pred_region
      %165 = dma.done [#allocation19], 16
    $region81: #{critic_forward.1} parent=1 // pred_fallthru
      _
    // Predicated region
    $region82: #{critic_forward.1} parent=1 // pred_check
      _
    $region83: #{critic_forward.1} parent=1 // pred_check_branch
      %168 = sbr.rel target = $region85
    $region84: #{critic_forward.1} parent=1 // pred_region
      %169 = sst [smem:[#allocation23]] [#allocation22]
      %170 = sst [smem:[#allocation24]] [#allocation21]
    $region85: #{critic_forward.1} parent=1 // pred_fallthru
      _
    %172 = shalt.err (0)
    %s174 = sshll.u32 %s5, 4
    %s175 = int_to_ptr.hbm [resolvable:$true] %s174
    %s176 = sshll.u32 [#allocation3], 4
    %s177 = int_to_ptr.vmem [resolvable:$true] %s176
    %179 = dma.hbm_to_vmem [thread:$0]  %s175, 36864, %s177, [#allocation5]
    %s180 = scalar_lea.sflag [#allocation5], 1
    // Predicated region
    $region86: #{critic_forward.1} parent=1 // pred_check
      _
    $region87: #{critic_forward.1} parent=1 // pred_check_branch
      %182 = sbr.rel (0) target = $region89
    $region88: #{critic_forward.1} parent=1 // pred_region
      loop: start=0, step=1, limit=1
      $region90: #{critic_forward.1} parent=88 // loop_pre_header
        _
      $region91: #{critic_forward.1} parent=88 // loop_header
        %s184 = sphi 0, %s188
        %p185 = scmp.ge.s32.totalorder %s184, 1
        %s189 = sphi %s9, %s9
        %s190 = sphi [#allocation4], [#allocation4]
      $region92: #{critic_forward.1} parent=88 // loop_header_branch
        %187 = sbr.rel (%p185) target = $region96
      $region93: #{critic_forward.1} parent=88 // loop_body
        %v191 = vld [vmem:[%s189] sm:$0xff]
        %192 = vst [vmem:[%s190] sm:$0xff] %v191
        %v193 = vld [vmem:[%s189 + $0x8] sm:$0xff]
        %194 = vst [vmem:[%s190 + $0x8] sm:$0xff] %v193
        %v195 = vld [vmem:[%s189 + $0x10] sm:$0xff]
        %196 = vst [vmem:[%s190 + $0x10] sm:$0xff] %v195
        %v197 = vld [vmem:[%s189 + $0x18] sm:$0xff]
        %198 = vst [vmem:[%s190 + $0x18] sm:$0xff] %v197
        %v199 = vld [vmem:[%s189 + $0x20] sm:$0xff]
        %200 = vst [vmem:[%s190 + $0x20] sm:$0xff] %v199
        %v201 = vld [vmem:[%s189 + $0x28] sm:$0xff]
        %202 = vst [vmem:[%s190 + $0x28] sm:$0xff] %v201
        %v203 = vld [vmem:[%s189 + $0x30] sm:$0xff]
        %204 = vst [vmem:[%s190 + $0x30] sm:$0xff] %v203
        %v205 = vld [vmem:[%s189 + $0x38] sm:$0xff]
        %206 = vst [vmem:[%s190 + $0x38] sm:$0xff] %v205
        %v207 = vld [vmem:[%s189 + $0x40] sm:$0xff]
        %208 = vst [vmem:[%s190 + $0x40] sm:$0xff] %v207
        %v209 = vld [vmem:[%s189 + $0x48] sm:$0xff]
        %210 = vst [vmem:[%s190 + $0x48] sm:$0xff] %v209
        %v211 = vld [vmem:[%s189 + $0x50] sm:$0xff]
        %212 = vst [vmem:[%s190 + $0x50] sm:$0xff] %v211
        %v213 = vld [vmem:[%s189 + $0x58] sm:$0xff]
        %214 = vst [vmem:[%s190 + $0x58] sm:$0xff] %v213
        %v215 = vld [vmem:[%s189 + $0x60] sm:$0xff]
        %216 = vst [vmem:[%s190 + $0x60] sm:$0xff] %v215
        %v217 = vld [vmem:[%s189 + $0x68] sm:$0xff]
        %218 = vst [vmem:[%s190 + $0x68] sm:$0xff] %v217
        %v219 = vld [vmem:[%s189 + $0x70] sm:$0xff]
        %220 = vst [vmem:[%s190 + $0x70] sm:$0xff] %v219
        %v221 = vld [vmem:[%s189 + $0x78] sm:$0xff]
        %222 = vst [vmem:[%s190 + $0x78] sm:$0xff] %v221
        %v223 = vld [vmem:[%s189 + $0x80] sm:$0xff]
        %224 = vst [vmem:[%s190 + $0x80] sm:$0xff] %v223
        %v225 = vld [vmem:[%s189 + $0x88] sm:$0xff]
        %226 = vst [vmem:[%s190 + $0x88] sm:$0xff] %v225
        %v227 = vld [vmem:[%s189 + $0x90] sm:$0xff]
        %228 = vst [vmem:[%s190 + $0x90] sm:$0xff] %v227
        %v229 = vld [vmem:[%s189 + $0x98] sm:$0xff]
        %230 = vst [vmem:[%s190 + $0x98] sm:$0xff] %v229
        %v231 = vld [vmem:[%s189 + $0xa0] sm:$0xff]
        %232 = vst [vmem:[%s190 + $0xa0] sm:$0xff] %v231
        %v233 = vld [vmem:[%s189 + $0xa8] sm:$0xff]
        %234 = vst [vmem:[%s190 + $0xa8] sm:$0xff] %v233
        %v235 = vld [vmem:[%s189 + $0xb0] sm:$0xff]
        %236 = vst [vmem:[%s190 + $0xb0] sm:$0xff] %v235
        %v237 = vld [vmem:[%s189 + $0xb8] sm:$0xff]
        %238 = vst [vmem:[%s190 + $0xb8] sm:$0xff] %v237
        %v239 = vld [vmem:[%s189 + $0xc0] sm:$0xff]
        %240 = vst [vmem:[%s190 + $0xc0] sm:$0xff] %v239
        %v241 = vld [vmem:[%s189 + $0xc8] sm:$0xff]
        %242 = vst [vmem:[%s190 + $0xc8] sm:$0xff] %v241
        %v243 = vld [vmem:[%s189 + $0xd0] sm:$0xff]
        %244 = vst [vmem:[%s190 + $0xd0] sm:$0xff] %v243
        %v245 = vld [vmem:[%s189 + $0xd8] sm:$0xff]
        %246 = vst [vmem:[%s190 + $0xd8] sm:$0xff] %v245
        %v247 = vld [vmem:[%s189 + $0xe0] sm:$0xff]
        %248 = vst [vmem:[%s190 + $0xe0] sm:$0xff] %v247
        %v249 = vld [vmem:[%s189 + $0xe8] sm:$0xff]
        %250 = vst [vmem:[%s190 + $0xe8] sm:$0xff] %v249
        %v251 = vld [vmem:[%s189 + $0xf0] sm:$0xff]
        %252 = vst [vmem:[%s190 + $0xf0] sm:$0xff] %v251
        %v253 = vld [vmem:[%s189 + $0xf8] sm:$0xff]
        %254 = vst [vmem:[%s190 + $0xf8] sm:$0xff] %v253
        %v255 = vld [vmem:[%s189 + $0x100] sm:$0xff]
        %256 = vst [vmem:[%s190 + $0x100] sm:$0xff] %v255
        %v257 = vld [vmem:[%s189 + $0x108] sm:$0xff]
        %258 = vst [vmem:[%s190 + $0x108] sm:$0xff] %v257
        %v259 = vld [vmem:[%s189 + $0x110] sm:$0xff]
        %260 = vst [vmem:[%s190 + $0x110] sm:$0xff] %v259
        %v261 = vld [vmem:[%s189 + $0x118] sm:$0xff]
        %262 = vst [vmem:[%s190 + $0x118] sm:$0xff] %v261
        %v263 = vld [vmem:[%s189 + $0x120] sm:$0xff]
        %264 = vst [vmem:[%s190 + $0x120] sm:$0xff] %v263
        %v265 = vld [vmem:[%s189 + $0x128] sm:$0xff]
        %266 = vst [vmem:[%s190 + $0x128] sm:$0xff] %v265
        %v267 = vld [vmem:[%s189 + $0x130] sm:$0xff]
        %268 = vst [vmem:[%s190 + $0x130] sm:$0xff] %v267
        %v269 = vld [vmem:[%s189 + $0x138] sm:$0xff]
        %270 = vst [vmem:[%s190 + $0x138] sm:$0xff] %v269
        %v271 = vld [vmem:[%s189 + $0x140] sm:$0xff]
        %272 = vst [vmem:[%s190 + $0x140] sm:$0xff] %v271
        %v273 = vld [vmem:[%s189 + $0x148] sm:$0xff]
        %274 = vst [vmem:[%s190 + $0x148] sm:$0xff] %v273
        %v275 = vld [vmem:[%s189 + $0x150] sm:$0xff]
        %276 = vst [vmem:[%s190 + $0x150] sm:$0xff] %v275
        %v277 = vld [vmem:[%s189 + $0x158] sm:$0xff]
        %278 = vst [vmem:[%s190 + $0x158] sm:$0xff] %v277
        %v279 = vld [vmem:[%s189 + $0x160] sm:$0xff]
        %280 = vst [vmem:[%s190 + $0x160] sm:$0xff] %v279
        %v281 = vld [vmem:[%s189 + $0x168] sm:$0xff]
        %282 = vst [vmem:[%s190 + $0x168] sm:$0xff] %v281
        %v283 = vld [vmem:[%s189 + $0x170] sm:$0xff]
        %284 = vst [vmem:[%s190 + $0x170] sm:$0xff] %v283
        %v285 = vld [vmem:[%s189 + $0x178] sm:$0xff]
        %286 = vst [vmem:[%s190 + $0x178] sm:$0xff] %v285
        %v287 = vld [vmem:[%s189 + $0x180] sm:$0xff]
        %288 = vst [vmem:[%s190 + $0x180] sm:$0xff] %v287
        %v289 = vld [vmem:[%s189 + $0x188] sm:$0xff]
        %290 = vst [vmem:[%s190 + $0x188] sm:$0xff] %v289
        %v291 = vld [vmem:[%s189 + $0x190] sm:$0xff]
        %292 = vst [vmem:[%s190 + $0x190] sm:$0xff] %v291
        %v293 = vld [vmem:[%s189 + $0x198] sm:$0xff]
        %294 = vst [vmem:[%s190 + $0x198] sm:$0xff] %v293
        %v295 = vld [vmem:[%s189 + $0x1a0] sm:$0xff]
        %296 = vst [vmem:[%s190 + $0x1a0] sm:$0xff] %v295
        %v297 = vld [vmem:[%s189 + $0x1a8] sm:$0xff]
        %298 = vst [vmem:[%s190 + $0x1a8] sm:$0xff] %v297
        %v299 = vld [vmem:[%s189 + $0x1b0] sm:$0xff]
        %300 = vst [vmem:[%s190 + $0x1b0] sm:$0xff] %v299
        %v301 = vld [vmem:[%s189 + $0x1b8] sm:$0xff]
        %302 = vst [vmem:[%s190 + $0x1b8] sm:$0xff] %v301
        %v303 = vld [vmem:[%s189 + $0x1c0] sm:$0xff]
        %304 = vst [vmem:[%s190 + $0x1c0] sm:$0xff] %v303
        %v305 = vld [vmem:[%s189 + $0x1c8] sm:$0xff]
        %306 = vst [vmem:[%s190 + $0x1c8] sm:$0xff] %v305
        %v307 = vld [vmem:[%s189 + $0x1d0] sm:$0xff]
        %308 = vst [vmem:[%s190 + $0x1d0] sm:$0xff] %v307
        %v309 = vld [vmem:[%s189 + $0x1d8] sm:$0xff]
        %310 = vst [vmem:[%s190 + $0x1d8] sm:$0xff] %v309
        %v311 = vld [vmem:[%s189 + $0x1e0] sm:$0xff]
        %312 = vst [vmem:[%s190 + $0x1e0] sm:$0xff] %v311
        %v313 = vld [vmem:[%s189 + $0x1e8] sm:$0xff]
        %314 = vst [vmem:[%s190 + $0x1e8] sm:$0xff] %v313
        %v315 = vld [vmem:[%s189 + $0x1f0] sm:$0xff]
        %316 = vst [vmem:[%s190 + $0x1f0] sm:$0xff] %v315
        %v317 = vld [vmem:[%s189 + $0x1f8] sm:$0xff]
        %318 = vst [vmem:[%s190 + $0x1f8] sm:$0xff] %v317
      $region94: #{critic_forward.1} parent=88 // loop_footer
        %s188 = sadd.s32 1, %s184
      $region95: #{critic_forward.1} parent=88 // loop_footer_branch
        %183 = sbr.rel target = $region91
      $region96: #{critic_forward.1} parent=88 // loop_exit
        _
    $region89: #{critic_forward.1} parent=1 // pred_fallthru
      _
    // Predicated region
    $region97: #{critic_forward.1} parent=1 // pred_check
      _
    $region98: #{critic_forward.1} parent=1 // pred_check_branch
      %320 = sbr.rel target = $region100
    $region99: #{critic_forward.1} parent=1 // pred_region
      _
    $region100: #{critic_forward.1} parent=1 // pred_fallthru
      _
    // Predicated region
    $region101: #{critic_forward.1} parent=1 // pred_check
      _
    $region102: #{critic_forward.1} parent=1 // pred_check_branch
      %323 = sbr.rel (0) target = $region104
    $region103: #{critic_forward.1} parent=1 // pred_region
      %324 = vsyncadd %s180, 8192
    $region104: #{critic_forward.1} parent=1 // pred_fallthru
      _
    %v325 = vld [vmem:[%s0] sm:$0xff]
    %v326 = vld [vmem:[%s0 + $0x8] sm:$0xff]
    %v327 = vld [vmem:[%s0 + $0x10] sm:$0xff]
    %v328 = vld [vmem:[%s0 + $0x18] sm:$0xff]
    %v329 = vld [vmem:[#allocation7] sm:$0xff]
    %v330 = vld [vmem:[#allocation7 + $0x8] sm:$0xff]
    %v331 = vld [vmem:[#allocation7 + $0x10] sm:$0xff]
    %v332 = vld [vmem:[#allocation7 + $0x18] sm:$0xff]
    %v333 = vld [vmem:[#allocation7 + $0x20] sm:$0xff]
    %v334 = vld [vmem:[#allocation7 + $0x28] sm:$0xff]
    %v335 = vld [vmem:[#allocation7 + $0x30] sm:$0xff]
    %v336 = vld [vmem:[#allocation7 + $0x38] sm:$0xff]
    %v337 = vld [vmem:[#allocation7 + $0x40] sm:$0xff]
    %v338 = vld [vmem:[#allocation7 + $0x48] sm:$0xff]
    %v339 = vld [vmem:[#allocation7 + $0x50] sm:$0xff]
    %v340 = vld [vmem:[#allocation7 + $0x58] sm:$0xff]
    %v341 = vld [vmem:[#allocation7 + $0x60] sm:$0xff]
    %v342 = vld [vmem:[#allocation7 + $0x68] sm:$0xff]
    %v343 = vld [vmem:[#allocation7 + $0x70] sm:$0xff]
    %v344 = vld [vmem:[#allocation7 + $0x78] sm:$0xff]
    %v345 = vld [vmem:[#allocation7 + $0x80] sm:$0xff]
    %v346 = vld [vmem:[#allocation7 + $0x88] sm:$0xff]
    %v347 = vld [vmem:[#allocation9] sm:$0x3]
    %v349 = vperm.slane %v347, 0
    %v350 = vperm.slane %v347, 1
    %v357 = vunpack.c.l.b16 %v325
    %v358 = vunpack.c.h.b16 %v325
    %v359 = vunpack.c.l.b16 %v326
    %v360 = vunpack.c.h.b16 %v326
    %v361 = vunpack.c.l.b16 %v327
    %v362 = vunpack.c.h.b16 %v327
    %v363 = vunpack.c.l.b16 %v328
    %v364 = vunpack.c.h.b16 %v328
    %v365 = vpack.c.b16 %v359, %v357
    %v366 = vpack.c.b16 %v360, %v358
    %v367 = vpack.c.b16 %v363, %v361
    %v368 = vpack.c.b16 %v364, %v362
    %v389 = vunpack.c.l.b16 %v329
    %v390 = vunpack.c.h.b16 %v329
    %v391 = vunpack.c.l.b16 %v330
    %v392 = vunpack.c.h.b16 %v330
    %v393 = vunpack.c.l.b16 %v331
    %v394 = vunpack.c.h.b16 %v331
    %v395 = vunpack.c.l.b16 %v332
    %v396 = vunpack.c.h.b16 %v332
    %v397 = vunpack.c.l.b16 %v333
    %v398 = vunpack.c.h.b16 %v333
    %v399 = vunpack.c.l.b16 %v334
    %v400 = vunpack.c.h.b16 %v334
    %v401 = vunpack.c.l.b16 %v335
    %v402 = vunpack.c.h.b16 %v335
    %v403 = vunpack.c.l.b16 %v336
    %v404 = vunpack.c.h.b16 %v336
    %v405 = vunpack.c.l.b16 %v337
    %v406 = vunpack.c.h.b16 %v337
    %v407 = vunpack.c.l.b16 %v338
    %v408 = vunpack.c.h.b16 %v338
    %v409 = vunpack.c.l.b16 %v339
    %v410 = vunpack.c.h.b16 %v339
    %v411 = vunpack.c.l.b16 %v340
    %v412 = vunpack.c.h.b16 %v340
    %v413 = vunpack.c.l.b16 %v341
    %v414 = vunpack.c.h.b16 %v341
    %v415 = vunpack.c.l.b16 %v342
    %v416 = vunpack.c.h.b16 %v342
    %v417 = vunpack.c.l.b16 %v343
    %v418 = vunpack.c.h.b16 %v343
    %v419 = vunpack.c.l.b16 %v344
    %v420 = vunpack.c.h.b16 %v344
    %v421 = vunpack.c.l.b16 %v345
    %v422 = vunpack.c.h.b16 %v345
    %v423 = vunpack.c.l.b16 %v346
    %v424 = vunpack.c.h.b16 %v346
    %v425 = vpack.c.b16 %v391, %v389
    %v426 = vpack.c.b16 %v392, %v390
    %v427 = vpack.c.b16 %v395, %v393
    %v428 = vpack.c.b16 %v396, %v394
    %v429 = vpack.c.b16 %v399, %v397
    %v430 = vpack.c.b16 %v400, %v398
    %v431 = vpack.c.b16 %v403, %v401
    %v432 = vpack.c.b16 %v404, %v402
    %v433 = vpack.c.b16 %v407, %v405
    %v434 = vpack.c.b16 %v408, %v406
    %v435 = vpack.c.b16 %v411, %v409
    %v436 = vpack.c.b16 %v412, %v410
    %v437 = vpack.c.b16 %v415, %v413
    %v438 = vpack.c.b16 %v416, %v414
    %v439 = vpack.c.b16 %v419, %v417
    %v440 = vpack.c.b16 %v420, %v418
    %v441 = vpack.c.b16 %v423, %v421
    %v442 = vpack.c.b16 %v424, %v422
    %vm461 = vcmask 130048
    %v463 = vsel %vm461, %v366, 0
    %v466 = vsel %vm461, %v368, 0
    %468 = vmatpush.bf16.msra.mxu0 %v439
    %469 = vmatpush.bf16.msra.mxu0 %v437
    %470 = vmatpush.bf16.msra.mxu0 %v435
    %471 = vmatpush.bf16.msra.mxu0 %v433
    %472 = vmatpush.bf16.msra.mxu0 %v431
    %473 = vmatpush.bf16.msra.mxu0 %v429
    %474 = vmatpush.bf16.msra.mxu0 %v427
    %475 = vmatpush.bf16.msra.mxu0 %v425
    %476 = vmatmul.bf16.gmra.mxu0 %v365
    %v477 = vpop.f32.mrf.mxu0
    %v478 = vadd.f32 %v349, %v477
    %v479 = vpop.f32.mrf.mxu0
    %v480 = vadd.f32 %v349, %v479
    %481 = vmatmul.bf16.gmra.mxu0 %v367
    %v482 = vpop.f32.mrf.mxu0
    %v483 = vadd.f32 %v349, %v482
    %v484 = vpop.f32.mrf.mxu0
    %v485 = vadd.f32 %v349, %v484
    %486 = vdwg.mxu0
    %487 = vmatpush.bf16.msra.mxu0 0
    %488 = vmatpush.bf16.msra.mxu0 0
    %489 = vmatpush.bf16.msra.mxu0 0
    %490 = vmatpush.bf16.msra.mxu0 0
    %491 = vmatpush.bf16.msra.mxu0 0
    %492 = vmatpush.bf16.msra.mxu0 0
    %493 = vmatpush.bf16.msra.mxu0 0
    %494 = vmatpush.bf16.msra.mxu0 %v441
    %495 = vmatmul.bf16.gmra.mxu0 %v463
    %v496 = vpop.f32.mrf.mxu0
    %v497 = vadd.f32 %v478, %v496
    %v498 = vpop.f32.mrf.mxu0
    %v499 = vadd.f32 %v480, %v498
    %500 = vmatmul.bf16.gmra.mxu0 %v466
    %v501 = vpop.f32.mrf.mxu0
    %v502 = vadd.f32 %v483, %v501
    %v503 = vpop.f32.mrf.mxu0
    %v504 = vadd.f32 %v485, %v503
    %505 = vdwg.mxu0
    %506 = vmatpush.bf16.msra.mxu0 %v440
    %507 = vmatpush.bf16.msra.mxu0 %v438
    %508 = vmatpush.bf16.msra.mxu0 %v436
    %509 = vmatpush.bf16.msra.mxu0 %v434
    %510 = vmatpush.bf16.msra.mxu0 %v432
    %511 = vmatpush.bf16.msra.mxu0 %v430
    %512 = vmatpush.bf16.msra.mxu0 %v428
    %513 = vmatpush.bf16.msra.mxu0 %v426
    %514 = vmatmul.bf16.gmra.mxu0 %v365
    %v515 = vpop.f32.mrf.mxu0
    %v516 = vadd.f32 %v350, %v515
    %v517 = vpop.f32.mrf.mxu0
    %v518 = vadd.f32 %v350, %v517
    %519 = vmatmul.bf16.gmra.mxu0 %v367
    %v520 = vpop.f32.mrf.mxu0
    %v521 = vadd.f32 %v350, %v520
    %v522 = vpop.f32.mrf.mxu0
    %v523 = vadd.f32 %v350, %v522
    %524 = vdwg.mxu0
    %525 = vmatpush.bf16.msra.mxu0 0
    %526 = vmatpush.bf16.msra.mxu0 0
    %527 = vmatpush.bf16.msra.mxu0 0
    %528 = vmatpush.bf16.msra.mxu0 0
    %529 = vmatpush.bf16.msra.mxu0 0
    %530 = vmatpush.bf16.msra.mxu0 0
    %531 = vmatpush.bf16.msra.mxu0 0
    %532 = vmatpush.bf16.msra.mxu0 %v442
    %533 = vmatmul.bf16.gmra.mxu0 %v463
    %v534 = vpop.f32.mrf.mxu0
    %v535 = vadd.f32 %v516, %v534
    %v536 = vpop.f32.mrf.mxu0
    %v537 = vadd.f32 %v518, %v536
    %538 = vmatmul.bf16.gmra.mxu0 %v466
    %v539 = vpop.f32.mrf.mxu0
    %v540 = vadd.f32 %v521, %v539
    %v541 = vpop.f32.mrf.mxu0
    %v542 = vadd.f32 %v523, %v541
    %543 = vdwg.mxu0
    %v544 = vmax.f32 %v497, 0.0
    %v545 = vmax.f32 %v535, 0.0
    %v546 = vmax.f32 %v499, 0.0
    %v547 = vmax.f32 %v537, 0.0
    %v548 = vmax.f32 %v502, 0.0
    %v549 = vmax.f32 %v540, 0.0
    %v550 = vmax.f32 %v504, 0.0
    %v551 = vmax.f32 %v542, 0.0
    %v552 = vadd.f32 %v544, %v546
    %v553 = vadd.f32 %v552, %v548
    %v554 = vadd.f32 %v553, %v550
    %v555 = vrot.slane %v554, 4
    %v556 = vadd.f32 %v554, %v555
    %v557 = vrot.slane %v556, 2
    %v558 = vadd.f32 %v556, %v557
    %v559 = vrot.slane %v558, 1
    %v560 = vadd.f32 %v558, %v559
    %v561 = vadd.f32 %v545, %v547
    %v562 = vadd.f32 %v561, %v549
    %v563 = vadd.f32 %v562, %v551
    %v564 = vrot.slane %v563, 4
    %v565 = vadd.f32 %v563, %v564
    %v566 = vrot.slane %v565, 2
    %v567 = vadd.f32 %v565, %v566
    %v568 = vrot.slane %v567, 1
    %v569 = vadd.f32 %v567, %v568
    %v570 = vmul.f32 %v560, 0.03125
    %v571 = vmul.f32 %v569, 0.03125
    %v572 = vsub.f32 %v544, %v570
    %v573 = vsub.f32 %v545, %v571
    %v574 = vsub.f32 %v546, %v570
    %v575 = vsub.f32 %v547, %v571
    %v576 = vsub.f32 %v548, %v570
    %v577 = vsub.f32 %v549, %v571
    %v578 = vsub.f32 %v550, %v570
    %v579 = vsub.f32 %v551, %v571
    %v580 = vmul.f32 %v572, %v572
    %v581 = vmul.f32 %v573, %v573
    %v582 = vmul.f32 %v574, %v574
    %v583 = vmul.f32 %v575, %v575
    %v584 = vmul.f32 %v576, %v576
    %v585 = vmul.f32 %v577, %v577
    %v586 = vmul.f32 %v578, %v578
    %v587 = vmul.f32 %v579, %v579
    %v588 = vadd.f32 %v580, %v582
    %v589 = vadd.f32 %v588, %v584
    %v590 = vadd.f32 %v589, %v586
    %v591 = vrot.slane %v590, 4
    %v592 = vadd.f32 %v590, %v591
    %v593 = vrot.slane %v592, 2
    %v594 = vadd.f32 %v592, %v593
    %v595 = vrot.slane %v594, 1
    %v596 = vadd.f32 %v594, %v595
    %v597 = vadd.f32 %v581, %v583
    %v598 = vadd.f32 %v597, %v585
    %v599 = vadd.f32 %v598, %v587
    %v600 = vrot.slane %v599, 4
    %v601 = vadd.f32 %v599, %v600
    %v602 = vrot.slane %v601, 2
    %v603 = vadd.f32 %v601, %v602
    %v604 = vrot.slane %v603, 1
    %v605 = vadd.f32 %v603, %v604
    %v606 = vmul.f32 %v596, 0.03125
    %v607 = vmul.f32 %v605, 0.03125
    %v608 = vadd.f32 %v606, 1e-05
    %v609 = vadd.f32 %v607, 1e-05
    %v610 = vrsqrt.pop %v608
    %v611 = vmul.f32 %v610, %v608
    %v612 = vmul.f32 %v611, %v610
    %v613 = vmul.f32 0.5, %v612
    %v614 = vsub.f32 1.5, %v613
    %v615 = vmul.f32 %v610, %v614
    %vm616 = vweird.f32 %v608
    %vm617 = vweird.f32 %v610
    %vm618 = vmor %vm616, %vm617
    %v619 = vsel %vm618, %v610, %v615
    %v620 = vrsqrt.pop %v609
    %v621 = vmul.f32 %v620, %v609
    %v622 = vmul.f32 %v621, %v620
    %v623 = vmul.f32 0.5, %v622
    %v624 = vsub.f32 1.5, %v623
    %v625 = vmul.f32 %v620, %v624
    %vm626 = vweird.f32 %v609
    %vm627 = vweird.f32 %v620
    %vm628 = vmor %vm626, %vm627
    %v629 = vsel %vm628, %v620, %v625
    %v630 = vld [vmem:[#allocation11] sm:$0x3]
    %v632 = vperm.slane %v630, 0
    %v633 = vperm.slane %v630, 1
    %v636 = vmul.f32 %v619, %v632
    %v637 = vmul.f32 %v629, %v633
    %v638 = vperm.slane %v636, 0
    %v639 = vperm.slane %v637, 0
    %v640 = vmul.f32 %v572, %v638
    %v641 = vmul.f32 %v573, %v639
    %v642 = vmul.f32 %v574, %v638
    %v643 = vmul.f32 %v575, %v639
    %v644 = vmul.f32 %v576, %v638
    %v645 = vmul.f32 %v577, %v639
    %v646 = vmul.f32 %v578, %v638
    %v647 = vmul.f32 %v579, %v639
    %v648 = vld [vmem:[#allocation12] sm:$0x3]
    %v650 = vperm.slane %v648, 0
    %v651 = vperm.slane %v648, 1
    %v654 = vadd.f32 %v640, %v650
    %v655 = vadd.f32 %v641, %v651
    %v656 = vadd.f32 %v642, %v650
    %v657 = vadd.f32 %v643, %v651
    %v658 = vadd.f32 %v644, %v650
    %v659 = vadd.f32 %v645, %v651
    %v660 = vadd.f32 %v646, %v650
    %v661 = vadd.f32 %v647, %v651
    %662 = vst [vmem:[#allocation2] sm:$0xff] %v654
    %663 = vst [vmem:[#allocation2 + $0x8] sm:$0xff] %v655
    %664 = vst [vmem:[#allocation2 + $0x10] sm:$0xff] %v656
    %665 = vst [vmem:[#allocation2 + $0x18] sm:$0xff] %v657
    %666 = vst [vmem:[#allocation2 + $0x20] sm:$0xff] %v658
    %667 = vst [vmem:[#allocation2 + $0x28] sm:$0xff] %v659
    %668 = vst [vmem:[#allocation2 + $0x30] sm:$0xff] %v660
    %669 = vst [vmem:[#allocation2 + $0x38] sm:$0xff] %v661
    %s670 = smul.u32 4, 288
    %s671 = smul.u32 %s670, 2
    %s672 = sshll.u32 %s671, 4
    %673 = dma.done [#allocation5], %s672
    %v674 = vld [vmem:[#allocation3] sm:$0xff]
    %v675 = vld [vmem:[#allocation3 + $0x8] sm:$0xff]
    %v676 = vld [vmem:[#allocation3 + $0x10] sm:$0xff]
    %v677 = vld [vmem:[#allocation3 + $0x18] sm:$0xff]
    %v678 = vld [vmem:[#allocation3 + $0x20] sm:$0xff]
    %v679 = vld [vmem:[#allocation3 + $0x28] sm:$0xff]
    %v680 = vld [vmem:[#allocation3 + $0x30] sm:$0xff]
    %v681 = vld [vmem:[#allocation3 + $0x38] sm:$0xff]
    %v682 = vld [vmem:[#allocation3 + $0x40] sm:$0xff]
    %v683 = vld [vmem:[#allocation3 + $0x48] sm:$0xff]
    %v684 = vld [vmem:[#allocation3 + $0x50] sm:$0xff]
    %v685 = vld [vmem:[#allocation3 + $0x58] sm:$0xff]
    %v686 = vld [vmem:[#allocation3 + $0x60] sm:$0xff]
    %v687 = vld [vmem:[#allocation3 + $0x68] sm:$0xff]
    %v688 = vld [vmem:[#allocation3 + $0x70] sm:$0xff]
    %v689 = vld [vmem:[#allocation3 + $0x78] sm:$0xff]
    %v690 = vld [vmem:[#allocation3 + $0x80] sm:$0xff]
    %v691 = vld [vmem:[#allocation3 + $0x88] sm:$0xff]
    %v692 = vld [vmem:[#allocation3 + $0x90] sm:$0xff]
    %v693 = vld [vmem:[#allocation3 + $0x98] sm:$0xff]
    %v694 = vld [vmem:[#allocation3 + $0xa0] sm:$0xff]
    %v695 = vld [vmem:[#allocation3 + $0xa8] sm:$0xff]
    %v696 = vld [vmem:[#allocation3 + $0xb0] sm:$0xff]
    %v697 = vld [vmem:[#allocation3 + $0xb8] sm:$0xff]
    %v698 = vld [vmem:[#allocation3 + $0xc0] sm:$0xff]
    %v699 = vld [vmem:[#allocation3 + $0xc8] sm:$0xff]
    %v700 = vld [vmem:[#allocation3 + $0xd0] sm:$0xff]
    %v701 = vld [vmem:[#allocation3 + $0xd8] sm:$0xff]
    %v702 = vld [vmem:[#allocation3 + $0xe0] sm:$0xff]
    %v703 = vld [vmem:[#allocation3 + $0xe8] sm:$0xff]
    %v704 = vld [vmem:[#allocation3 + $0xf0] sm:$0xff]
    %v705 = vld [vmem:[#allocation3 + $0xf8] sm:$0xff]
    %v706 = vld [vmem:[#allocation3 + $0x100] sm:$0xff]
    %v707 = vld [vmem:[#allocation3 + $0x108] sm:$0xff]
    %v708 = vld [vmem:[#allocation3 + $0x110] sm:$0xff]
    %v709 = vld [vmem:[#allocation3 + $0x118] sm:$0xff]
    %v710 = vld [vmem:[#allocation3 + $0x120] sm:$0xff]
    %v711 = vld [vmem:[#allocation3 + $0x128] sm:$0xff]
    %v712 = vld [vmem:[#allocation3 + $0x130] sm:$0xff]
    %v713 = vld [vmem:[#allocation3 + $0x138] sm:$0xff]
    %v714 = vld [vmem:[#allocation3 + $0x140] sm:$0xff]
    %v715 = vld [vmem:[#allocation3 + $0x148] sm:$0xff]
    %v716 = vld [vmem:[#allocation3 + $0x150] sm:$0xff]
    %v717 = vld [vmem:[#allocation3 + $0x158] sm:$0xff]
    %v718 = vld [vmem:[#allocation3 + $0x160] sm:$0xff]
    %v719 = vld [vmem:[#allocation3 + $0x168] sm:$0xff]
    %v720 = vld [vmem:[#allocation3 + $0x170] sm:$0xff]
    %v721 = vld [vmem:[#allocation3 + $0x178] sm:$0xff]
    %v722 = vld [vmem:[#allocation3 + $0x180] sm:$0xff]
    %v723 = vld [vmem:[#allocation3 + $0x188] sm:$0xff]
    %v724 = vld [vmem:[#allocation3 + $0x190] sm:$0xff]
    %v725 = vld [vmem:[#allocation3 + $0x198] sm:$0xff]
    %v726 = vld [vmem:[#allocation3 + $0x1a0] sm:$0xff]
    %v727 = vld [vmem:[#allocation3 + $0x1a8] sm:$0xff]
    %v728 = vld [vmem:[#allocation3 + $0x1b0] sm:$0xff]
    %v729 = vld [vmem:[#allocation3 + $0x1b8] sm:$0xff]
    %v730 = vld [vmem:[#allocation3 + $0x1c0] sm:$0xff]
    %v731 = vld [vmem:[#allocation3 + $0x1c8] sm:$0xff]
    %v732 = vld [vmem:[#allocation3 + $0x1d0] sm:$0xff]
    %v733 = vld [vmem:[#allocation3 + $0x1d8] sm:$0xff]
    %v734 = vld [vmem:[#allocation3 + $0x1e0] sm:$0xff]
    %v735 = vld [vmem:[#allocation3 + $0x1e8] sm:$0xff]
    %v736 = vld [vmem:[#allocation3 + $0x1f0] sm:$0xff]
    %v737 = vld [vmem:[#allocation3 + $0x1f8] sm:$0xff]
    %v738 = vld [vmem:[#allocation3 + $0x200] sm:$0xff]
    %v739 = vld [vmem:[#allocation3 + $0x208] sm:$0xff]
    %v740 = vld [vmem:[#allocation3 + $0x210] sm:$0xff]
    %v741 = vld [vmem:[#allocation3 + $0x218] sm:$0xff]
    %v742 = vld [vmem:[#allocation3 + $0x220] sm:$0xff]
    %v743 = vld [vmem:[#allocation3 + $0x228] sm:$0xff]
    %v744 = vld [vmem:[#allocation3 + $0x230] sm:$0xff]
    %v745 = vld [vmem:[#allocation3 + $0x238] sm:$0xff]
    %v746 = vld [vmem:[#allocation3 + $0x240] sm:$0xff]
    %v747 = vld [vmem:[#allocation3 + $0x248] sm:$0xff]
    %v748 = vld [vmem:[#allocation3 + $0x250] sm:$0xff]
    %v749 = vld [vmem:[#allocation3 + $0x258] sm:$0xff]
    %v750 = vld [vmem:[#allocation3 + $0x260] sm:$0xff]
    %v751 = vld [vmem:[#allocation3 + $0x268] sm:$0xff]
    %v752 = vld [vmem:[#allocation3 + $0x270] sm:$0xff]
    %v753 = vld [vmem:[#allocation3 + $0x278] sm:$0xff]
    %v754 = vld [vmem:[#allocation3 + $0x280] sm:$0xff]
    %v755 = vld [vmem:[#allocation3 + $0x288] sm:$0xff]
    %v756 = vld [vmem:[#allocation3 + $0x290] sm:$0xff]
    %v757 = vld [vmem:[#allocation3 + $0x298] sm:$0xff]
    %v758 = vld [vmem:[#allocation3 + $0x2a0] sm:$0xff]
    %v759 = vld [vmem:[#allocation3 + $0x2a8] sm:$0xff]
    %v760 = vld [vmem:[#allocation3 + $0x2b0] sm:$0xff]
    %v761 = vld [vmem:[#allocation3 + $0x2b8] sm:$0xff]
    %v762 = vld [vmem:[#allocation3 + $0x2c0] sm:$0xff]
    %v763 = vld [vmem:[#allocation3 + $0x2c8] sm:$0xff]
    %v764 = vld [vmem:[#allocation3 + $0x2d0] sm:$0xff]
    %v765 = vld [vmem:[#allocation3 + $0x2d8] sm:$0xff]
    %v766 = vld [vmem:[#allocation3 + $0x2e0] sm:$0xff]
    %v767 = vld [vmem:[#allocation3 + $0x2e8] sm:$0xff]
    %v768 = vld [vmem:[#allocation3 + $0x2f0] sm:$0xff]
    %v769 = vld [vmem:[#allocation3 + $0x2f8] sm:$0xff]
    %v770 = vld [vmem:[#allocation3 + $0x300] sm:$0xff]
    %v771 = vld [vmem:[#allocation3 + $0x308] sm:$0xff]
    %v772 = vld [vmem:[#allocation3 + $0x310] sm:$0xff]
    %v773 = vld [vmem:[#allocation3 + $0x318] sm:$0xff]
    %v774 = vld [vmem:[#allocation3 + $0x320] sm:$0xff]
    %v775 = vld [vmem:[#allocation3 + $0x328] sm:$0xff]
    %v776 = vld [vmem:[#allocation3 + $0x330] sm:$0xff]
    %v777 = vld [vmem:[#allocation3 + $0x338] sm:$0xff]
    %v778 = vld [vmem:[#allocation3 + $0x340] sm:$0xff]
    %v779 = vld [vmem:[#allocation3 + $0x348] sm:$0xff]
    %v780 = vld [vmem:[#allocation3 + $0x350] sm:$0xff]
    %v781 = vld [vmem:[#allocation3 + $0x358] sm:$0xff]
    %v782 = vld [vmem:[#allocation3 + $0x360] sm:$0xff]
    %v783 = vld [vmem:[#allocation3 + $0x368] sm:$0xff]
    %v784 = vld [vmem:[#allocation3 + $0x370] sm:$0xff]
    %v785 = vld [vmem:[#allocation3 + $0x378] sm:$0xff]
    %v786 = vld [vmem:[#allocation3 + $0x380] sm:$0xff]
    %v787 = vld [vmem:[#allocation3 + $0x388] sm:$0xff]
    %v788 = vld [vmem:[#allocation3 + $0x390] sm:$0xff]
    %v789 = vld [vmem:[#allocation3 + $0x398] sm:$0xff]
    %v790 = vld [vmem:[#allocation3 + $0x3a0] sm:$0xff]
    %v791 = vld [vmem:[#allocation3 + $0x3a8] sm:$0xff]
    %v792 = vld [vmem:[#allocation3 + $0x3b0] sm:$0xff]
    %v793 = vld [vmem:[#allocation3 + $0x3b8] sm:$0xff]
    %v794 = vld [vmem:[#allocation3 + $0x3c0] sm:$0xff]
    %v795 = vld [vmem:[#allocation3 + $0x3c8] sm:$0xff]
    %v796 = vld [vmem:[#allocation3 + $0x3d0] sm:$0xff]
    %v797 = vld [vmem:[#allocation3 + $0x3d8] sm:$0xff]
    %v798 = vld [vmem:[#allocation3 + $0x3e0] sm:$0xff]
    %v799 = vld [vmem:[#allocation3 + $0x3e8] sm:$0xff]
    %v800 = vld [vmem:[#allocation3 + $0x3f0] sm:$0xff]
    %v801 = vld [vmem:[#allocation3 + $0x3f8] sm:$0xff]
    %v802 = vld [vmem:[#allocation3 + $0x400] sm:$0xff]
    %v803 = vld [vmem:[#allocation3 + $0x408] sm:$0xff]
    %v804 = vld [vmem:[#allocation3 + $0x410] sm:$0xff]
    %v805 = vld [vmem:[#allocation3 + $0x418] sm:$0xff]
    %v806 = vld [vmem:[#allocation3 + $0x420] sm:$0xff]
    %v807 = vld [vmem:[#allocation3 + $0x428] sm:$0xff]
    %v808 = vld [vmem:[#allocation3 + $0x430] sm:$0xff]
    %v809 = vld [vmem:[#allocation3 + $0x438] sm:$0xff]
    %v810 = vld [vmem:[#allocation3 + $0x440] sm:$0xff]
    %v811 = vld [vmem:[#allocation3 + $0x448] sm:$0xff]
    %v812 = vld [vmem:[#allocation3 + $0x450] sm:$0xff]
    %v813 = vld [vmem:[#allocation3 + $0x458] sm:$0xff]
    %v814 = vld [vmem:[#allocation3 + $0x460] sm:$0xff]
    %v815 = vld [vmem:[#allocation3 + $0x468] sm:$0xff]
    %v816 = vld [vmem:[#allocation3 + $0x470] sm:$0xff]
    %v817 = vld [vmem:[#allocation3 + $0x478] sm:$0xff]
    %v818 = vld [vmem:[#allocation3 + $0x480] sm:$0xff]
    %v819 = vld [vmem:[#allocation3 + $0x488] sm:$0xff]
    %v820 = vld [vmem:[#allocation3 + $0x490] sm:$0xff]
    %v821 = vld [vmem:[#allocation3 + $0x498] sm:$0xff]
    %v822 = vld [vmem:[#allocation3 + $0x4a0] sm:$0xff]
    %v823 = vld [vmem:[#allocation3 + $0x4a8] sm:$0xff]
    %v824 = vld [vmem:[#allocation3 + $0x4b0] sm:$0xff]
    %v825 = vld [vmem:[#allocation3 + $0x4b8] sm:$0xff]
    %v826 = vld [vmem:[#allocation3 + $0x4c0] sm:$0xff]
    %v827 = vld [vmem:[#allocation3 + $0x4c8] sm:$0xff]
    %v828 = vld [vmem:[#allocation3 + $0x4d0] sm:$0xff]
    %v829 = vld [vmem:[#allocation3 + $0x4d8] sm:$0xff]
    %v830 = vld [vmem:[#allocation3 + $0x4e0] sm:$0xff]
    %v831 = vld [vmem:[#allocation3 + $0x4e8] sm:$0xff]
    %v832 = vld [vmem:[#allocation3 + $0x4f0] sm:$0xff]
    %v833 = vld [vmem:[#allocation3 + $0x4f8] sm:$0xff]
    %v834 = vld [vmem:[#allocation3 + $0x500] sm:$0xff]
    %v835 = vld [vmem:[#allocation3 + $0x508] sm:$0xff]
    %v836 = vld [vmem:[#allocation3 + $0x510] sm:$0xff]
    %v837 = vld [vmem:[#allocation3 + $0x518] sm:$0xff]
    %v838 = vld [vmem:[#allocation3 + $0x520] sm:$0xff]
    %v839 = vld [vmem:[#allocation3 + $0x528] sm:$0xff]
    %v840 = vld [vmem:[#allocation3 + $0x530] sm:$0xff]
    %v841 = vld [vmem:[#allocation3 + $0x538] sm:$0xff]
    %v842 = vld [vmem:[#allocation3 + $0x540] sm:$0xff]
    %v843 = vld [vmem:[#allocation3 + $0x548] sm:$0xff]
    %v844 = vld [vmem:[#allocation3 + $0x550] sm:$0xff]
    %v845 = vld [vmem:[#allocation3 + $0x558] sm:$0xff]
    %v846 = vld [vmem:[#allocation3 + $0x560] sm:$0xff]
    %v847 = vld [vmem:[#allocation3 + $0x568] sm:$0xff]
    %v848 = vld [vmem:[#allocation3 + $0x570] sm:$0xff]
    %v849 = vld [vmem:[#allocation3 + $0x578] sm:$0xff]
    %v850 = vld [vmem:[#allocation3 + $0x580] sm:$0xff]
    %v851 = vld [vmem:[#allocation3 + $0x588] sm:$0xff]
    %v852 = vld [vmem:[#allocation3 + $0x590] sm:$0xff]
    %v853 = vld [vmem:[#allocation3 + $0x598] sm:$0xff]
    %v854 = vld [vmem:[#allocation3 + $0x5a0] sm:$0xff]
    %v855 = vld [vmem:[#allocation3 + $0x5a8] sm:$0xff]
    %v856 = vld [vmem:[#allocation3 + $0x5b0] sm:$0xff]
    %v857 = vld [vmem:[#allocation3 + $0x5b8] sm:$0xff]
    %v858 = vld [vmem:[#allocation3 + $0x5c0] sm:$0xff]
    %v859 = vld [vmem:[#allocation3 + $0x5c8] sm:$0xff]
    %v860 = vld [vmem:[#allocation3 + $0x5d0] sm:$0xff]
    %v861 = vld [vmem:[#allocation3 + $0x5d8] sm:$0xff]
    %v862 = vld [vmem:[#allocation3 + $0x5e0] sm:$0xff]
    %v863 = vld [vmem:[#allocation3 + $0x5e8] sm:$0xff]
    %v864 = vld [vmem:[#allocation3 + $0x5f0] sm:$0xff]
    %v865 = vld [vmem:[#allocation3 + $0x5f8] sm:$0xff]
    %v866 = vld [vmem:[#allocation3 + $0x600] sm:$0xff]
    %v867 = vld [vmem:[#allocation3 + $0x608] sm:$0xff]
    %v868 = vld [vmem:[#allocation3 + $0x610] sm:$0xff]
    %v869 = vld [vmem:[#allocation3 + $0x618] sm:$0xff]
    %v870 = vld [vmem:[#allocation3 + $0x620] sm:$0xff]
    %v871 = vld [vmem:[#allocation3 + $0x628] sm:$0xff]
    %v872 = vld [vmem:[#allocation3 + $0x630] sm:$0xff]
    %v873 = vld [vmem:[#allocation3 + $0x638] sm:$0xff]
    %v874 = vld [vmem:[#allocation3 + $0x640] sm:$0xff]
    %v875 = vld [vmem:[#allocation3 + $0x648] sm:$0xff]
    %v876 = vld [vmem:[#allocation3 + $0x650] sm:$0xff]
    %v877 = vld [vmem:[#allocation3 + $0x658] sm:$0xff]
    %v878 = vld [vmem:[#allocation3 + $0x660] sm:$0xff]
    %v879 = vld [vmem:[#allocation3 + $0x668] sm:$0xff]
    %v880 = vld [vmem:[#allocation3 + $0x670] sm:$0xff]
    %v881 = vld [vmem:[#allocation3 + $0x678] sm:$0xff]
    %v882 = vld [vmem:[#allocation3 + $0x680] sm:$0xff]
    %v883 = vld [vmem:[#allocation3 + $0x688] sm:$0xff]
    %v884 = vld [vmem:[#allocation3 + $0x690] sm:$0xff]
    %v885 = vld [vmem:[#allocation3 + $0x698] sm:$0xff]
    %v886 = vld [vmem:[#allocation3 + $0x6a0] sm:$0xff]
    %v887 = vld [vmem:[#allocation3 + $0x6a8] sm:$0xff]
    %v888 = vld [vmem:[#allocation3 + $0x6b0] sm:$0xff]
    %v889 = vld [vmem:[#allocation3 + $0x6b8] sm:$0xff]
    %v890 = vld [vmem:[#allocation3 + $0x6c0] sm:$0xff]
    %v891 = vld [vmem:[#allocation3 + $0x6c8] sm:$0xff]
    %v892 = vld [vmem:[#allocation3 + $0x6d0] sm:$0xff]
    %v893 = vld [vmem:[#allocation3 + $0x6d8] sm:$0xff]
    %v894 = vld [vmem:[#allocation3 + $0x6e0] sm:$0xff]
    %v895 = vld [vmem:[#allocation3 + $0x6e8] sm:$0xff]
    %v896 = vld [vmem:[#allocation3 + $0x6f0] sm:$0xff]
    %v897 = vld [vmem:[#allocation3 + $0x6f8] sm:$0xff]
    %v898 = vld [vmem:[#allocation3 + $0x700] sm:$0xff]
    %v899 = vld [vmem:[#allocation3 + $0x708] sm:$0xff]
    %v900 = vld [vmem:[#allocation3 + $0x710] sm:$0xff]
    %v901 = vld [vmem:[#allocation3 + $0x718] sm:$0xff]
    %v902 = vld [vmem:[#allocation3 + $0x720] sm:$0xff]
    %v903 = vld [vmem:[#allocation3 + $0x728] sm:$0xff]
    %v904 = vld [vmem:[#allocation3 + $0x730] sm:$0xff]
    %v905 = vld [vmem:[#allocation3 + $0x738] sm:$0xff]
    %v906 = vld [vmem:[#allocation3 + $0x740] sm:$0xff]
    %v907 = vld [vmem:[#allocation3 + $0x748] sm:$0xff]
    %v908 = vld [vmem:[#allocation3 + $0x750] sm:$0xff]
    %v909 = vld [vmem:[#allocation3 + $0x758] sm:$0xff]
    %v910 = vld [vmem:[#allocation3 + $0x760] sm:$0xff]
    %v911 = vld [vmem:[#allocation3 + $0x768] sm:$0xff]
    %v912 = vld [vmem:[#allocation3 + $0x770] sm:$0xff]
    %v913 = vld [vmem:[#allocation3 + $0x778] sm:$0xff]
    %v914 = vld [vmem:[#allocation3 + $0x780] sm:$0xff]
    %v915 = vld [vmem:[#allocation3 + $0x788] sm:$0xff]
    %v916 = vld [vmem:[#allocation3 + $0x790] sm:$0xff]
    %v917 = vld [vmem:[#allocation3 + $0x798] sm:$0xff]
    %v918 = vld [vmem:[#allocation3 + $0x7a0] sm:$0xff]
    %v919 = vld [vmem:[#allocation3 + $0x7a8] sm:$0xff]
    %v920 = vld [vmem:[#allocation3 + $0x7b0] sm:$0xff]
    %v921 = vld [vmem:[#allocation3 + $0x7b8] sm:$0xff]
    %v922 = vld [vmem:[#allocation3 + $0x7c0] sm:$0xff]
    %v923 = vld [vmem:[#allocation3 + $0x7c8] sm:$0xff]
    %v924 = vld [vmem:[#allocation3 + $0x7d0] sm:$0xff]
    %v925 = vld [vmem:[#allocation3 + $0x7d8] sm:$0xff]
    %v926 = vld [vmem:[#allocation3 + $0x7e0] sm:$0xff]
    %v927 = vld [vmem:[#allocation3 + $0x7e8] sm:$0xff]
    %v928 = vld [vmem:[#allocation3 + $0x7f0] sm:$0xff]
    %v929 = vld [vmem:[#allocation3 + $0x7f8] sm:$0xff]
    %v930 = vld [vmem:[#allocation3 + $0x800] sm:$0xff]
    %v931 = vld [vmem:[#allocation3 + $0x808] sm:$0xff]
    %v932 = vld [vmem:[#allocation3 + $0x810] sm:$0xff]
    %v933 = vld [vmem:[#allocation3 + $0x818] sm:$0xff]
    %v934 = vld [vmem:[#allocation3 + $0x820] sm:$0xff]
    %v935 = vld [vmem:[#allocation3 + $0x828] sm:$0xff]
    %v936 = vld [vmem:[#allocation3 + $0x830] sm:$0xff]
    %v937 = vld [vmem:[#allocation3 + $0x838] sm:$0xff]
    %v938 = vld [vmem:[#allocation3 + $0x840] sm:$0xff]
    %v939 = vld [vmem:[#allocation3 + $0x848] sm:$0xff]
    %v940 = vld [vmem:[#allocation3 + $0x850] sm:$0xff]
    %v941 = vld [vmem:[#allocation3 + $0x858] sm:$0xff]
    %v942 = vld [vmem:[#allocation3 + $0x860] sm:$0xff]
    %v943 = vld [vmem:[#allocation3 + $0x868] sm:$0xff]
    %v944 = vld [vmem:[#allocation3 + $0x870] sm:$0xff]
    %v945 = vld [vmem:[#allocation3 + $0x878] sm:$0xff]
    %v946 = vld [vmem:[#allocation3 + $0x880] sm:$0xff]
    %v947 = vld [vmem:[#allocation3 + $0x888] sm:$0xff]
    %v948 = vld [vmem:[#allocation3 + $0x890] sm:$0xff]
    %v949 = vld [vmem:[#allocation3 + $0x898] sm:$0xff]
    %v950 = vld [vmem:[#allocation3 + $0x8a0] sm:$0xff]
    %v951 = vld [vmem:[#allocation3 + $0x8a8] sm:$0xff]
    %v952 = vld [vmem:[#allocation3 + $0x8b0] sm:$0xff]
    %v953 = vld [vmem:[#allocation3 + $0x8b8] sm:$0xff]
    %v954 = vld [vmem:[#allocation3 + $0x8c0] sm:$0xff]
    %v955 = vld [vmem:[#allocation3 + $0x8c8] sm:$0xff]
    %v956 = vld [vmem:[#allocation3 + $0x8d0] sm:$0xff]
    %v957 = vld [vmem:[#allocation3 + $0x8d8] sm:$0xff]
    %v958 = vld [vmem:[#allocation3 + $0x8e0] sm:$0xff]
    %v959 = vld [vmem:[#allocation3 + $0x8e8] sm:$0xff]
    %v960 = vld [vmem:[#allocation3 + $0x8f0] sm:$0xff]
    %v961 = vld [vmem:[#allocation3 + $0x8f8] sm:$0xff]
    %v962 = vld [vmem:[#allocation2] sm:$0xf]
    %v963 = vld [vmem:[#allocation2 + $0x8] sm:$0xf]
    %v964 = vld [vmem:[#allocation2] sm:$0x3c]
    %v965 = vld [vmem:[#allocation2 + $0x8] sm:$0x3c]
    %v966 = vld [vmem:[#allocation2] sm:$0xf0]
    %v967 = vld [vmem:[#allocation2 + $0x8] sm:$0xf0]
    %v968 = vld [vmem:[#allocation2 + $0x10] sm:$0xf]
    %v969 = vld [vmem:[#allocation2 + $0x18] sm:$0xf]
    %v970 = vld [vmem:[#allocation2 + $0x10] sm:$0x3c]
    %v971 = vld [vmem:[#allocation2 + $0x18] sm:$0x3c]
    %v972 = vld [vmem:[#allocation2 + $0x10] sm:$0xf0]
    %v973 = vld [vmem:[#allocation2 + $0x18] sm:$0xf0]
    %v974 = vld [vmem:[#allocation2 + $0x20] sm:$0xf]
    %v975 = vld [vmem:[#allocation2 + $0x28] sm:$0xf]
    %v976 = vld [vmem:[#allocation2 + $0x20] sm:$0x3c]
    %v977 = vld [vmem:[#allocation2 + $0x28] sm:$0x3c]
    %v978 = vld [vmem:[#allocation2 + $0x20] sm:$0xf0]
    %v979 = vld [vmem:[#allocation2 + $0x28] sm:$0xf0]
    %v982 = vrot.slane %v964, 2
    %v983 = vrot.slane %v965, 2
    %v988 = vrot.slane %v966, 4
    %v989 = vrot.slane %v967, 4
    %v994 = vrot.slane %v970, 2
    %v995 = vrot.slane %v971, 2
    %v1000 = vrot.slane %v972, 4
    %v1001 = vrot.slane %v973, 4
    %v1006 = vrot.slane %v976, 2
    %v1007 = vrot.slane %v977, 2
    %v1012 = vrot.slane %v978, 4
    %v1013 = vrot.slane %v979, 4
    %v1016 = vpack.c.bf16 %v962, %v962
    %v1017 = vpack.c.bf16 %v963, %v963
    %v1018 = vpack.c.bf16 %v982, %v982
    %v1019 = vpack.c.bf16 %v983, %v983
    %v1020 = vpack.c.bf16 %v988, %v988
    %v1021 = vpack.c.bf16 %v989, %v989
    %v1022 = vpack.c.bf16 %v968, %v968
    %v1023 = vpack.c.bf16 %v969, %v969
    %v1024 = vpack.c.bf16 %v994, %v994
    %v1025 = vpack.c.bf16 %v995, %v995
    %v1026 = vpack.c.bf16 %v1000, %v1000
    %v1027 = vpack.c.bf16 %v1001, %v1001
    %v1028 = vpack.c.bf16 %v974, %v974
    %v1029 = vpack.c.bf16 %v975, %v975
    %v1030 = vpack.c.bf16 %v1006, %v1006
    %v1031 = vpack.c.bf16 %v1007, %v1007
    %v1032 = vpack.c.bf16 %v1012, %v1012
    %v1033 = vpack.c.bf16 %v1013, %v1013
    %v1034 = vld [vmem:[#allocation2 + $0x30] sm:$0xf]
    %v1035 = vld [vmem:[#allocation2 + $0x38] sm:$0xf]
    %v1036 = vld [vmem:[#allocation2 + $0x30] sm:$0x3c]
    %v1037 = vld [vmem:[#allocation2 + $0x38] sm:$0x3c]
    %v1038 = vld [vmem:[#allocation2 + $0x30] sm:$0xf0]
    %v1039 = vld [vmem:[#allocation2 + $0x38] sm:$0xf0]
    %v1042 = vrot.slane %v1036, 2
    %v1043 = vrot.slane %v1037, 2
    %v1048 = vrot.slane %v1038, 4
    %v1049 = vrot.slane %v1039, 4
    %v1052 = vpack.c.bf16 %v1034, %v1034
    %v1053 = vpack.c.bf16 %v1035, %v1035
    %v1054 = vpack.c.bf16 %v1042, %v1042
    %v1055 = vpack.c.bf16 %v1043, %v1043
    %v1056 = vpack.c.bf16 %v1048, %v1048
    %v1057 = vpack.c.bf16 %v1049, %v1049
    %v1058 = vld [vmem:[#allocation14] sm:$0x3]
    %v1060 = vperm.slane %v1058, 0
    %v1061 = vperm.slane %v1058, 1
    %v1352 = vunpack.c.l.b16 %v674
    %v1353 = vunpack.c.h.b16 %v674
    %v1354 = vunpack.c.l.b16 %v675
    %v1355 = vunpack.c.h.b16 %v675
    %v1356 = vunpack.c.l.b16 %v676
    %v1357 = vunpack.c.h.b16 %v676
    %v1358 = vunpack.c.l.b16 %v677
    %v1359 = vunpack.c.h.b16 %v677
    %v1360 = vunpack.c.l.b16 %v678
    %v1361 = vunpack.c.h.b16 %v678
    %v1362 = vunpack.c.l.b16 %v679
    %v1363 = vunpack.c.h.b16 %v679
    %v1364 = vunpack.c.l.b16 %v680
    %v1365 = vunpack.c.h.b16 %v680
    %v1366 = vunpack.c.l.b16 %v681
    %v1367 = vunpack.c.h.b16 %v681
    %v1368 = vunpack.c.l.b16 %v682
    %v1369 = vunpack.c.h.b16 %v682
    %v1370 = vunpack.c.l.b16 %v683
    %v1371 = vunpack.c.h.b16 %v683
    %v1372 = vunpack.c.l.b16 %v684
    %v1373 = vunpack.c.h.b16 %v684
    %v1374 = vunpack.c.l.b16 %v685
    %v1375 = vunpack.c.h.b16 %v685
    %v1376 = vunpack.c.l.b16 %v686
    %v1377 = vunpack.c.h.b16 %v686
    %v1378 = vunpack.c.l.b16 %v687
    %v1379 = vunpack.c.h.b16 %v687
    %v1380 = vunpack.c.l.b16 %v688
    %v1381 = vunpack.c.h.b16 %v688
    %v1382 = vunpack.c.l.b16 %v689
    %v1383 = vunpack.c.h.b16 %v689
    %v1384 = vunpack.c.l.b16 %v690
    %v1385 = vunpack.c.h.b16 %v690
    %v1386 = vunpack.c.l.b16 %v691
    %v1387 = vunpack.c.h.b16 %v691
    %v1388 = vunpack.c.l.b16 %v692
    %v1389 = vunpack.c.h.b16 %v692
    %v1390 = vunpack.c.l.b16 %v693
    %v1391 = vunpack.c.h.b16 %v693
    %v1392 = vunpack.c.l.b16 %v694
    %v1393 = vunpack.c.h.b16 %v694
    %v1394 = vunpack.c.l.b16 %v695
    %v1395 = vunpack.c.h.b16 %v695
    %v1396 = vunpack.c.l.b16 %v696
    %v1397 = vunpack.c.h.b16 %v696
    %v1398 = vunpack.c.l.b16 %v697
    %v1399 = vunpack.c.h.b16 %v697
    %v1400 = vunpack.c.l.b16 %v698
    %v1401 = vunpack.c.h.b16 %v698
    %v1402 = vunpack.c.l.b16 %v699
    %v1403 = vunpack.c.h.b16 %v699
    %v1404 = vunpack.c.l.b16 %v700
    %v1405 = vunpack.c.h.b16 %v700
    %v1406 = vunpack.c.l.b16 %v701
    %v1407 = vunpack.c.h.b16 %v701
    %v1408 = vunpack.c.l.b16 %v702
    %v1409 = vunpack.c.h.b16 %v702
    %v1410 = vunpack.c.l.b16 %v703
    %v1411 = vunpack.c.h.b16 %v703
    %v1412 = vunpack.c.l.b16 %v704
    %v1413 = vunpack.c.h.b16 %v704
    %v1414 = vunpack.c.l.b16 %v705
    %v1415 = vunpack.c.h.b16 %v705
    %v1416 = vunpack.c.l.b16 %v706
    %v1417 = vunpack.c.h.b16 %v706
    %v1418 = vunpack.c.l.b16 %v707
    %v1419 = vunpack.c.h.b16 %v707
    %v1420 = vunpack.c.l.b16 %v708
    %v1421 = vunpack.c.h.b16 %v708
    %v1422 = vunpack.c.l.b16 %v709
    %v1423 = vunpack.c.h.b16 %v709
    %v1424 = vunpack.c.l.b16 %v710
    %v1425 = vunpack.c.h.b16 %v710
    %v1426 = vunpack.c.l.b16 %v711
    %v1427 = vunpack.c.h.b16 %v711
    %v1428 = vunpack.c.l.b16 %v712
    %v1429 = vunpack.c.h.b16 %v712
    %v1430 = vunpack.c.l.b16 %v713
    %v1431 = vunpack.c.h.b16 %v713
    %v1432 = vunpack.c.l.b16 %v714
    %v1433 = vunpack.c.h.b16 %v714
    %v1434 = vunpack.c.l.b16 %v715
    %v1435 = vunpack.c.h.b16 %v715
    %v1436 = vunpack.c.l.b16 %v716
    %v1437 = vunpack.c.h.b16 %v716
    %v1438 = vunpack.c.l.b16 %v717
    %v1439 = vunpack.c.h.b16 %v717
    %v1440 = vunpack.c.l.b16 %v718
    %v1441 = vunpack.c.h.b16 %v718
    %v1442 = vunpack.c.l.b16 %v719
    %v1443 = vunpack.c.h.b16 %v719
    %v1444 = vunpack.c.l.b16 %v720
    %v1445 = vunpack.c.h.b16 %v720
    %v1446 = vunpack.c.l.b16 %v721
    %v1447 = vunpack.c.h.b16 %v721
    %v1448 = vunpack.c.l.b16 %v722
    %v1449 = vunpack.c.h.b16 %v722
    %v1450 = vunpack.c.l.b16 %v723
    %v1451 = vunpack.c.h.b16 %v723
    %v1452 = vunpack.c.l.b16 %v724
    %v1453 = vunpack.c.h.b16 %v724
    %v1454 = vunpack.c.l.b16 %v725
    %v1455 = vunpack.c.h.b16 %v725
    %v1456 = vunpack.c.l.b16 %v726
    %v1457 = vunpack.c.h.b16 %v726
    %v1458 = vunpack.c.l.b16 %v727
    %v1459 = vunpack.c.h.b16 %v727
    %v1460 = vunpack.c.l.b16 %v728
    %v1461 = vunpack.c.h.b16 %v728
    %v1462 = vunpack.c.l.b16 %v729
    %v1463 = vunpack.c.h.b16 %v729
    %v1464 = vunpack.c.l.b16 %v730
    %v1465 = vunpack.c.h.b16 %v730
    %v1466 = vunpack.c.l.b16 %v731
    %v1467 = vunpack.c.h.b16 %v731
    %v1468 = vunpack.c.l.b16 %v732
    %v1469 = vunpack.c.h.b16 %v732
    %v1470 = vunpack.c.l.b16 %v733
    %v1471 = vunpack.c.h.b16 %v733
    %v1472 = vunpack.c.l.b16 %v734
    %v1473 = vunpack.c.h.b16 %v734
    %v1474 = vunpack.c.l.b16 %v735
    %v1475 = vunpack.c.h.b16 %v735
    %v1476 = vunpack.c.l.b16 %v736
    %v1477 = vunpack.c.h.b16 %v736
    %v1478 = vunpack.c.l.b16 %v737
    %v1479 = vunpack.c.h.b16 %v737
    %v1480 = vunpack.c.l.b16 %v738
    %v1481 = vunpack.c.h.b16 %v738
    %v1482 = vunpack.c.l.b16 %v739
    %v1483 = vunpack.c.h.b16 %v739
    %v1484 = vunpack.c.l.b16 %v740
    %v1485 = vunpack.c.h.b16 %v740
    %v1486 = vunpack.c.l.b16 %v741
    %v1487 = vunpack.c.h.b16 %v741
    %v1488 = vunpack.c.l.b16 %v742
    %v1489 = vunpack.c.h.b16 %v742
    %v1490 = vunpack.c.l.b16 %v743
    %v1491 = vunpack.c.h.b16 %v743
    %v1492 = vunpack.c.l.b16 %v744
    %v1493 = vunpack.c.h.b16 %v744
    %v1494 = vunpack.c.l.b16 %v745
    %v1495 = vunpack.c.h.b16 %v745
    %v1496 = vunpack.c.l.b16 %v746
    %v1497 = vunpack.c.h.b16 %v746
    %v1498 = vunpack.c.l.b16 %v747
    %v1499 = vunpack.c.h.b16 %v747
    %v1500 = vunpack.c.l.b16 %v748
    %v1501 = vunpack.c.h.b16 %v748
    %v1502 = vunpack.c.l.b16 %v749
    %v1503 = vunpack.c.h.b16 %v749
    %v1504 = vunpack.c.l.b16 %v750
    %v1505 = vunpack.c.h.b16 %v750
    %v1506 = vunpack.c.l.b16 %v751
    %v1507 = vunpack.c.h.b16 %v751
    %v1508 = vunpack.c.l.b16 %v752
    %v1509 = vunpack.c.h.b16 %v752
    %v1510 = vunpack.c.l.b16 %v753
    %v1511 = vunpack.c.h.b16 %v753
    %v1512 = vunpack.c.l.b16 %v754
    %v1513 = vunpack.c.h.b16 %v754
    %v1514 = vunpack.c.l.b16 %v755
    %v1515 = vunpack.c.h.b16 %v755
    %v1516 = vunpack.c.l.b16 %v756
    %v1517 = vunpack.c.h.b16 %v756
    %v1518 = vunpack.c.l.b16 %v757
    %v1519 = vunpack.c.h.b16 %v757
    %v1520 = vunpack.c.l.b16 %v758
    %v1521 = vunpack.c.h.b16 %v758
    %v1522 = vunpack.c.l.b16 %v759
    %v1523 = vunpack.c.h.b16 %v759
    %v1524 = vunpack.c.l.b16 %v760
    %v1525 = vunpack.c.h.b16 %v760
    %v1526 = vunpack.c.l.b16 %v761
    %v1527 = vunpack.c.h.b16 %v761
    %v1528 = vunpack.c.l.b16 %v762
    %v1529 = vunpack.c.h.b16 %v762
    %v1530 = vunpack.c.l.b16 %v763
    %v1531 = vunpack.c.h.b16 %v763
    %v1532 = vunpack.c.l.b16 %v764
    %v1533 = vunpack.c.h.b16 %v764
    %v1534 = vunpack.c.l.b16 %v765
    %v1535 = vunpack.c.h.b16 %v765
    %v1536 = vunpack.c.l.b16 %v766
    %v1537 = vunpack.c.h.b16 %v766
    %v1538 = vunpack.c.l.b16 %v767
    %v1539 = vunpack.c.h.b16 %v767
    %v1540 = vunpack.c.l.b16 %v768
    %v1541 = vunpack.c.h.b16 %v768
    %v1542 = vunpack.c.l.b16 %v769
    %v1543 = vunpack.c.h.b16 %v769
    %v1544 = vunpack.c.l.b16 %v770
    %v1545 = vunpack.c.h.b16 %v770
    %v1546 = vunpack.c.l.b16 %v771
    %v1547 = vunpack.c.h.b16 %v771
    %v1548 = vunpack.c.l.b16 %v772
    %v1549 = vunpack.c.h.b16 %v772
    %v1550 = vunpack.c.l.b16 %v773
    %v1551 = vunpack.c.h.b16 %v773
    %v1552 = vunpack.c.l.b16 %v774
    %v1553 = vunpack.c.h.b16 %v774
    %v1554 = vunpack.c.l.b16 %v775
    %v1555 = vunpack.c.h.b16 %v775
    %v1556 = vunpack.c.l.b16 %v776
    %v1557 = vunpack.c.h.b16 %v776
    %v1558 = vunpack.c.l.b16 %v777
    %v1559 = vunpack.c.h.b16 %v777
    %v1560 = vunpack.c.l.b16 %v778
    %v1561 = vunpack.c.h.b16 %v778
    %v1562 = vunpack.c.l.b16 %v779
    %v1563 = vunpack.c.h.b16 %v779
    %v1564 = vunpack.c.l.b16 %v780
    %v1565 = vunpack.c.h.b16 %v780
    %v1566 = vunpack.c.l.b16 %v781
    %v1567 = vunpack.c.h.b16 %v781
    %v1568 = vunpack.c.l.b16 %v782
    %v1569 = vunpack.c.h.b16 %v782
    %v1570 = vunpack.c.l.b16 %v783
    %v1571 = vunpack.c.h.b16 %v783
    %v1572 = vunpack.c.l.b16 %v784
    %v1573 = vunpack.c.h.b16 %v784
    %v1574 = vunpack.c.l.b16 %v785
    %v1575 = vunpack.c.h.b16 %v785
    %v1576 = vunpack.c.l.b16 %v786
    %v1577 = vunpack.c.h.b16 %v786
    %v1578 = vunpack.c.l.b16 %v787
    %v1579 = vunpack.c.h.b16 %v787
    %v1580 = vunpack.c.l.b16 %v788
    %v1581 = vunpack.c.h.b16 %v788
    %v1582 = vunpack.c.l.b16 %v789
    %v1583 = vunpack.c.h.b16 %v789
    %v1584 = vunpack.c.l.b16 %v790
    %v1585 = vunpack.c.h.b16 %v790
    %v1586 = vunpack.c.l.b16 %v791
    %v1587 = vunpack.c.h.b16 %v791
    %v1588 = vunpack.c.l.b16 %v792
    %v1589 = vunpack.c.h.b16 %v792
    %v1590 = vunpack.c.l.b16 %v793
    %v1591 = vunpack.c.h.b16 %v793
    %v1592 = vunpack.c.l.b16 %v794
    %v1593 = vunpack.c.h.b16 %v794
    %v1594 = vunpack.c.l.b16 %v795
    %v1595 = vunpack.c.h.b16 %v795
    %v1596 = vunpack.c.l.b16 %v796
    %v1597 = vunpack.c.h.b16 %v796
    %v1598 = vunpack.c.l.b16 %v797
    %v1599 = vunpack.c.h.b16 %v797
    %v1600 = vunpack.c.l.b16 %v798
    %v1601 = vunpack.c.h.b16 %v798
    %v1602 = vunpack.c.l.b16 %v799
    %v1603 = vunpack.c.h.b16 %v799
    %v1604 = vunpack.c.l.b16 %v800
    %v1605 = vunpack.c.h.b16 %v800
    %v1606 = vunpack.c.l.b16 %v801
    %v1607 = vunpack.c.h.b16 %v801
    %v1608 = vunpack.c.l.b16 %v802
    %v1609 = vunpack.c.h.b16 %v802
    %v1610 = vunpack.c.l.b16 %v803
    %v1611 = vunpack.c.h.b16 %v803
    %v1612 = vunpack.c.l.b16 %v804
    %v1613 = vunpack.c.h.b16 %v804
    %v1614 = vunpack.c.l.b16 %v805
    %v1615 = vunpack.c.h.b16 %v805
    %v1616 = vunpack.c.l.b16 %v806
    %v1617 = vunpack.c.h.b16 %v806
    %v1618 = vunpack.c.l.b16 %v807
    %v1619 = vunpack.c.h.b16 %v807
    %v1620 = vunpack.c.l.b16 %v808
    %v1621 = vunpack.c.h.b16 %v808
    %v1622 = vunpack.c.l.b16 %v809
    %v1623 = vunpack.c.h.b16 %v809
    %v1624 = vunpack.c.l.b16 %v810
    %v1625 = vunpack.c.h.b16 %v810
    %v1626 = vunpack.c.l.b16 %v811
    %v1627 = vunpack.c.h.b16 %v811
    %v1628 = vunpack.c.l.b16 %v812
    %v1629 = vunpack.c.h.b16 %v812
    %v1630 = vunpack.c.l.b16 %v813
    %v1631 = vunpack.c.h.b16 %v813
    %v1632 = vunpack.c.l.b16 %v814
    %v1633 = vunpack.c.h.b16 %v814
    %v1634 = vunpack.c.l.b16 %v815
    %v1635 = vunpack.c.h.b16 %v815
    %v1636 = vunpack.c.l.b16 %v816
    %v1637 = vunpack.c.h.b16 %v816
    %v1638 = vunpack.c.l.b16 %v817
    %v1639 = vunpack.c.h.b16 %v817
    %v1640 = vunpack.c.l.b16 %v818
    %v1641 = vunpack.c.h.b16 %v818
    %v1642 = vunpack.c.l.b16 %v819
    %v1643 = vunpack.c.h.b16 %v819
    %v1644 = vunpack.c.l.b16 %v820
    %v1645 = vunpack.c.h.b16 %v820
    %v1646 = vunpack.c.l.b16 %v821
    %v1647 = vunpack.c.h.b16 %v821
    %v1648 = vunpack.c.l.b16 %v822
    %v1649 = vunpack.c.h.b16 %v822
    %v1650 = vunpack.c.l.b16 %v823
    %v1651 = vunpack.c.h.b16 %v823
    %v1652 = vunpack.c.l.b16 %v824
    %v1653 = vunpack.c.h.b16 %v824
    %v1654 = vunpack.c.l.b16 %v825
    %v1655 = vunpack.c.h.b16 %v825
    %v1656 = vunpack.c.l.b16 %v826
    %v1657 = vunpack.c.h.b16 %v826
    %v1658 = vunpack.c.l.b16 %v827
    %v1659 = vunpack.c.h.b16 %v827
    %v1660 = vunpack.c.l.b16 %v828
    %v1661 = vunpack.c.h.b16 %v828
    %v1662 = vunpack.c.l.b16 %v829
    %v1663 = vunpack.c.h.b16 %v829
    %v1664 = vunpack.c.l.b16 %v830
    %v1665 = vunpack.c.h.b16 %v830
    %v1666 = vunpack.c.l.b16 %v831
    %v1667 = vunpack.c.h.b16 %v831
    %v1668 = vunpack.c.l.b16 %v832
    %v1669 = vunpack.c.h.b16 %v832
    %v1670 = vunpack.c.l.b16 %v833
    %v1671 = vunpack.c.h.b16 %v833
    %v1672 = vunpack.c.l.b16 %v834
    %v1673 = vunpack.c.h.b16 %v834
    %v1674 = vunpack.c.l.b16 %v835
    %v1675 = vunpack.c.h.b16 %v835
    %v1676 = vunpack.c.l.b16 %v836
    %v1677 = vunpack.c.h.b16 %v836
    %v1678 = vunpack.c.l.b16 %v837
    %v1679 = vunpack.c.h.b16 %v837
    %v1680 = vunpack.c.l.b16 %v838
    %v1681 = vunpack.c.h.b16 %v838
    %v1682 = vunpack.c.l.b16 %v839
    %v1683 = vunpack.c.h.b16 %v839
    %v1684 = vunpack.c.l.b16 %v840
    %v1685 = vunpack.c.h.b16 %v840
    %v1686 = vunpack.c.l.b16 %v841
    %v1687 = vunpack.c.h.b16 %v841
    %v1688 = vunpack.c.l.b16 %v842
    %v1689 = vunpack.c.h.b16 %v842
    %v1690 = vunpack.c.l.b16 %v843
    %v1691 = vunpack.c.h.b16 %v843
    %v1692 = vunpack.c.l.b16 %v844
    %v1693 = vunpack.c.h.b16 %v844
    %v1694 = vunpack.c.l.b16 %v845
    %v1695 = vunpack.c.h.b16 %v845
    %v1696 = vunpack.c.l.b16 %v846
    %v1697 = vunpack.c.h.b16 %v846
    %v1698 = vunpack.c.l.b16 %v847
    %v1699 = vunpack.c.h.b16 %v847
    %v1700 = vunpack.c.l.b16 %v848
    %v1701 = vunpack.c.h.b16 %v848
    %v1702 = vunpack.c.l.b16 %v849
    %v1703 = vunpack.c.h.b16 %v849
    %v1704 = vunpack.c.l.b16 %v850
    %v1705 = vunpack.c.h.b16 %v850
    %v1706 = vunpack.c.l.b16 %v851
    %v1707 = vunpack.c.h.b16 %v851
    %v1708 = vunpack.c.l.b16 %v852
    %v1709 = vunpack.c.h.b16 %v852
    %v1710 = vunpack.c.l.b16 %v853
    %v1711 = vunpack.c.h.b16 %v853
    %v1712 = vunpack.c.l.b16 %v854
    %v1713 = vunpack.c.h.b16 %v854
    %v1714 = vunpack.c.l.b16 %v855
    %v1715 = vunpack.c.h.b16 %v855
    %v1716 = vunpack.c.l.b16 %v856
    %v1717 = vunpack.c.h.b16 %v856
    %v1718 = vunpack.c.l.b16 %v857
    %v1719 = vunpack.c.h.b16 %v857
    %v1720 = vunpack.c.l.b16 %v858
    %v1721 = vunpack.c.h.b16 %v858
    %v1722 = vunpack.c.l.b16 %v859
    %v1723 = vunpack.c.h.b16 %v859
    %v1724 = vunpack.c.l.b16 %v860
    %v1725 = vunpack.c.h.b16 %v860
    %v1726 = vunpack.c.l.b16 %v861
    %v1727 = vunpack.c.h.b16 %v861
    %v1728 = vunpack.c.l.b16 %v862
    %v1729 = vunpack.c.h.b16 %v862
    %v1730 = vunpack.c.l.b16 %v863
    %v1731 = vunpack.c.h.b16 %v863
    %v1732 = vunpack.c.l.b16 %v864
    %v1733 = vunpack.c.h.b16 %v864
    %v1734 = vunpack.c.l.b16 %v865
    %v1735 = vunpack.c.h.b16 %v865
    %v1736 = vunpack.c.l.b16 %v866
    %v1737 = vunpack.c.h.b16 %v866
    %v1738 = vunpack.c.l.b16 %v867
    %v1739 = vunpack.c.h.b16 %v867
    %v1740 = vunpack.c.l.b16 %v868
    %v1741 = vunpack.c.h.b16 %v868
    %v1742 = vunpack.c.l.b16 %v869
    %v1743 = vunpack.c.h.b16 %v869
    %v1744 = vunpack.c.l.b16 %v870
    %v1745 = vunpack.c.h.b16 %v870
    %v1746 = vunpack.c.l.b16 %v871
    %v1747 = vunpack.c.h.b16 %v871
    %v1748 = vunpack.c.l.b16 %v872
    %v1749 = vunpack.c.h.b16 %v872
    %v1750 = vunpack.c.l.b16 %v873
    %v1751 = vunpack.c.h.b16 %v873
    %v1752 = vunpack.c.l.b16 %v874
    %v1753 = vunpack.c.h.b16 %v874
    %v1754 = vunpack.c.l.b16 %v875
    %v1755 = vunpack.c.h.b16 %v875
    %v1756 = vunpack.c.l.b16 %v876
    %v1757 = vunpack.c.h.b16 %v876
    %v1758 = vunpack.c.l.b16 %v877
    %v1759 = vunpack.c.h.b16 %v877
    %v1760 = vunpack.c.l.b16 %v878
    %v1761 = vunpack.c.h.b16 %v878
    %v1762 = vunpack.c.l.b16 %v879
    %v1763 = vunpack.c.h.b16 %v879
    %v1764 = vunpack.c.l.b16 %v880
    %v1765 = vunpack.c.h.b16 %v880
    %v1766 = vunpack.c.l.b16 %v881
    %v1767 = vunpack.c.h.b16 %v881
    %v1768 = vunpack.c.l.b16 %v882
    %v1769 = vunpack.c.h.b16 %v882
    %v1770 = vunpack.c.l.b16 %v883
    %v1771 = vunpack.c.h.b16 %v883
    %v1772 = vunpack.c.l.b16 %v884
    %v1773 = vunpack.c.h.b16 %v884
    %v1774 = vunpack.c.l.b16 %v885
    %v1775 = vunpack.c.h.b16 %v885
    %v1776 = vunpack.c.l.b16 %v886
    %v1777 = vunpack.c.h.b16 %v886
    %v1778 = vunpack.c.l.b16 %v887
    %v1779 = vunpack.c.h.b16 %v887
    %v1780 = vunpack.c.l.b16 %v888
    %v1781 = vunpack.c.h.b16 %v888
    %v1782 = vunpack.c.l.b16 %v889
    %v1783 = vunpack.c.h.b16 %v889
    %v1784 = vunpack.c.l.b16 %v890
    %v1785 = vunpack.c.h.b16 %v890
    %v1786 = vunpack.c.l.b16 %v891
    %v1787 = vunpack.c.h.b16 %v891
    %v1788 = vunpack.c.l.b16 %v892
    %v1789 = vunpack.c.h.b16 %v892
    %v1790 = vunpack.c.l.b16 %v893
    %v1791 = vunpack.c.h.b16 %v893
    %v1792 = vunpack.c.l.b16 %v894
    %v1793 = vunpack.c.h.b16 %v894
    %v1794 = vunpack.c.l.b16 %v895
    %v1795 = vunpack.c.h.b16 %v895
    %v1796 = vunpack.c.l.b16 %v896
    %v1797 = vunpack.c.h.b16 %v896
    %v1798 = vunpack.c.l.b16 %v897
    %v1799 = vunpack.c.h.b16 %v897
    %v1800 = vunpack.c.l.b16 %v898
    %v1801 = vunpack.c.h.b16 %v898
    %v1802 = vunpack.c.l.b16 %v899
    %v1803 = vunpack.c.h.b16 %v899
    %v1804 = vunpack.c.l.b16 %v900
    %v1805 = vunpack.c.h.b16 %v900
    %v1806 = vunpack.c.l.b16 %v901
    %v1807 = vunpack.c.h.b16 %v901
    %v1808 = vunpack.c.l.b16 %v902
    %v1809 = vunpack.c.h.b16 %v902
    %v1810 = vunpack.c.l.b16 %v903
    %v1811 = vunpack.c.h.b16 %v903
    %v1812 = vunpack.c.l.b16 %v904
    %v1813 = vunpack.c.h.b16 %v904
    %v1814 = vunpack.c.l.b16 %v905
    %v1815 = vunpack.c.h.b16 %v905
    %v1816 = vunpack.c.l.b16 %v906
    %v1817 = vunpack.c.h.b16 %v906
    %v1818 = vunpack.c.l.b16 %v907
    %v1819 = vunpack.c.h.b16 %v907
    %v1820 = vunpack.c.l.b16 %v908
    %v1821 = vunpack.c.h.b16 %v908
    %v1822 = vunpack.c.l.b16 %v909
    %v1823 = vunpack.c.h.b16 %v909
    %v1824 = vunpack.c.l.b16 %v910
    %v1825 = vunpack.c.h.b16 %v910
    %v1826 = vunpack.c.l.b16 %v911
    %v1827 = vunpack.c.h.b16 %v911
    %v1828 = vunpack.c.l.b16 %v912
    %v1829 = vunpack.c.h.b16 %v912
    %v1830 = vunpack.c.l.b16 %v913
    %v1831 = vunpack.c.h.b16 %v913
    %v1832 = vunpack.c.l.b16 %v914
    %v1833 = vunpack.c.h.b16 %v914
    %v1834 = vunpack.c.l.b16 %v915
    %v1835 = vunpack.c.h.b16 %v915
    %v1836 = vunpack.c.l.b16 %v916
    %v1837 = vunpack.c.h.b16 %v916
    %v1838 = vunpack.c.l.b16 %v917
    %v1839 = vunpack.c.h.b16 %v917
    %v1840 = vunpack.c.l.b16 %v918
    %v1841 = vunpack.c.h.b16 %v918
    %v1842 = vunpack.c.l.b16 %v919
    %v1843 = vunpack.c.h.b16 %v919
    %v1844 = vunpack.c.l.b16 %v920
    %v1845 = vunpack.c.h.b16 %v920
    %v1846 = vunpack.c.l.b16 %v921
    %v1847 = vunpack.c.h.b16 %v921
    %v1848 = vunpack.c.l.b16 %v922
    %v1849 = vunpack.c.h.b16 %v922
    %v1850 = vunpack.c.l.b16 %v923
    %v1851 = vunpack.c.h.b16 %v923
    %v1852 = vunpack.c.l.b16 %v924
    %v1853 = vunpack.c.h.b16 %v924
    %v1854 = vunpack.c.l.b16 %v925
    %v1855 = vunpack.c.h.b16 %v925
    %v1856 = vunpack.c.l.b16 %v926
    %v1857 = vunpack.c.h.b16 %v926
    %v1858 = vunpack.c.l.b16 %v927
    %v1859 = vunpack.c.h.b16 %v927
    %v1860 = vunpack.c.l.b16 %v928
    %v1861 = vunpack.c.h.b16 %v928
    %v1862 = vunpack.c.l.b16 %v929
    %v1863 = vunpack.c.h.b16 %v929
    %v1864 = vunpack.c.l.b16 %v930
    %v1865 = vunpack.c.h.b16 %v930
    %v1866 = vunpack.c.l.b16 %v931
    %v1867 = vunpack.c.h.b16 %v931
    %v1868 = vunpack.c.l.b16 %v932
    %v1869 = vunpack.c.h.b16 %v932
    %v1870 = vunpack.c.l.b16 %v933
    %v1871 = vunpack.c.h.b16 %v933
    %v1872 = vunpack.c.l.b16 %v934
    %v1873 = vunpack.c.h.b16 %v934
    %v1874 = vunpack.c.l.b16 %v935
    %v1875 = vunpack.c.h.b16 %v935
    %v1876 = vunpack.c.l.b16 %v936
    %v1877 = vunpack.c.h.b16 %v936
    %v1878 = vunpack.c.l.b16 %v937
    %v1879 = vunpack.c.h.b16 %v937
    %v1880 = vunpack.c.l.b16 %v938
    %v1881 = vunpack.c.h.b16 %v938
    %v1882 = vunpack.c.l.b16 %v939
    %v1883 = vunpack.c.h.b16 %v939
    %v1884 = vunpack.c.l.b16 %v940
    %v1885 = vunpack.c.h.b16 %v940
    %v1886 = vunpack.c.l.b16 %v941
    %v1887 = vunpack.c.h.b16 %v941
    %v1888 = vunpack.c.l.b16 %v942
    %v1889 = vunpack.c.h.b16 %v942
    %v1890 = vunpack.c.l.b16 %v943
    %v1891 = vunpack.c.h.b16 %v943
    %v1892 = vunpack.c.l.b16 %v944
    %v1893 = vunpack.c.h.b16 %v944
    %v1894 = vunpack.c.l.b16 %v945
    %v1895 = vunpack.c.h.b16 %v945
    %v1896 = vunpack.c.l.b16 %v946
    %v1897 = vunpack.c.h.b16 %v946
    %v1898 = vunpack.c.l.b16 %v947
    %v1899 = vunpack.c.h.b16 %v947
    %v1900 = vunpack.c.l.b16 %v948
    %v1901 = vunpack.c.h.b16 %v948
    %v1902 = vunpack.c.l.b16 %v949
    %v1903 = vunpack.c.h.b16 %v949
    %v1904 = vunpack.c.l.b16 %v950
    %v1905 = vunpack.c.h.b16 %v950
    %v1906 = vunpack.c.l.b16 %v951
    %v1907 = vunpack.c.h.b16 %v951
    %v1908 = vunpack.c.l.b16 %v952
    %v1909 = vunpack.c.h.b16 %v952
    %v1910 = vunpack.c.l.b16 %v953
    %v1911 = vunpack.c.h.b16 %v953
    %v1912 = vunpack.c.l.b16 %v954
    %v1913 = vunpack.c.h.b16 %v954
    %v1914 = vunpack.c.l.b16 %v955
    %v1915 = vunpack.c.h.b16 %v955
    %v1916 = vunpack.c.l.b16 %v956
    %v1917 = vunpack.c.h.b16 %v956
    %v1918 = vunpack.c.l.b16 %v957
    %v1919 = vunpack.c.h.b16 %v957
    %v1920 = vunpack.c.l.b16 %v958
    %v1921 = vunpack.c.h.b16 %v958
    %v1922 = vunpack.c.l.b16 %v959
    %v1923 = vunpack.c.h.b16 %v959
    %v1924 = vunpack.c.l.b16 %v960
    %v1925 = vunpack.c.h.b16 %v960
    %v1926 = vunpack.c.l.b16 %v961
    %v1927 = vunpack.c.h.b16 %v961
    %v1928 = vpack.c.b16 %v1354, %v1352
    %v1929 = vpack.c.b16 %v1355, %v1353
    %v1930 = vpack.c.b16 %v1358, %v1356
    %v1931 = vpack.c.b16 %v1359, %v1357
    %v1932 = vpack.c.b16 %v1362, %v1360
    %v1933 = vpack.c.b16 %v1363, %v1361
    %v1934 = vpack.c.b16 %v1366, %v1364
    %v1935 = vpack.c.b16 %v1367, %v1365
    %v1936 = vpack.c.b16 %v1370, %v1368
    %v1937 = vpack.c.b16 %v1371, %v1369
    %v1938 = vpack.c.b16 %v1374, %v1372
    %v1939 = vpack.c.b16 %v1375, %v1373
    %v1940 = vpack.c.b16 %v1378, %v1376
    %v1941 = vpack.c.b16 %v1379, %v1377
    %v1942 = vpack.c.b16 %v1382, %v1380
    %v1943 = vpack.c.b16 %v1383, %v1381
    %v1944 = vpack.c.b16 %v1386, %v1384
    %v1945 = vpack.c.b16 %v1387, %v1385
    %v1946 = vpack.c.b16 %v1390, %v1388
    %v1947 = vpack.c.b16 %v1391, %v1389
    %v1948 = vpack.c.b16 %v1394, %v1392
    %v1949 = vpack.c.b16 %v1395, %v1393
    %v1950 = vpack.c.b16 %v1398, %v1396
    %v1951 = vpack.c.b16 %v1399, %v1397
    %v1952 = vpack.c.b16 %v1402, %v1400
    %v1953 = vpack.c.b16 %v1403, %v1401
    %v1954 = vpack.c.b16 %v1406, %v1404
    %v1955 = vpack.c.b16 %v1407, %v1405
    %v1956 = vpack.c.b16 %v1410, %v1408
    %v1957 = vpack.c.b16 %v1411, %v1409
    %v1958 = vpack.c.b16 %v1414, %v1412
    %v1959 = vpack.c.b16 %v1415, %v1413
    %v1960 = vpack.c.b16 %v1418, %v1416
    %v1961 = vpack.c.b16 %v1419, %v1417
    %v1962 = vpack.c.b16 %v1422, %v1420
    %v1963 = vpack.c.b16 %v1423, %v1421
    %v1964 = vpack.c.b16 %v1426, %v1424
    %v1965 = vpack.c.b16 %v1427, %v1425
    %v1966 = vpack.c.b16 %v1430, %v1428
    %v1967 = vpack.c.b16 %v1431, %v1429
    %v1968 = vpack.c.b16 %v1434, %v1432
    %v1969 = vpack.c.b16 %v1435, %v1433
    %v1970 = vpack.c.b16 %v1438, %v1436
    %v1971 = vpack.c.b16 %v1439, %v1437
    %v1972 = vpack.c.b16 %v1442, %v1440
    %v1973 = vpack.c.b16 %v1443, %v1441
    %v1974 = vpack.c.b16 %v1446, %v1444
    %v1975 = vpack.c.b16 %v1447, %v1445
    %v1976 = vpack.c.b16 %v1450, %v1448
    %v1977 = vpack.c.b16 %v1451, %v1449
    %v1978 = vpack.c.b16 %v1454, %v1452
    %v1979 = vpack.c.b16 %v1455, %v1453
    %v1980 = vpack.c.b16 %v1458, %v1456
    %v1981 = vpack.c.b16 %v1459, %v1457
    %v1982 = vpack.c.b16 %v1462, %v1460
    %v1983 = vpack.c.b16 %v1463, %v1461
    %v1984 = vpack.c.b16 %v1466, %v1464
    %v1985 = vpack.c.b16 %v1467, %v1465
    %v1986 = vpack.c.b16 %v1470, %v1468
    %v1987 = vpack.c.b16 %v1471, %v1469
    %v1988 = vpack.c.b16 %v1474, %v1472
    %v1989 = vpack.c.b16 %v1475, %v1473
    %v1990 = vpack.c.b16 %v1478, %v1476
    %v1991 = vpack.c.b16 %v1479, %v1477
    %v1992 = vpack.c.b16 %v1482, %v1480
    %v1993 = vpack.c.b16 %v1483, %v1481
    %v1994 = vpack.c.b16 %v1486, %v1484
    %v1995 = vpack.c.b16 %v1487, %v1485
    %v1996 = vpack.c.b16 %v1490, %v1488
    %v1997 = vpack.c.b16 %v1491, %v1489
    %v1998 = vpack.c.b16 %v1494, %v1492
    %v1999 = vpack.c.b16 %v1495, %v1493
    %v2000 = vpack.c.b16 %v1498, %v1496
    %v2001 = vpack.c.b16 %v1499, %v1497
    %v2002 = vpack.c.b16 %v1502, %v1500
    %v2003 = vpack.c.b16 %v1503, %v1501
    %v2004 = vpack.c.b16 %v1506, %v1504
    %v2005 = vpack.c.b16 %v1507, %v1505
    %v2006 = vpack.c.b16 %v1510, %v1508
    %v2007 = vpack.c.b16 %v1511, %v1509
    %v2008 = vpack.c.b16 %v1514, %v1512
    %v2009 = vpack.c.b16 %v1515, %v1513
    %v2010 = vpack.c.b16 %v1518, %v1516
    %v2011 = vpack.c.b16 %v1519, %v1517
    %v2012 = vpack.c.b16 %v1522, %v1520
    %v2013 = vpack.c.b16 %v1523, %v1521
    %v2014 = vpack.c.b16 %v1526, %v1524
    %v2015 = vpack.c.b16 %v1527, %v1525
    %v2016 = vpack.c.b16 %v1530, %v1528
    %v2017 = vpack.c.b16 %v1531, %v1529
    %v2018 = vpack.c.b16 %v1534, %v1532
    %v2019 = vpack.c.b16 %v1535, %v1533
    %v2020 = vpack.c.b16 %v1538, %v1536
    %v2021 = vpack.c.b16 %v1539, %v1537
    %v2022 = vpack.c.b16 %v1542, %v1540
    %v2023 = vpack.c.b16 %v1543, %v1541
    %v2024 = vpack.c.b16 %v1546, %v1544
    %v2025 = vpack.c.b16 %v1547, %v1545
    %v2026 = vpack.c.b16 %v1550, %v1548
    %v2027 = vpack.c.b16 %v1551, %v1549
    %v2028 = vpack.c.b16 %v1554, %v1552
    %v2029 = vpack.c.b16 %v1555, %v1553
    %v2030 = vpack.c.b16 %v1558, %v1556
    %v2031 = vpack.c.b16 %v1559, %v1557
    %v2032 = vpack.c.b16 %v1562, %v1560
    %v2033 = vpack.c.b16 %v1563, %v1561
    %v2034 = vpack.c.b16 %v1566, %v1564
    %v2035 = vpack.c.b16 %v1567, %v1565
    %v2036 = vpack.c.b16 %v1570, %v1568
    %v2037 = vpack.c.b16 %v1571, %v1569
    %v2038 = vpack.c.b16 %v1574, %v1572
    %v2039 = vpack.c.b16 %v1575, %v1573
    %v2040 = vpack.c.b16 %v1578, %v1576
    %v2041 = vpack.c.b16 %v1579, %v1577
    %v2042 = vpack.c.b16 %v1582, %v1580
    %v2043 = vpack.c.b16 %v1583, %v1581
    %v2044 = vpack.c.b16 %v1586, %v1584
    %v2045 = vpack.c.b16 %v1587, %v1585
    %v2046 = vpack.c.b16 %v1590, %v1588
    %v2047 = vpack.c.b16 %v1591, %v1589
    %v2048 = vpack.c.b16 %v1594, %v1592
    %v2049 = vpack.c.b16 %v1595, %v1593
    %v2050 = vpack.c.b16 %v1598, %v1596
    %v2051 = vpack.c.b16 %v1599, %v1597
    %v2052 = vpack.c.b16 %v1602, %v1600
    %v2053 = vpack.c.b16 %v1603, %v1601
    %v2054 = vpack.c.b16 %v1606, %v1604
    %v2055 = vpack.c.b16 %v1607, %v1605
    %v2056 = vpack.c.b16 %v1610, %v1608
    %v2057 = vpack.c.b16 %v1611, %v1609
    %v2058 = vpack.c.b16 %v1614, %v1612
    %v2059 = vpack.c.b16 %v1615, %v1613
    %v2060 = vpack.c.b16 %v1618, %v1616
    %v2061 = vpack.c.b16 %v1619, %v1617
    %v2062 = vpack.c.b16 %v1622, %v1620
    %v2063 = vpack.c.b16 %v1623, %v1621
    %v2064 = vpack.c.b16 %v1626, %v1624
    %v2065 = vpack.c.b16 %v1627, %v1625
    %v2066 = vpack.c.b16 %v1630, %v1628
    %v2067 = vpack.c.b16 %v1631, %v1629
    %v2068 = vpack.c.b16 %v1634, %v1632
    %v2069 = vpack.c.b16 %v1635, %v1633
    %v2070 = vpack.c.b16 %v1638, %v1636
    %v2071 = vpack.c.b16 %v1639, %v1637
    %v2072 = vpack.c.b16 %v1642, %v1640
    %v2073 = vpack.c.b16 %v1643, %v1641
    %v2074 = vpack.c.b16 %v1646, %v1644
    %v2075 = vpack.c.b16 %v1647, %v1645
    %v2076 = vpack.c.b16 %v1650, %v1648
    %v2077 = vpack.c.b16 %v1651, %v1649
    %v2078 = vpack.c.b16 %v1654, %v1652
    %v2079 = vpack.c.b16 %v1655, %v1653
    %v2080 = vpack.c.b16 %v1658, %v1656
    %v2081 = vpack.c.b16 %v1659, %v1657
    %v2082 = vpack.c.b16 %v1662, %v1660
    %v2083 = vpack.c.b16 %v1663, %v1661
    %v2084 = vpack.c.b16 %v1666, %v1664
    %v2085 = vpack.c.b16 %v1667, %v1665
    %v2086 = vpack.c.b16 %v1670, %v1668
    %v2087 = vpack.c.b16 %v1671, %v1669
    %v2088 = vpack.c.b16 %v1674, %v1672
    %v2089 = vpack.c.b16 %v1675, %v1673
    %v2090 = vpack.c.b16 %v1678, %v1676
    %v2091 = vpack.c.b16 %v1679, %v1677
    %v2092 = vpack.c.b16 %v1682, %v1680
    %v2093 = vpack.c.b16 %v1683, %v1681
    %v2094 = vpack.c.b16 %v1686, %v1684
    %v2095 = vpack.c.b16 %v1687, %v1685
    %v2096 = vpack.c.b16 %v1690, %v1688
    %v2097 = vpack.c.b16 %v1691, %v1689
    %v2098 = vpack.c.b16 %v1694, %v1692
    %v2099 = vpack.c.b16 %v1695, %v1693
    %v2100 = vpack.c.b16 %v1698, %v1696
    %v2101 = vpack.c.b16 %v1699, %v1697
    %v2102 = vpack.c.b16 %v1702, %v1700
    %v2103 = vpack.c.b16 %v1703, %v1701
    %v2104 = vpack.c.b16 %v1706, %v1704
    %v2105 = vpack.c.b16 %v1707, %v1705
    %v2106 = vpack.c.b16 %v1710, %v1708
    %v2107 = vpack.c.b16 %v1711, %v1709
    %v2108 = vpack.c.b16 %v1714, %v1712
    %v2109 = vpack.c.b16 %v1715, %v1713
    %v2110 = vpack.c.b16 %v1718, %v1716
    %v2111 = vpack.c.b16 %v1719, %v1717
    %v2112 = vpack.c.b16 %v1722, %v1720
    %v2113 = vpack.c.b16 %v1723, %v1721
    %v2114 = vpack.c.b16 %v1726, %v1724
    %v2115 = vpack.c.b16 %v1727, %v1725
    %v2116 = vpack.c.b16 %v1730, %v1728
    %v2117 = vpack.c.b16 %v1731, %v1729
    %v2118 = vpack.c.b16 %v1734, %v1732
    %v2119 = vpack.c.b16 %v1735, %v1733
    %v2120 = vpack.c.b16 %v1738, %v1736
    %v2121 = vpack.c.b16 %v1739, %v1737
    %v2122 = vpack.c.b16 %v1742, %v1740
    %v2123 = vpack.c.b16 %v1743, %v1741
    %v2124 = vpack.c.b16 %v1746, %v1744
    %v2125 = vpack.c.b16 %v1747, %v1745
    %v2126 = vpack.c.b16 %v1750, %v1748
    %v2127 = vpack.c.b16 %v1751, %v1749
    %v2128 = vpack.c.b16 %v1754, %v1752
    %v2129 = vpack.c.b16 %v1755, %v1753
    %v2130 = vpack.c.b16 %v1758, %v1756
    %v2131 = vpack.c.b16 %v1759, %v1757
    %v2132 = vpack.c.b16 %v1762, %v1760
    %v2133 = vpack.c.b16 %v1763, %v1761
    %v2134 = vpack.c.b16 %v1766, %v1764
    %v2135 = vpack.c.b16 %v1767, %v1765
    %v2136 = vpack.c.b16 %v1770, %v1768
    %v2137 = vpack.c.b16 %v1771, %v1769
    %v2138 = vpack.c.b16 %v1774, %v1772
    %v2139 = vpack.c.b16 %v1775, %v1773
    %v2140 = vpack.c.b16 %v1778, %v1776
    %v2141 = vpack.c.b16 %v1779, %v1777
    %v2142 = vpack.c.b16 %v1782, %v1780
    %v2143 = vpack.c.b16 %v1783, %v1781
    %v2144 = vpack.c.b16 %v1786, %v1784
    %v2145 = vpack.c.b16 %v1787, %v1785
    %v2146 = vpack.c.b16 %v1790, %v1788
    %v2147 = vpack.c.b16 %v1791, %v1789
    %v2148 = vpack.c.b16 %v1794, %v1792
    %v2149 = vpack.c.b16 %v1795, %v1793
    %v2150 = vpack.c.b16 %v1798, %v1796
    %v2151 = vpack.c.b16 %v1799, %v1797
    %v2152 = vpack.c.b16 %v1802, %v1800
    %v2153 = vpack.c.b16 %v1803, %v1801
    %v2154 = vpack.c.b16 %v1806, %v1804
    %v2155 = vpack.c.b16 %v1807, %v1805
    %v2156 = vpack.c.b16 %v1810, %v1808
    %v2157 = vpack.c.b16 %v1811, %v1809
    %v2158 = vpack.c.b16 %v1814, %v1812
    %v2159 = vpack.c.b16 %v1815, %v1813
    %v2160 = vpack.c.b16 %v1818, %v1816
    %v2161 = vpack.c.b16 %v1819, %v1817
    %v2162 = vpack.c.b16 %v1822, %v1820
    %v2163 = vpack.c.b16 %v1823, %v1821
    %v2164 = vpack.c.b16 %v1826, %v1824
    %v2165 = vpack.c.b16 %v1827, %v1825
    %v2166 = vpack.c.b16 %v1830, %v1828
    %v2167 = vpack.c.b16 %v1831, %v1829
    %v2168 = vpack.c.b16 %v1834, %v1832
    %v2169 = vpack.c.b16 %v1835, %v1833
    %v2170 = vpack.c.b16 %v1838, %v1836
    %v2171 = vpack.c.b16 %v1839, %v1837
    %v2172 = vpack.c.b16 %v1842, %v1840
    %v2173 = vpack.c.b16 %v1843, %v1841
    %v2174 = vpack.c.b16 %v1846, %v1844
    %v2175 = vpack.c.b16 %v1847, %v1845
    %v2176 = vpack.c.b16 %v1850, %v1848
    %v2177 = vpack.c.b16 %v1851, %v1849
    %v2178 = vpack.c.b16 %v1854, %v1852
    %v2179 = vpack.c.b16 %v1855, %v1853
    %v2180 = vpack.c.b16 %v1858, %v1856
    %v2181 = vpack.c.b16 %v1859, %v1857
    %v2182 = vpack.c.b16 %v1862, %v1860
    %v2183 = vpack.c.b16 %v1863, %v1861
    %v2184 = vpack.c.b16 %v1866, %v1864
    %v2185 = vpack.c.b16 %v1867, %v1865
    %v2186 = vpack.c.b16 %v1870, %v1868
    %v2187 = vpack.c.b16 %v1871, %v1869
    %v2188 = vpack.c.b16 %v1874, %v1872
    %v2189 = vpack.c.b16 %v1875, %v1873
    %v2190 = vpack.c.b16 %v1878, %v1876
    %v2191 = vpack.c.b16 %v1879, %v1877
    %v2192 = vpack.c.b16 %v1882, %v1880
    %v2193 = vpack.c.b16 %v1883, %v1881
    %v2194 = vpack.c.b16 %v1886, %v1884
    %v2195 = vpack.c.b16 %v1887, %v1885
    %v2196 = vpack.c.b16 %v1890, %v1888
    %v2197 = vpack.c.b16 %v1891, %v1889
    %v2198 = vpack.c.b16 %v1894, %v1892
    %v2199 = vpack.c.b16 %v1895, %v1893
    %v2200 = vpack.c.b16 %v1898, %v1896
    %v2201 = vpack.c.b16 %v1899, %v1897
    %v2202 = vpack.c.b16 %v1902, %v1900
    %v2203 = vpack.c.b16 %v1903, %v1901
    %v2204 = vpack.c.b16 %v1906, %v1904
    %v2205 = vpack.c.b16 %v1907, %v1905
    %v2206 = vpack.c.b16 %v1910, %v1908
    %v2207 = vpack.c.b16 %v1911, %v1909
    %v2208 = vpack.c.b16 %v1914, %v1912
    %v2209 = vpack.c.b16 %v1915, %v1913
    %v2210 = vpack.c.b16 %v1918, %v1916
    %v2211 = vpack.c.b16 %v1919, %v1917
    %v2212 = vpack.c.b16 %v1922, %v1920
    %v2213 = vpack.c.b16 %v1923, %v1921
    %v2214 = vpack.c.b16 %v1926, %v1924
    %v2215 = vpack.c.b16 %v1927, %v1925
    %2504 = vmatpush.bf16.msra.mxu0 %v1942
    %2505 = vmatpush.bf16.msra.mxu0 %v1940
    %2506 = vmatpush.bf16.msra.mxu0 %v1938
    %2507 = vmatpush.bf16.msra.mxu0 %v1936
    %2508 = vmatpush.bf16.msra.mxu0 %v1934
    %2509 = vmatpush.bf16.msra.mxu0 %v1932
    %2510 = vmatpush.bf16.msra.mxu0 %v1930
    %2511 = vmatpush.bf16.msra.mxu0 %v1928
    %2512 = vmatmul.bf16.gmra.mxu0 %v1016
    %v2513 = vpop.f32.mrf.mxu0
    %v2514 = vadd.f32 %v1060, %v2513
    %v2515 = vpop.f32.mrf.mxu0
    %2516 = vdwg.mxu0
    %2517 = vmatpush.bf16.msra.mxu0 %v1958
    %2518 = vmatpush.bf16.msra.mxu0 %v1956
    %2519 = vmatpush.bf16.msra.mxu0 %v1954
    %2520 = vmatpush.bf16.msra.mxu0 %v1952
    %2521 = vmatpush.bf16.msra.mxu0 %v1950
    %2522 = vmatpush.bf16.msra.mxu0 %v1948
    %2523 = vmatpush.bf16.msra.mxu0 %v1946
    %2524 = vmatpush.bf16.msra.mxu0 %v1944
    %2525 = vmatmul.bf16.gmra.mxu0 %v1017
    %v2526 = vpop.f32.mrf.mxu0
    %v2527 = vadd.f32 %v2514, %v2526
    %v2528 = vpop.f32.mrf.mxu0
    %2529 = vdwg.mxu0
    %2530 = vmatpush.bf16.msra.mxu0 %v1974
    %2531 = vmatpush.bf16.msra.mxu0 %v1972
    %2532 = vmatpush.bf16.msra.mxu0 %v1970
    %2533 = vmatpush.bf16.msra.mxu0 %v1968
    %2534 = vmatpush.bf16.msra.mxu0 %v1966
    %2535 = vmatpush.bf16.msra.mxu0 %v1964
    %2536 = vmatpush.bf16.msra.mxu0 %v1962
    %2537 = vmatpush.bf16.msra.mxu0 %v1960
    %2538 = vmatmul.bf16.gmra.mxu0 %v1018
    %v2539 = vpop.f32.mrf.mxu0
    %v2540 = vadd.f32 %v2527, %v2539
    %v2541 = vpop.f32.mrf.mxu0
    %2542 = vdwg.mxu0
    %2543 = vmatpush.bf16.msra.mxu0 %v1990
    %2544 = vmatpush.bf16.msra.mxu0 %v1988
    %2545 = vmatpush.bf16.msra.mxu0 %v1986
    %2546 = vmatpush.bf16.msra.mxu0 %v1984
    %2547 = vmatpush.bf16.msra.mxu0 %v1982
    %2548 = vmatpush.bf16.msra.mxu0 %v1980
    %2549 = vmatpush.bf16.msra.mxu0 %v1978
    %2550 = vmatpush.bf16.msra.mxu0 %v1976
    %2551 = vmatmul.bf16.gmra.mxu0 %v1019
    %v2552 = vpop.f32.mrf.mxu0
    %v2553 = vadd.f32 %v2540, %v2552
    %v2554 = vpop.f32.mrf.mxu0
    %2555 = vdwg.mxu0
    %2556 = vmatpush.bf16.msra.mxu0 %v2006
    %2557 = vmatpush.bf16.msra.mxu0 %v2004
    %2558 = vmatpush.bf16.msra.mxu0 %v2002
    %2559 = vmatpush.bf16.msra.mxu0 %v2000
    %2560 = vmatpush.bf16.msra.mxu0 %v1998
    %2561 = vmatpush.bf16.msra.mxu0 %v1996
    %2562 = vmatpush.bf16.msra.mxu0 %v1994
    %2563 = vmatpush.bf16.msra.mxu0 %v1992
    %2564 = vmatmul.bf16.gmra.mxu0 %v1020
    %v2565 = vpop.f32.mrf.mxu0
    %v2566 = vadd.f32 %v2553, %v2565
    %v2567 = vpop.f32.mrf.mxu0
    %2568 = vdwg.mxu0
    %2569 = vmatpush.bf16.msra.mxu0 %v2022
    %2570 = vmatpush.bf16.msra.mxu0 %v2020
    %2571 = vmatpush.bf16.msra.mxu0 %v2018
    %2572 = vmatpush.bf16.msra.mxu0 %v2016
    %2573 = vmatpush.bf16.msra.mxu0 %v2014
    %2574 = vmatpush.bf16.msra.mxu0 %v2012
    %2575 = vmatpush.bf16.msra.mxu0 %v2010
    %2576 = vmatpush.bf16.msra.mxu0 %v2008
    %2577 = vmatmul.bf16.gmra.mxu0 %v1021
    %v2578 = vpop.f32.mrf.mxu0
    %v2579 = vadd.f32 %v2566, %v2578
    %v2580 = vpop.f32.mrf.mxu0
    %2581 = vdwg.mxu0
    %2582 = vmatpush.bf16.msra.mxu0 %v2038
    %2583 = vmatpush.bf16.msra.mxu0 %v2036
    %2584 = vmatpush.bf16.msra.mxu0 %v2034
    %2585 = vmatpush.bf16.msra.mxu0 %v2032
    %2586 = vmatpush.bf16.msra.mxu0 %v2030
    %2587 = vmatpush.bf16.msra.mxu0 %v2028
    %2588 = vmatpush.bf16.msra.mxu0 %v2026
    %2589 = vmatpush.bf16.msra.mxu0 %v2024
    %2590 = vmatmul.bf16.gmra.mxu0 %v1022
    %v2591 = vpop.f32.mrf.mxu0
    %v2592 = vadd.f32 %v2579, %v2591
    %v2593 = vpop.f32.mrf.mxu0
    %2594 = vdwg.mxu0
    %2595 = vmatpush.bf16.msra.mxu0 %v2054
    %2596 = vmatpush.bf16.msra.mxu0 %v2052
    %2597 = vmatpush.bf16.msra.mxu0 %v2050
    %2598 = vmatpush.bf16.msra.mxu0 %v2048
    %2599 = vmatpush.bf16.msra.mxu0 %v2046
    %2600 = vmatpush.bf16.msra.mxu0 %v2044
    %2601 = vmatpush.bf16.msra.mxu0 %v2042
    %2602 = vmatpush.bf16.msra.mxu0 %v2040
    %2603 = vmatmul.bf16.gmra.mxu0 %v1023
    %v2604 = vpop.f32.mrf.mxu0
    %v2605 = vadd.f32 %v2592, %v2604
    %v2606 = vpop.f32.mrf.mxu0
    %2607 = vdwg.mxu0
    %2608 = vmatpush.bf16.msra.mxu0 %v2070
    %2609 = vmatpush.bf16.msra.mxu0 %v2068
    %2610 = vmatpush.bf16.msra.mxu0 %v2066
    %2611 = vmatpush.bf16.msra.mxu0 %v2064
    %2612 = vmatpush.bf16.msra.mxu0 %v2062
    %2613 = vmatpush.bf16.msra.mxu0 %v2060
    %2614 = vmatpush.bf16.msra.mxu0 %v2058
    %2615 = vmatpush.bf16.msra.mxu0 %v2056
    %2616 = vmatmul.bf16.gmra.mxu0 %v1024
    %v2617 = vpop.f32.mrf.mxu0
    %v2618 = vadd.f32 %v2605, %v2617
    %v2619 = vpop.f32.mrf.mxu0
    %2620 = vdwg.mxu0
    %2621 = vmatpush.bf16.msra.mxu0 %v2086
    %2622 = vmatpush.bf16.msra.mxu0 %v2084
    %2623 = vmatpush.bf16.msra.mxu0 %v2082
    %2624 = vmatpush.bf16.msra.mxu0 %v2080
    %2625 = vmatpush.bf16.msra.mxu0 %v2078
    %2626 = vmatpush.bf16.msra.mxu0 %v2076
    %2627 = vmatpush.bf16.msra.mxu0 %v2074
    %2628 = vmatpush.bf16.msra.mxu0 %v2072
    %2629 = vmatmul.bf16.gmra.mxu0 %v1025
    %v2630 = vpop.f32.mrf.mxu0
    %v2631 = vadd.f32 %v2618, %v2630
    %v2632 = vpop.f32.mrf.mxu0
    %2633 = vdwg.mxu0
    %2634 = vmatpush.bf16.msra.mxu0 %v2102
    %2635 = vmatpush.bf16.msra.mxu0 %v2100
    %2636 = vmatpush.bf16.msra.mxu0 %v2098
    %2637 = vmatpush.bf16.msra.mxu0 %v2096
    %2638 = vmatpush.bf16.msra.mxu0 %v2094
    %2639 = vmatpush.bf16.msra.mxu0 %v2092
    %2640 = vmatpush.bf16.msra.mxu0 %v2090
    %2641 = vmatpush.bf16.msra.mxu0 %v2088
    %2642 = vmatmul.bf16.gmra.mxu0 %v1026
    %v2643 = vpop.f32.mrf.mxu0
    %v2644 = vadd.f32 %v2631, %v2643
    %v2645 = vpop.f32.mrf.mxu0
    %2646 = vdwg.mxu0
    %2647 = vmatpush.bf16.msra.mxu0 %v2118
    %2648 = vmatpush.bf16.msra.mxu0 %v2116
    %2649 = vmatpush.bf16.msra.mxu0 %v2114
    %2650 = vmatpush.bf16.msra.mxu0 %v2112
    %2651 = vmatpush.bf16.msra.mxu0 %v2110
    %2652 = vmatpush.bf16.msra.mxu0 %v2108
    %2653 = vmatpush.bf16.msra.mxu0 %v2106
    %2654 = vmatpush.bf16.msra.mxu0 %v2104
    %2655 = vmatmul.bf16.gmra.mxu0 %v1027
    %v2656 = vpop.f32.mrf.mxu0
    %v2657 = vadd.f32 %v2644, %v2656
    %v2658 = vpop.f32.mrf.mxu0
    %2659 = vdwg.mxu0
    %2660 = vmatpush.bf16.msra.mxu0 %v2134
    %2661 = vmatpush.bf16.msra.mxu0 %v2132
    %2662 = vmatpush.bf16.msra.mxu0 %v2130
    %2663 = vmatpush.bf16.msra.mxu0 %v2128
    %2664 = vmatpush.bf16.msra.mxu0 %v2126
    %2665 = vmatpush.bf16.msra.mxu0 %v2124
    %2666 = vmatpush.bf16.msra.mxu0 %v2122
    %2667 = vmatpush.bf16.msra.mxu0 %v2120
    %2668 = vmatmul.bf16.gmra.mxu0 %v1028
    %v2669 = vpop.f32.mrf.mxu0
    %v2670 = vadd.f32 %v2657, %v2669
    %v2671 = vpop.f32.mrf.mxu0
    %2672 = vdwg.mxu0
    %2673 = vmatpush.bf16.msra.mxu0 %v2150
    %2674 = vmatpush.bf16.msra.mxu0 %v2148
    %2675 = vmatpush.bf16.msra.mxu0 %v2146
    %2676 = vmatpush.bf16.msra.mxu0 %v2144
    %2677 = vmatpush.bf16.msra.mxu0 %v2142
    %2678 = vmatpush.bf16.msra.mxu0 %v2140
    %2679 = vmatpush.bf16.msra.mxu0 %v2138
    %2680 = vmatpush.bf16.msra.mxu0 %v2136
    %2681 = vmatmul.bf16.gmra.mxu0 %v1029
    %v2682 = vpop.f32.mrf.mxu0
    %v2683 = vadd.f32 %v2670, %v2682
    %v2684 = vpop.f32.mrf.mxu0
    %2685 = vdwg.mxu0
    %2686 = vmatpush.bf16.msra.mxu0 %v2166
    %2687 = vmatpush.bf16.msra.mxu0 %v2164
    %2688 = vmatpush.bf16.msra.mxu0 %v2162
    %2689 = vmatpush.bf16.msra.mxu0 %v2160
    %2690 = vmatpush.bf16.msra.mxu0 %v2158
    %2691 = vmatpush.bf16.msra.mxu0 %v2156
    %2692 = vmatpush.bf16.msra.mxu0 %v2154
    %2693 = vmatpush.bf16.msra.mxu0 %v2152
    %2694 = vmatmul.bf16.gmra.mxu0 %v1030
    %v2695 = vpop.f32.mrf.mxu0
    %v2696 = vadd.f32 %v2683, %v2695
    %v2697 = vpop.f32.mrf.mxu0
    %2698 = vdwg.mxu0
    %2699 = vmatpush.bf16.msra.mxu0 %v2182
    %2700 = vmatpush.bf16.msra.mxu0 %v2180
    %2701 = vmatpush.bf16.msra.mxu0 %v2178
    %2702 = vmatpush.bf16.msra.mxu0 %v2176
    %2703 = vmatpush.bf16.msra.mxu0 %v2174
    %2704 = vmatpush.bf16.msra.mxu0 %v2172
    %2705 = vmatpush.bf16.msra.mxu0 %v2170
    %2706 = vmatpush.bf16.msra.mxu0 %v2168
    %2707 = vmatmul.bf16.gmra.mxu0 %v1031
    %v2708 = vpop.f32.mrf.mxu0
    %v2709 = vadd.f32 %v2696, %v2708
    %v2710 = vpop.f32.mrf.mxu0
    %2711 = vdwg.mxu0
    %2712 = vmatpush.bf16.msra.mxu0 %v2198
    %2713 = vmatpush.bf16.msra.mxu0 %v2196
    %2714 = vmatpush.bf16.msra.mxu0 %v2194
    %2715 = vmatpush.bf16.msra.mxu0 %v2192
    %2716 = vmatpush.bf16.msra.mxu0 %v2190
    %2717 = vmatpush.bf16.msra.mxu0 %v2188
    %2718 = vmatpush.bf16.msra.mxu0 %v2186
    %2719 = vmatpush.bf16.msra.mxu0 %v2184
    %2720 = vmatmul.bf16.gmra.mxu0 %v1032
    %v2721 = vpop.f32.mrf.mxu0
    %v2722 = vadd.f32 %v2709, %v2721
    %v2723 = vpop.f32.mrf.mxu0
    %2724 = vdwg.mxu0
    %2725 = vmatpush.bf16.msra.mxu0 %v2214
    %2726 = vmatpush.bf16.msra.mxu0 %v2212
    %2727 = vmatpush.bf16.msra.mxu0 %v2210
    %2728 = vmatpush.bf16.msra.mxu0 %v2208
    %2729 = vmatpush.bf16.msra.mxu0 %v2206
    %2730 = vmatpush.bf16.msra.mxu0 %v2204
    %2731 = vmatpush.bf16.msra.mxu0 %v2202
    %2732 = vmatpush.bf16.msra.mxu0 %v2200
    %2733 = vmatmul.bf16.gmra.mxu0 %v1033
    %v2734 = vpop.f32.mrf.mxu0
    %v2735 = vadd.f32 %v2722, %v2734
    %v2736 = vpop.f32.mrf.mxu0
    %2737 = vdwg.mxu0
    %2738 = vmatpush.bf16.msra.mxu0 %v1943
    %2739 = vmatpush.bf16.msra.mxu0 %v1941
    %2740 = vmatpush.bf16.msra.mxu0 %v1939
    %2741 = vmatpush.bf16.msra.mxu0 %v1937
    %2742 = vmatpush.bf16.msra.mxu0 %v1935
    %2743 = vmatpush.bf16.msra.mxu0 %v1933
    %2744 = vmatpush.bf16.msra.mxu0 %v1931
    %2745 = vmatpush.bf16.msra.mxu0 %v1929
    %2746 = vmatmul.bf16.gmra.mxu0 %v1016
    %v2747 = vpop.f32.mrf.mxu0
    %v2748 = vadd.f32 %v1061, %v2747
    %v2749 = vpop.f32.mrf.mxu0
    %2750 = vdwg.mxu0
    %2751 = vmatpush.bf16.msra.mxu0 %v1959
    %2752 = vmatpush.bf16.msra.mxu0 %v1957
    %2753 = vmatpush.bf16.msra.mxu0 %v1955
    %2754 = vmatpush.bf16.msra.mxu0 %v1953
    %2755 = vmatpush.bf16.msra.mxu0 %v1951
    %2756 = vmatpush.bf16.msra.mxu0 %v1949
    %2757 = vmatpush.bf16.msra.mxu0 %v1947
    %2758 = vmatpush.bf16.msra.mxu0 %v1945
    %2759 = vmatmul.bf16.gmra.mxu0 %v1017
    %v2760 = vpop.f32.mrf.mxu0
    %v2761 = vadd.f32 %v2748, %v2760
    %v2762 = vpop.f32.mrf.mxu0
    %2763 = vdwg.mxu0
    %2764 = vmatpush.bf16.msra.mxu0 %v1975
    %2765 = vmatpush.bf16.msra.mxu0 %v1973
    %2766 = vmatpush.bf16.msra.mxu0 %v1971
    %2767 = vmatpush.bf16.msra.mxu0 %v1969
    %2768 = vmatpush.bf16.msra.mxu0 %v1967
    %2769 = vmatpush.bf16.msra.mxu0 %v1965
    %2770 = vmatpush.bf16.msra.mxu0 %v1963
    %2771 = vmatpush.bf16.msra.mxu0 %v1961
    %2772 = vmatmul.bf16.gmra.mxu0 %v1018
    %v2773 = vpop.f32.mrf.mxu0
    %v2774 = vadd.f32 %v2761, %v2773
    %v2775 = vpop.f32.mrf.mxu0
    %2776 = vdwg.mxu0
    %2777 = vmatpush.bf16.msra.mxu0 %v1991
    %2778 = vmatpush.bf16.msra.mxu0 %v1989
    %2779 = vmatpush.bf16.msra.mxu0 %v1987
    %2780 = vmatpush.bf16.msra.mxu0 %v1985
    %2781 = vmatpush.bf16.msra.mxu0 %v1983
    %2782 = vmatpush.bf16.msra.mxu0 %v1981
    %2783 = vmatpush.bf16.msra.mxu0 %v1979
    %2784 = vmatpush.bf16.msra.mxu0 %v1977
    %2785 = vmatmul.bf16.gmra.mxu0 %v1019
    %v2786 = vpop.f32.mrf.mxu0
    %v2787 = vadd.f32 %v2774, %v2786
    %v2788 = vpop.f32.mrf.mxu0
    %2789 = vdwg.mxu0
    %2790 = vmatpush.bf16.msra.mxu0 %v2007
    %2791 = vmatpush.bf16.msra.mxu0 %v2005
    %2792 = vmatpush.bf16.msra.mxu0 %v2003
    %2793 = vmatpush.bf16.msra.mxu0 %v2001
    %2794 = vmatpush.bf16.msra.mxu0 %v1999
    %2795 = vmatpush.bf16.msra.mxu0 %v1997
    %2796 = vmatpush.bf16.msra.mxu0 %v1995
    %2797 = vmatpush.bf16.msra.mxu0 %v1993
    %2798 = vmatmul.bf16.gmra.mxu0 %v1020
    %v2799 = vpop.f32.mrf.mxu0
    %v2800 = vadd.f32 %v2787, %v2799
    %v2801 = vpop.f32.mrf.mxu0
    %2802 = vdwg.mxu0
    %2803 = vmatpush.bf16.msra.mxu0 %v2023
    %2804 = vmatpush.bf16.msra.mxu0 %v2021
    %2805 = vmatpush.bf16.msra.mxu0 %v2019
    %2806 = vmatpush.bf16.msra.mxu0 %v2017
    %2807 = vmatpush.bf16.msra.mxu0 %v2015
    %2808 = vmatpush.bf16.msra.mxu0 %v2013
    %2809 = vmatpush.bf16.msra.mxu0 %v2011
    %2810 = vmatpush.bf16.msra.mxu0 %v2009
    %2811 = vmatmul.bf16.gmra.mxu0 %v1021
    %v2812 = vpop.f32.mrf.mxu0
    %v2813 = vadd.f32 %v2800, %v2812
    %v2814 = vpop.f32.mrf.mxu0
    %2815 = vdwg.mxu0
    %2816 = vmatpush.bf16.msra.mxu0 %v2039
    %2817 = vmatpush.bf16.msra.mxu0 %v2037
    %2818 = vmatpush.bf16.msra.mxu0 %v2035
    %2819 = vmatpush.bf16.msra.mxu0 %v2033
    %2820 = vmatpush.bf16.msra.mxu0 %v2031
    %2821 = vmatpush.bf16.msra.mxu0 %v2029
    %2822 = vmatpush.bf16.msra.mxu0 %v2027
    %2823 = vmatpush.bf16.msra.mxu0 %v2025
    %2824 = vmatmul.bf16.gmra.mxu0 %v1022
    %v2825 = vpop.f32.mrf.mxu0
    %v2826 = vadd.f32 %v2813, %v2825
    %v2827 = vpop.f32.mrf.mxu0
    %2828 = vdwg.mxu0
    %2829 = vmatpush.bf16.msra.mxu0 %v2055
    %2830 = vmatpush.bf16.msra.mxu0 %v2053
    %2831 = vmatpush.bf16.msra.mxu0 %v2051
    %2832 = vmatpush.bf16.msra.mxu0 %v2049
    %2833 = vmatpush.bf16.msra.mxu0 %v2047
    %2834 = vmatpush.bf16.msra.mxu0 %v2045
    %2835 = vmatpush.bf16.msra.mxu0 %v2043
    %2836 = vmatpush.bf16.msra.mxu0 %v2041
    %2837 = vmatmul.bf16.gmra.mxu0 %v1023
    %v2838 = vpop.f32.mrf.mxu0
    %v2839 = vadd.f32 %v2826, %v2838
    %v2840 = vpop.f32.mrf.mxu0
    %2841 = vdwg.mxu0
    %2842 = vmatpush.bf16.msra.mxu0 %v2071
    %2843 = vmatpush.bf16.msra.mxu0 %v2069
    %2844 = vmatpush.bf16.msra.mxu0 %v2067
    %2845 = vmatpush.bf16.msra.mxu0 %v2065
    %2846 = vmatpush.bf16.msra.mxu0 %v2063
    %2847 = vmatpush.bf16.msra.mxu0 %v2061
    %2848 = vmatpush.bf16.msra.mxu0 %v2059
    %2849 = vmatpush.bf16.msra.mxu0 %v2057
    %2850 = vmatmul.bf16.gmra.mxu0 %v1024
    %v2851 = vpop.f32.mrf.mxu0
    %v2852 = vadd.f32 %v2839, %v2851
    %v2853 = vpop.f32.mrf.mxu0
    %2854 = vdwg.mxu0
    %2855 = vmatpush.bf16.msra.mxu0 %v2087
    %2856 = vmatpush.bf16.msra.mxu0 %v2085
    %2857 = vmatpush.bf16.msra.mxu0 %v2083
    %2858 = vmatpush.bf16.msra.mxu0 %v2081
    %2859 = vmatpush.bf16.msra.mxu0 %v2079
    %2860 = vmatpush.bf16.msra.mxu0 %v2077
    %2861 = vmatpush.bf16.msra.mxu0 %v2075
    %2862 = vmatpush.bf16.msra.mxu0 %v2073
    %2863 = vmatmul.bf16.gmra.mxu0 %v1025
    %v2864 = vpop.f32.mrf.mxu0
    %v2865 = vadd.f32 %v2852, %v2864
    %v2866 = vpop.f32.mrf.mxu0
    %2867 = vdwg.mxu0
    %2868 = vmatpush.bf16.msra.mxu0 %v2103
    %2869 = vmatpush.bf16.msra.mxu0 %v2101
    %2870 = vmatpush.bf16.msra.mxu0 %v2099
    %2871 = vmatpush.bf16.msra.mxu0 %v2097
    %2872 = vmatpush.bf16.msra.mxu0 %v2095
    %2873 = vmatpush.bf16.msra.mxu0 %v2093
    %2874 = vmatpush.bf16.msra.mxu0 %v2091
    %2875 = vmatpush.bf16.msra.mxu0 %v2089
    %2876 = vmatmul.bf16.gmra.mxu0 %v1026
    %v2877 = vpop.f32.mrf.mxu0
    %v2878 = vadd.f32 %v2865, %v2877
    %v2879 = vpop.f32.mrf.mxu0
    %2880 = vdwg.mxu0
    %2881 = vmatpush.bf16.msra.mxu0 %v2119
    %2882 = vmatpush.bf16.msra.mxu0 %v2117
    %2883 = vmatpush.bf16.msra.mxu0 %v2115
    %2884 = vmatpush.bf16.msra.mxu0 %v2113
    %2885 = vmatpush.bf16.msra.mxu0 %v2111
    %2886 = vmatpush.bf16.msra.mxu0 %v2109
    %2887 = vmatpush.bf16.msra.mxu0 %v2107
    %2888 = vmatpush.bf16.msra.mxu0 %v2105
    %2889 = vmatmul.bf16.gmra.mxu0 %v1027
    %v2890 = vpop.f32.mrf.mxu0
    %v2891 = vadd.f32 %v2878, %v2890
    %v2892 = vpop.f32.mrf.mxu0
    %2893 = vdwg.mxu0
    %2894 = vmatpush.bf16.msra.mxu0 %v2135
    %2895 = vmatpush.bf16.msra.mxu0 %v2133
    %2896 = vmatpush.bf16.msra.mxu0 %v2131
    %2897 = vmatpush.bf16.msra.mxu0 %v2129
    %2898 = vmatpush.bf16.msra.mxu0 %v2127
    %2899 = vmatpush.bf16.msra.mxu0 %v2125
    %2900 = vmatpush.bf16.msra.mxu0 %v2123
    %2901 = vmatpush.bf16.msra.mxu0 %v2121
    %2902 = vmatmul.bf16.gmra.mxu0 %v1028
    %v2903 = vpop.f32.mrf.mxu0
    %v2904 = vadd.f32 %v2891, %v2903
    %v2905 = vpop.f32.mrf.mxu0
    %2906 = vdwg.mxu0
    %2907 = vmatpush.bf16.msra.mxu0 %v2151
    %2908 = vmatpush.bf16.msra.mxu0 %v2149
    %2909 = vmatpush.bf16.msra.mxu0 %v2147
    %2910 = vmatpush.bf16.msra.mxu0 %v2145
    %2911 = vmatpush.bf16.msra.mxu0 %v2143
    %2912 = vmatpush.bf16.msra.mxu0 %v2141
    %2913 = vmatpush.bf16.msra.mxu0 %v2139
    %2914 = vmatpush.bf16.msra.mxu0 %v2137
    %2915 = vmatmul.bf16.gmra.mxu0 %v1029
    %v2916 = vpop.f32.mrf.mxu0
    %v2917 = vadd.f32 %v2904, %v2916
    %v2918 = vpop.f32.mrf.mxu0
    %2919 = vdwg.mxu0
    %2920 = vmatpush.bf16.msra.mxu0 %v2167
    %2921 = vmatpush.bf16.msra.mxu0 %v2165
    %2922 = vmatpush.bf16.msra.mxu0 %v2163
    %2923 = vmatpush.bf16.msra.mxu0 %v2161
    %2924 = vmatpush.bf16.msra.mxu0 %v2159
    %2925 = vmatpush.bf16.msra.mxu0 %v2157
    %2926 = vmatpush.bf16.msra.mxu0 %v2155
    %2927 = vmatpush.bf16.msra.mxu0 %v2153
    %2928 = vmatmul.bf16.gmra.mxu0 %v1030
    %v2929 = vpop.f32.mrf.mxu0
    %v2930 = vadd.f32 %v2917, %v2929
    %v2931 = vpop.f32.mrf.mxu0
    %2932 = vdwg.mxu0
    %2933 = vmatpush.bf16.msra.mxu0 %v2183
    %2934 = vmatpush.bf16.msra.mxu0 %v2181
    %2935 = vmatpush.bf16.msra.mxu0 %v2179
    %2936 = vmatpush.bf16.msra.mxu0 %v2177
    %2937 = vmatpush.bf16.msra.mxu0 %v2175
    %2938 = vmatpush.bf16.msra.mxu0 %v2173
    %2939 = vmatpush.bf16.msra.mxu0 %v2171
    %2940 = vmatpush.bf16.msra.mxu0 %v2169
    %2941 = vmatmul.bf16.gmra.mxu0 %v1031
    %v2942 = vpop.f32.mrf.mxu0
    %v2943 = vadd.f32 %v2930, %v2942
    %v2944 = vpop.f32.mrf.mxu0
    %2945 = vdwg.mxu0
    %2946 = vmatpush.bf16.msra.mxu0 %v2199
    %2947 = vmatpush.bf16.msra.mxu0 %v2197
    %2948 = vmatpush.bf16.msra.mxu0 %v2195
    %2949 = vmatpush.bf16.msra.mxu0 %v2193
    %2950 = vmatpush.bf16.msra.mxu0 %v2191
    %2951 = vmatpush.bf16.msra.mxu0 %v2189
    %2952 = vmatpush.bf16.msra.mxu0 %v2187
    %2953 = vmatpush.bf16.msra.mxu0 %v2185
    %2954 = vmatmul.bf16.gmra.mxu0 %v1032
    %v2955 = vpop.f32.mrf.mxu0
    %v2956 = vadd.f32 %v2943, %v2955
    %v2957 = vpop.f32.mrf.mxu0
    %2958 = vdwg.mxu0
    %2959 = vmatpush.bf16.msra.mxu0 %v2215
    %2960 = vmatpush.bf16.msra.mxu0 %v2213
    %2961 = vmatpush.bf16.msra.mxu0 %v2211
    %2962 = vmatpush.bf16.msra.mxu0 %v2209
    %2963 = vmatpush.bf16.msra.mxu0 %v2207
    %2964 = vmatpush.bf16.msra.mxu0 %v2205
    %2965 = vmatpush.bf16.msra.mxu0 %v2203
    %2966 = vmatpush.bf16.msra.mxu0 %v2201
    %2967 = vmatmul.bf16.gmra.mxu0 %v1033
    %v2968 = vpop.f32.mrf.mxu0
    %v2969 = vadd.f32 %v2956, %v2968
    %v2970 = vpop.f32.mrf.mxu0
    %2971 = vdwg.mxu0
    %v2972 = vmax.f32 %v2735, 0.0
    %v2973 = vmax.f32 %v2969, 0.0
    %2974 = vmatpush.bf16.msra.mxu0 %v1942
    %2975 = vmatpush.bf16.msra.mxu0 %v1940
    %2976 = vmatpush.bf16.msra.mxu0 %v1938
    %2977 = vmatpush.bf16.msra.mxu0 %v1936
    %2978 = vmatpush.bf16.msra.mxu0 %v1934
    %2979 = vmatpush.bf16.msra.mxu0 %v1932
    %2980 = vmatpush.bf16.msra.mxu0 %v1930
    %2981 = vmatpush.bf16.msra.mxu0 %v1928
    %2982 = vmatmul.bf16.gmra.mxu0 %v1022
    %v2983 = vpop.f32.mrf.mxu0
    %v2984 = vadd.f32 %v1060, %v2983
    %v2985 = vpop.f32.mrf.mxu0
    %2986 = vdwg.mxu0
    %2987 = vmatpush.bf16.msra.mxu0 %v1958
    %2988 = vmatpush.bf16.msra.mxu0 %v1956
    %2989 = vmatpush.bf16.msra.mxu0 %v1954
    %2990 = vmatpush.bf16.msra.mxu0 %v1952
    %2991 = vmatpush.bf16.msra.mxu0 %v1950
    %2992 = vmatpush.bf16.msra.mxu0 %v1948
    %2993 = vmatpush.bf16.msra.mxu0 %v1946
    %2994 = vmatpush.bf16.msra.mxu0 %v1944
    %2995 = vmatmul.bf16.gmra.mxu0 %v1023
    %v2996 = vpop.f32.mrf.mxu0
    %v2997 = vadd.f32 %v2984, %v2996
    %v2998 = vpop.f32.mrf.mxu0
    %2999 = vdwg.mxu0
    %3000 = vmatpush.bf16.msra.mxu0 %v1974
    %3001 = vmatpush.bf16.msra.mxu0 %v1972
    %3002 = vmatpush.bf16.msra.mxu0 %v1970
    %3003 = vmatpush.bf16.msra.mxu0 %v1968
    %3004 = vmatpush.bf16.msra.mxu0 %v1966
    %3005 = vmatpush.bf16.msra.mxu0 %v1964
    %3006 = vmatpush.bf16.msra.mxu0 %v1962
    %3007 = vmatpush.bf16.msra.mxu0 %v1960
    %3008 = vmatmul.bf16.gmra.mxu0 %v1024
    %v3009 = vpop.f32.mrf.mxu0
    %v3010 = vadd.f32 %v2997, %v3009
    %v3011 = vpop.f32.mrf.mxu0
    %3012 = vdwg.mxu0
    %3013 = vmatpush.bf16.msra.mxu0 %v1990
    %3014 = vmatpush.bf16.msra.mxu0 %v1988
    %3015 = vmatpush.bf16.msra.mxu0 %v1986
    %3016 = vmatpush.bf16.msra.mxu0 %v1984
    %3017 = vmatpush.bf16.msra.mxu0 %v1982
    %3018 = vmatpush.bf16.msra.mxu0 %v1980
    %3019 = vmatpush.bf16.msra.mxu0 %v1978
    %3020 = vmatpush.bf16.msra.mxu0 %v1976
    %3021 = vmatmul.bf16.gmra.mxu0 %v1025
    %v3022 = vpop.f32.mrf.mxu0
    %v3023 = vadd.f32 %v3010, %v3022
    %v3024 = vpop.f32.mrf.mxu0
    %3025 = vdwg.mxu0
    %3026 = vmatpush.bf16.msra.mxu0 %v2006
    %3027 = vmatpush.bf16.msra.mxu0 %v2004
    %3028 = vmatpush.bf16.msra.mxu0 %v2002
    %3029 = vmatpush.bf16.msra.mxu0 %v2000
    %3030 = vmatpush.bf16.msra.mxu0 %v1998
    %3031 = vmatpush.bf16.msra.mxu0 %v1996
    %3032 = vmatpush.bf16.msra.mxu0 %v1994
    %3033 = vmatpush.bf16.msra.mxu0 %v1992
    %3034 = vmatmul.bf16.gmra.mxu0 %v1026
    %v3035 = vpop.f32.mrf.mxu0
    %v3036 = vadd.f32 %v3023, %v3035
    %v3037 = vpop.f32.mrf.mxu0
    %3038 = vdwg.mxu0
    %3039 = vmatpush.bf16.msra.mxu0 %v2022
    %3040 = vmatpush.bf16.msra.mxu0 %v2020
    %3041 = vmatpush.bf16.msra.mxu0 %v2018
    %3042 = vmatpush.bf16.msra.mxu0 %v2016
    %3043 = vmatpush.bf16.msra.mxu0 %v2014
    %3044 = vmatpush.bf16.msra.mxu0 %v2012
    %3045 = vmatpush.bf16.msra.mxu0 %v2010
    %3046 = vmatpush.bf16.msra.mxu0 %v2008
    %3047 = vmatmul.bf16.gmra.mxu0 %v1027
    %v3048 = vpop.f32.mrf.mxu0
    %v3049 = vadd.f32 %v3036, %v3048
    %v3050 = vpop.f32.mrf.mxu0
    %3051 = vdwg.mxu0
    %3052 = vmatpush.bf16.msra.mxu0 %v2038
    %3053 = vmatpush.bf16.msra.mxu0 %v2036
    %3054 = vmatpush.bf16.msra.mxu0 %v2034
    %3055 = vmatpush.bf16.msra.mxu0 %v2032
    %3056 = vmatpush.bf16.msra.mxu0 %v2030
    %3057 = vmatpush.bf16.msra.mxu0 %v2028
    %3058 = vmatpush.bf16.msra.mxu0 %v2026
    %3059 = vmatpush.bf16.msra.mxu0 %v2024
    %3060 = vmatmul.bf16.gmra.mxu0 %v1028
    %v3061 = vpop.f32.mrf.mxu0
    %v3062 = vadd.f32 %v3049, %v3061
    %v3063 = vpop.f32.mrf.mxu0
    %3064 = vdwg.mxu0
    %3065 = vmatpush.bf16.msra.mxu0 %v2054
    %3066 = vmatpush.bf16.msra.mxu0 %v2052
    %3067 = vmatpush.bf16.msra.mxu0 %v2050
    %3068 = vmatpush.bf16.msra.mxu0 %v2048
    %3069 = vmatpush.bf16.msra.mxu0 %v2046
    %3070 = vmatpush.bf16.msra.mxu0 %v2044
    %3071 = vmatpush.bf16.msra.mxu0 %v2042
    %3072 = vmatpush.bf16.msra.mxu0 %v2040
    %3073 = vmatmul.bf16.gmra.mxu0 %v1029
    %v3074 = vpop.f32.mrf.mxu0
    %v3075 = vadd.f32 %v3062, %v3074
    %v3076 = vpop.f32.mrf.mxu0
    %3077 = vdwg.mxu0
    %3078 = vmatpush.bf16.msra.mxu0 %v2070
    %3079 = vmatpush.bf16.msra.mxu0 %v2068
    %3080 = vmatpush.bf16.msra.mxu0 %v2066
    %3081 = vmatpush.bf16.msra.mxu0 %v2064
    %3082 = vmatpush.bf16.msra.mxu0 %v2062
    %3083 = vmatpush.bf16.msra.mxu0 %v2060
    %3084 = vmatpush.bf16.msra.mxu0 %v2058
    %3085 = vmatpush.bf16.msra.mxu0 %v2056
    %3086 = vmatmul.bf16.gmra.mxu0 %v1030
    %v3087 = vpop.f32.mrf.mxu0
    %v3088 = vadd.f32 %v3075, %v3087
    %v3089 = vpop.f32.mrf.mxu0
    %3090 = vdwg.mxu0
    %3091 = vmatpush.bf16.msra.mxu0 %v2086
    %3092 = vmatpush.bf16.msra.mxu0 %v2084
    %3093 = vmatpush.bf16.msra.mxu0 %v2082
    %3094 = vmatpush.bf16.msra.mxu0 %v2080
    %3095 = vmatpush.bf16.msra.mxu0 %v2078
    %3096 = vmatpush.bf16.msra.mxu0 %v2076
    %3097 = vmatpush.bf16.msra.mxu0 %v2074
    %3098 = vmatpush.bf16.msra.mxu0 %v2072
    %3099 = vmatmul.bf16.gmra.mxu0 %v1031
    %v3100 = vpop.f32.mrf.mxu0
    %v3101 = vadd.f32 %v3088, %v3100
    %v3102 = vpop.f32.mrf.mxu0
    %3103 = vdwg.mxu0
    %3104 = vmatpush.bf16.msra.mxu0 %v2102
    %3105 = vmatpush.bf16.msra.mxu0 %v2100
    %3106 = vmatpush.bf16.msra.mxu0 %v2098
    %3107 = vmatpush.bf16.msra.mxu0 %v2096
    %3108 = vmatpush.bf16.msra.mxu0 %v2094
    %3109 = vmatpush.bf16.msra.mxu0 %v2092
    %3110 = vmatpush.bf16.msra.mxu0 %v2090
    %3111 = vmatpush.bf16.msra.mxu0 %v2088
    %3112 = vmatmul.bf16.gmra.mxu0 %v1032
    %v3113 = vpop.f32.mrf.mxu0
    %v3114 = vadd.f32 %v3101, %v3113
    %v3115 = vpop.f32.mrf.mxu0
    %3116 = vdwg.mxu0
    %3117 = vmatpush.bf16.msra.mxu0 %v2118
    %3118 = vmatpush.bf16.msra.mxu0 %v2116
    %3119 = vmatpush.bf16.msra.mxu0 %v2114
    %3120 = vmatpush.bf16.msra.mxu0 %v2112
    %3121 = vmatpush.bf16.msra.mxu0 %v2110
    %3122 = vmatpush.bf16.msra.mxu0 %v2108
    %3123 = vmatpush.bf16.msra.mxu0 %v2106
    %3124 = vmatpush.bf16.msra.mxu0 %v2104
    %3125 = vmatmul.bf16.gmra.mxu0 %v1033
    %v3126 = vpop.f32.mrf.mxu0
    %v3127 = vadd.f32 %v3114, %v3126
    %v3128 = vpop.f32.mrf.mxu0
    %3129 = vdwg.mxu0
    %3130 = vmatpush.bf16.msra.mxu0 %v2134
    %3131 = vmatpush.bf16.msra.mxu0 %v2132
    %3132 = vmatpush.bf16.msra.mxu0 %v2130
    %3133 = vmatpush.bf16.msra.mxu0 %v2128
    %3134 = vmatpush.bf16.msra.mxu0 %v2126
    %3135 = vmatpush.bf16.msra.mxu0 %v2124
    %3136 = vmatpush.bf16.msra.mxu0 %v2122
    %3137 = vmatpush.bf16.msra.mxu0 %v2120
    %3138 = vmatmul.bf16.gmra.mxu0 %v1052
    %v3139 = vpop.f32.mrf.mxu0
    %v3140 = vadd.f32 %v3127, %v3139
    %v3141 = vpop.f32.mrf.mxu0
    %3142 = vdwg.mxu0
    %3143 = vmatpush.bf16.msra.mxu0 %v2150
    %3144 = vmatpush.bf16.msra.mxu0 %v2148
    %3145 = vmatpush.bf16.msra.mxu0 %v2146
    %3146 = vmatpush.bf16.msra.mxu0 %v2144
    %3147 = vmatpush.bf16.msra.mxu0 %v2142
    %3148 = vmatpush.bf16.msra.mxu0 %v2140
    %3149 = vmatpush.bf16.msra.mxu0 %v2138
    %3150 = vmatpush.bf16.msra.mxu0 %v2136
    %3151 = vmatmul.bf16.gmra.mxu0 %v1053
    %v3152 = vpop.f32.mrf.mxu0
    %v3153 = vadd.f32 %v3140, %v3152
    %v3154 = vpop.f32.mrf.mxu0
    %3155 = vdwg.mxu0
    %3156 = vmatpush.bf16.msra.mxu0 %v2166
    %3157 = vmatpush.bf16.msra.mxu0 %v2164
    %3158 = vmatpush.bf16.msra.mxu0 %v2162
    %3159 = vmatpush.bf16.msra.mxu0 %v2160
    %3160 = vmatpush.bf16.msra.mxu0 %v2158
    %3161 = vmatpush.bf16.msra.mxu0 %v2156
    %3162 = vmatpush.bf16.msra.mxu0 %v2154
    %3163 = vmatpush.bf16.msra.mxu0 %v2152
    %3164 = vmatmul.bf16.gmra.mxu0 %v1054
    %v3165 = vpop.f32.mrf.mxu0
    %v3166 = vadd.f32 %v3153, %v3165
    %v3167 = vpop.f32.mrf.mxu0
    %3168 = vdwg.mxu0
    %3169 = vmatpush.bf16.msra.mxu0 %v2182
    %3170 = vmatpush.bf16.msra.mxu0 %v2180
    %3171 = vmatpush.bf16.msra.mxu0 %v2178
    %3172 = vmatpush.bf16.msra.mxu0 %v2176
    %3173 = vmatpush.bf16.msra.mxu0 %v2174
    %3174 = vmatpush.bf16.msra.mxu0 %v2172
    %3175 = vmatpush.bf16.msra.mxu0 %v2170
    %3176 = vmatpush.bf16.msra.mxu0 %v2168
    %3177 = vmatmul.bf16.gmra.mxu0 %v1055
    %v3178 = vpop.f32.mrf.mxu0
    %v3179 = vadd.f32 %v3166, %v3178
    %v3180 = vpop.f32.mrf.mxu0
    %3181 = vdwg.mxu0
    %3182 = vmatpush.bf16.msra.mxu0 %v2198
    %3183 = vmatpush.bf16.msra.mxu0 %v2196
    %3184 = vmatpush.bf16.msra.mxu0 %v2194
    %3185 = vmatpush.bf16.msra.mxu0 %v2192
    %3186 = vmatpush.bf16.msra.mxu0 %v2190
    %3187 = vmatpush.bf16.msra.mxu0 %v2188
    %3188 = vmatpush.bf16.msra.mxu0 %v2186
    %3189 = vmatpush.bf16.msra.mxu0 %v2184
    %3190 = vmatmul.bf16.gmra.mxu0 %v1056
    %v3191 = vpop.f32.mrf.mxu0
    %v3192 = vadd.f32 %v3179, %v3191
    %v3193 = vpop.f32.mrf.mxu0
    %3194 = vdwg.mxu0
    %3195 = vmatpush.bf16.msra.mxu0 %v2214
    %3196 = vmatpush.bf16.msra.mxu0 %v2212
    %3197 = vmatpush.bf16.msra.mxu0 %v2210
    %3198 = vmatpush.bf16.msra.mxu0 %v2208
    %3199 = vmatpush.bf16.msra.mxu0 %v2206
    %3200 = vmatpush.bf16.msra.mxu0 %v2204
    %3201 = vmatpush.bf16.msra.mxu0 %v2202
    %3202 = vmatpush.bf16.msra.mxu0 %v2200
    %3203 = vmatmul.bf16.gmra.mxu0 %v1057
    %v3204 = vpop.f32.mrf.mxu0
    %v3205 = vadd.f32 %v3192, %v3204
    %v3206 = vpop.f32.mrf.mxu0
    %3207 = vdwg.mxu0
    %3208 = vmatpush.bf16.msra.mxu0 %v1943
    %3209 = vmatpush.bf16.msra.mxu0 %v1941
    %3210 = vmatpush.bf16.msra.mxu0 %v1939
    %3211 = vmatpush.bf16.msra.mxu0 %v1937
    %3212 = vmatpush.bf16.msra.mxu0 %v1935
    %3213 = vmatpush.bf16.msra.mxu0 %v1933
    %3214 = vmatpush.bf16.msra.mxu0 %v1931
    %3215 = vmatpush.bf16.msra.mxu0 %v1929
    %3216 = vmatmul.bf16.gmra.mxu0 %v1022
    %v3217 = vpop.f32.mrf.mxu0
    %v3218 = vadd.f32 %v1061, %v3217
    %v3219 = vpop.f32.mrf.mxu0
    %3220 = vdwg.mxu0
    %3221 = vmatpush.bf16.msra.mxu0 %v1959
    %3222 = vmatpush.bf16.msra.mxu0 %v1957
    %3223 = vmatpush.bf16.msra.mxu0 %v1955
    %3224 = vmatpush.bf16.msra.mxu0 %v1953
    %3225 = vmatpush.bf16.msra.mxu0 %v1951
    %3226 = vmatpush.bf16.msra.mxu0 %v1949
    %3227 = vmatpush.bf16.msra.mxu0 %v1947
    %3228 = vmatpush.bf16.msra.mxu0 %v1945
    %3229 = vmatmul.bf16.gmra.mxu0 %v1023
    %v3230 = vpop.f32.mrf.mxu0
    %v3231 = vadd.f32 %v3218, %v3230
    %v3232 = vpop.f32.mrf.mxu0
    %3233 = vdwg.mxu0
    %3234 = vmatpush.bf16.msra.mxu0 %v1975
    %3235 = vmatpush.bf16.msra.mxu0 %v1973
    %3236 = vmatpush.bf16.msra.mxu0 %v1971
    %3237 = vmatpush.bf16.msra.mxu0 %v1969
    %3238 = vmatpush.bf16.msra.mxu0 %v1967
    %3239 = vmatpush.bf16.msra.mxu0 %v1965
    %3240 = vmatpush.bf16.msra.mxu0 %v1963
    %3241 = vmatpush.bf16.msra.mxu0 %v1961
    %3242 = vmatmul.bf16.gmra.mxu0 %v1024
    %v3243 = vpop.f32.mrf.mxu0
    %v3244 = vadd.f32 %v3231, %v3243
    %v3245 = vpop.f32.mrf.mxu0
    %3246 = vdwg.mxu0
    %3247 = vmatpush.bf16.msra.mxu0 %v1991
    %3248 = vmatpush.bf16.msra.mxu0 %v1989
    %3249 = vmatpush.bf16.msra.mxu0 %v1987
    %3250 = vmatpush.bf16.msra.mxu0 %v1985
    %3251 = vmatpush.bf16.msra.mxu0 %v1983
    %3252 = vmatpush.bf16.msra.mxu0 %v1981
    %3253 = vmatpush.bf16.msra.mxu0 %v1979
    %3254 = vmatpush.bf16.msra.mxu0 %v1977
    %3255 = vmatmul.bf16.gmra.mxu0 %v1025
    %v3256 = vpop.f32.mrf.mxu0
    %v3257 = vadd.f32 %v3244, %v3256
    %v3258 = vpop.f32.mrf.mxu0
    %3259 = vdwg.mxu0
    %3260 = vmatpush.bf16.msra.mxu0 %v2007
    %3261 = vmatpush.bf16.msra.mxu0 %v2005
    %3262 = vmatpush.bf16.msra.mxu0 %v2003
    %3263 = vmatpush.bf16.msra.mxu0 %v2001
    %3264 = vmatpush.bf16.msra.mxu0 %v1999
    %3265 = vmatpush.bf16.msra.mxu0 %v1997
    %3266 = vmatpush.bf16.msra.mxu0 %v1995
    %3267 = vmatpush.bf16.msra.mxu0 %v1993
    %3268 = vmatmul.bf16.gmra.mxu0 %v1026
    %v3269 = vpop.f32.mrf.mxu0
    %v3270 = vadd.f32 %v3257, %v3269
    %v3271 = vpop.f32.mrf.mxu0
    %3272 = vdwg.mxu0
    %3273 = vmatpush.bf16.msra.mxu0 %v2023
    %3274 = vmatpush.bf16.msra.mxu0 %v2021
    %3275 = vmatpush.bf16.msra.mxu0 %v2019
    %3276 = vmatpush.bf16.msra.mxu0 %v2017
    %3277 = vmatpush.bf16.msra.mxu0 %v2015
    %3278 = vmatpush.bf16.msra.mxu0 %v2013
    %3279 = vmatpush.bf16.msra.mxu0 %v2011
    %3280 = vmatpush.bf16.msra.mxu0 %v2009
    %3281 = vmatmul.bf16.gmra.mxu0 %v1027
    %v3282 = vpop.f32.mrf.mxu0
    %v3283 = vadd.f32 %v3270, %v3282
    %v3284 = vpop.f32.mrf.mxu0
    %3285 = vdwg.mxu0
    %3286 = vmatpush.bf16.msra.mxu0 %v2039
    %3287 = vmatpush.bf16.msra.mxu0 %v2037
    %3288 = vmatpush.bf16.msra.mxu0 %v2035
    %3289 = vmatpush.bf16.msra.mxu0 %v2033
    %3290 = vmatpush.bf16.msra.mxu0 %v2031
    %3291 = vmatpush.bf16.msra.mxu0 %v2029
    %3292 = vmatpush.bf16.msra.mxu0 %v2027
    %3293 = vmatpush.bf16.msra.mxu0 %v2025
    %3294 = vmatmul.bf16.gmra.mxu0 %v1028
    %v3295 = vpop.f32.mrf.mxu0
    %v3296 = vadd.f32 %v3283, %v3295
    %v3297 = vpop.f32.mrf.mxu0
    %3298 = vdwg.mxu0
    %3299 = vmatpush.bf16.msra.mxu0 %v2055
    %3300 = vmatpush.bf16.msra.mxu0 %v2053
    %3301 = vmatpush.bf16.msra.mxu0 %v2051
    %3302 = vmatpush.bf16.msra.mxu0 %v2049
    %3303 = vmatpush.bf16.msra.mxu0 %v2047
    %3304 = vmatpush.bf16.msra.mxu0 %v2045
    %3305 = vmatpush.bf16.msra.mxu0 %v2043
    %3306 = vmatpush.bf16.msra.mxu0 %v2041
    %3307 = vmatmul.bf16.gmra.mxu0 %v1029
    %v3308 = vpop.f32.mrf.mxu0
    %v3309 = vadd.f32 %v3296, %v3308
    %v3310 = vpop.f32.mrf.mxu0
    %3311 = vdwg.mxu0
    %3312 = vmatpush.bf16.msra.mxu0 %v2071
    %3313 = vmatpush.bf16.msra.mxu0 %v2069
    %3314 = vmatpush.bf16.msra.mxu0 %v2067
    %3315 = vmatpush.bf16.msra.mxu0 %v2065
    %3316 = vmatpush.bf16.msra.mxu0 %v2063
    %3317 = vmatpush.bf16.msra.mxu0 %v2061
    %3318 = vmatpush.bf16.msra.mxu0 %v2059
    %3319 = vmatpush.bf16.msra.mxu0 %v2057
    %3320 = vmatmul.bf16.gmra.mxu0 %v1030
    %v3321 = vpop.f32.mrf.mxu0
    %v3322 = vadd.f32 %v3309, %v3321
    %v3323 = vpop.f32.mrf.mxu0
    %3324 = vdwg.mxu0
    %3325 = vmatpush.bf16.msra.mxu0 %v2087
    %3326 = vmatpush.bf16.msra.mxu0 %v2085
    %3327 = vmatpush.bf16.msra.mxu0 %v2083
    %3328 = vmatpush.bf16.msra.mxu0 %v2081
    %3329 = vmatpush.bf16.msra.mxu0 %v2079
    %3330 = vmatpush.bf16.msra.mxu0 %v2077
    %3331 = vmatpush.bf16.msra.mxu0 %v2075
    %3332 = vmatpush.bf16.msra.mxu0 %v2073
    %3333 = vmatmul.bf16.gmra.mxu0 %v1031
    %v3334 = vpop.f32.mrf.mxu0
    %v3335 = vadd.f32 %v3322, %v3334
    %v3336 = vpop.f32.mrf.mxu0
    %3337 = vdwg.mxu0
    %3338 = vmatpush.bf16.msra.mxu0 %v2103
    %3339 = vmatpush.bf16.msra.mxu0 %v2101
    %3340 = vmatpush.bf16.msra.mxu0 %v2099
    %3341 = vmatpush.bf16.msra.mxu0 %v2097
    %3342 = vmatpush.bf16.msra.mxu0 %v2095
    %3343 = vmatpush.bf16.msra.mxu0 %v2093
    %3344 = vmatpush.bf16.msra.mxu0 %v2091
    %3345 = vmatpush.bf16.msra.mxu0 %v2089
    %3346 = vmatmul.bf16.gmra.mxu0 %v1032
    %v3347 = vpop.f32.mrf.mxu0
    %v3348 = vadd.f32 %v3335, %v3347
    %v3349 = vpop.f32.mrf.mxu0
    %3350 = vdwg.mxu0
    %3351 = vmatpush.bf16.msra.mxu0 %v2119
    %3352 = vmatpush.bf16.msra.mxu0 %v2117
    %3353 = vmatpush.bf16.msra.mxu0 %v2115
    %3354 = vmatpush.bf16.msra.mxu0 %v2113
    %3355 = vmatpush.bf16.msra.mxu0 %v2111
    %3356 = vmatpush.bf16.msra.mxu0 %v2109
    %3357 = vmatpush.bf16.msra.mxu0 %v2107
    %3358 = vmatpush.bf16.msra.mxu0 %v2105
    %3359 = vmatmul.bf16.gmra.mxu0 %v1033
    %v3360 = vpop.f32.mrf.mxu0
    %v3361 = vadd.f32 %v3348, %v3360
    %v3362 = vpop.f32.mrf.mxu0
    %3363 = vdwg.mxu0
    %3364 = vmatpush.bf16.msra.mxu0 %v2135
    %3365 = vmatpush.bf16.msra.mxu0 %v2133
    %3366 = vmatpush.bf16.msra.mxu0 %v2131
    %3367 = vmatpush.bf16.msra.mxu0 %v2129
    %3368 = vmatpush.bf16.msra.mxu0 %v2127
    %3369 = vmatpush.bf16.msra.mxu0 %v2125
    %3370 = vmatpush.bf16.msra.mxu0 %v2123
    %3371 = vmatpush.bf16.msra.mxu0 %v2121
    %3372 = vmatmul.bf16.gmra.mxu0 %v1052
    %v3373 = vpop.f32.mrf.mxu0
    %v3374 = vadd.f32 %v3361, %v3373
    %v3375 = vpop.f32.mrf.mxu0
    %3376 = vdwg.mxu0
    %3377 = vmatpush.bf16.msra.mxu0 %v2151
    %3378 = vmatpush.bf16.msra.mxu0 %v2149
    %3379 = vmatpush.bf16.msra.mxu0 %v2147
    %3380 = vmatpush.bf16.msra.mxu0 %v2145
    %3381 = vmatpush.bf16.msra.mxu0 %v2143
    %3382 = vmatpush.bf16.msra.mxu0 %v2141
    %3383 = vmatpush.bf16.msra.mxu0 %v2139
    %3384 = vmatpush.bf16.msra.mxu0 %v2137
    %3385 = vmatmul.bf16.gmra.mxu0 %v1053
    %v3386 = vpop.f32.mrf.mxu0
    %v3387 = vadd.f32 %v3374, %v3386
    %v3388 = vpop.f32.mrf.mxu0
    %3389 = vdwg.mxu0
    %3390 = vmatpush.bf16.msra.mxu0 %v2167
    %3391 = vmatpush.bf16.msra.mxu0 %v2165
    %3392 = vmatpush.bf16.msra.mxu0 %v2163
    %3393 = vmatpush.bf16.msra.mxu0 %v2161
    %3394 = vmatpush.bf16.msra.mxu0 %v2159
    %3395 = vmatpush.bf16.msra.mxu0 %v2157
    %3396 = vmatpush.bf16.msra.mxu0 %v2155
    %3397 = vmatpush.bf16.msra.mxu0 %v2153
    %3398 = vmatmul.bf16.gmra.mxu0 %v1054
    %v3399 = vpop.f32.mrf.mxu0
    %v3400 = vadd.f32 %v3387, %v3399
    %v3401 = vpop.f32.mrf.mxu0
    %3402 = vdwg.mxu0
    %3403 = vmatpush.bf16.msra.mxu0 %v2183
    %3404 = vmatpush.bf16.msra.mxu0 %v2181
    %3405 = vmatpush.bf16.msra.mxu0 %v2179
    %3406 = vmatpush.bf16.msra.mxu0 %v2177
    %3407 = vmatpush.bf16.msra.mxu0 %v2175
    %3408 = vmatpush.bf16.msra.mxu0 %v2173
    %3409 = vmatpush.bf16.msra.mxu0 %v2171
    %3410 = vmatpush.bf16.msra.mxu0 %v2169
    %3411 = vmatmul.bf16.gmra.mxu0 %v1055
    %v3412 = vpop.f32.mrf.mxu0
    %v3413 = vadd.f32 %v3400, %v3412
    %v3414 = vpop.f32.mrf.mxu0
    %3415 = vdwg.mxu0
    %3416 = vmatpush.bf16.msra.mxu0 %v2199
    %3417 = vmatpush.bf16.msra.mxu0 %v2197
    %3418 = vmatpush.bf16.msra.mxu0 %v2195
    %3419 = vmatpush.bf16.msra.mxu0 %v2193
    %3420 = vmatpush.bf16.msra.mxu0 %v2191
    %3421 = vmatpush.bf16.msra.mxu0 %v2189
    %3422 = vmatpush.bf16.msra.mxu0 %v2187
    %3423 = vmatpush.bf16.msra.mxu0 %v2185
    %3424 = vmatmul.bf16.gmra.mxu0 %v1056
    %v3425 = vpop.f32.mrf.mxu0
    %v3426 = vadd.f32 %v3413, %v3425
    %v3427 = vpop.f32.mrf.mxu0
    %3428 = vdwg.mxu0
    %3429 = vmatpush.bf16.msra.mxu0 %v2215
    %3430 = vmatpush.bf16.msra.mxu0 %v2213
    %3431 = vmatpush.bf16.msra.mxu0 %v2211
    %3432 = vmatpush.bf16.msra.mxu0 %v2209
    %3433 = vmatpush.bf16.msra.mxu0 %v2207
    %3434 = vmatpush.bf16.msra.mxu0 %v2205
    %3435 = vmatpush.bf16.msra.mxu0 %v2203
    %3436 = vmatpush.bf16.msra.mxu0 %v2201
    %3437 = vmatmul.bf16.gmra.mxu0 %v1057
    %v3438 = vpop.f32.mrf.mxu0
    %v3439 = vadd.f32 %v3426, %v3438
    %v3440 = vpop.f32.mrf.mxu0
    %3441 = vdwg.mxu0
    %v3442 = vmax.f32 %v3205, 0.0
    %v3443 = vmax.f32 %v3439, 0.0
    %vm3444 = vcmask 1043456
    %v3445 = vsel %vm3444, %v2972, 0.0
    %v3446 = vrot.slane %v3445, 4
    %v3447 = vadd.f32 %v3445, %v3446
    %v3448 = vrot.slane %v3447, 2
    %v3449 = vadd.f32 %v3447, %v3448
    %v3450 = vrot.slane %v3449, 1
    %v3451 = vadd.f32 %v3449, %v3450
    %v3452 = vsel %vm3444, %v2973, 0.0
    %v3453 = vrot.slane %v3452, 4
    %v3454 = vadd.f32 %v3452, %v3453
    %v3455 = vrot.slane %v3454, 2
    %v3456 = vadd.f32 %v3454, %v3455
    %v3457 = vrot.slane %v3456, 1
    %v3458 = vadd.f32 %v3456, %v3457
    %v3459 = vsel %vm3444, %v3442, 0.0
    %v3460 = vrot.slane %v3459, 4
    %v3461 = vadd.f32 %v3459, %v3460
    %v3462 = vrot.slane %v3461, 2
    %v3463 = vadd.f32 %v3461, %v3462
    %v3464 = vrot.slane %v3463, 1
    %v3465 = vadd.f32 %v3463, %v3464
    %v3466 = vsel %vm3444, %v3443, 0.0
    %v3467 = vrot.slane %v3466, 4
    %v3468 = vadd.f32 %v3466, %v3467
    %v3469 = vrot.slane %v3468, 2
    %v3470 = vadd.f32 %v3468, %v3469
    %v3471 = vrot.slane %v3470, 1
    %v3472 = vadd.f32 %v3470, %v3471
    %v3473 = vadd.f32 %v3451, %v3465
    %v3474 = vadd.f32 %v3458, %v3472
    %v3475 = vmul.f32 %v3473, 0.125
    %v3476 = vmul.f32 %v3474, 0.125
    %v3477 = vsub.f32 %v2972, %v3475
    %v3478 = vsub.f32 %v2973, %v3476
    %v3479 = vsub.f32 %v3442, %v3475
    %v3480 = vsub.f32 %v3443, %v3476
    %v3481 = vmul.f32 %v3477, %v3477
    %v3482 = vmul.f32 %v3478, %v3478
    %v3483 = vsel %vm3444, %v3481, 0.0
    %v3484 = vrot.slane %v3483, 4
    %v3485 = vadd.f32 %v3483, %v3484
    %v3486 = vrot.slane %v3485, 2
    %v3487 = vadd.f32 %v3485, %v3486
    %v3488 = vrot.slane %v3487, 1
    %v3489 = vadd.f32 %v3487, %v3488
    %v3490 = vsel %vm3444, %v3482, 0.0
    %v3491 = vrot.slane %v3490, 4
    %v3492 = vadd.f32 %v3490, %v3491
    %v3493 = vrot.slane %v3492, 2
    %v3494 = vadd.f32 %v3492, %v3493
    %v3495 = vrot.slane %v3494, 1
    %v3496 = vadd.f32 %v3494, %v3495
    %v3497 = vmul.f32 %v3479, %v3479
    %v3498 = vmul.f32 %v3480, %v3480
    %v3499 = vsel %vm3444, %v3497, 0.0
    %v3500 = vrot.slane %v3499, 4
    %v3501 = vadd.f32 %v3499, %v3500
    %v3502 = vrot.slane %v3501, 2
    %v3503 = vadd.f32 %v3501, %v3502
    %v3504 = vrot.slane %v3503, 1
    %v3505 = vadd.f32 %v3503, %v3504
    %v3506 = vsel %vm3444, %v3498, 0.0
    %v3507 = vrot.slane %v3506, 4
    %v3508 = vadd.f32 %v3506, %v3507
    %v3509 = vrot.slane %v3508, 2
    %v3510 = vadd.f32 %v3508, %v3509
    %v3511 = vrot.slane %v3510, 1
    %v3512 = vadd.f32 %v3510, %v3511
    %v3513 = vadd.f32 %v3489, %v3505
    %v3514 = vadd.f32 %v3496, %v3512
    %v3515 = vmul.f32 %v3513, 0.125
    %v3516 = vmul.f32 %v3514, 0.125
    %v3517 = vadd.f32 %v3515, 1e-05
    %v3518 = vadd.f32 %v3516, 1e-05
    %v3519 = vrsqrt.pop %v3517
    %v3520 = vmul.f32 %v3519, %v3517
    %v3521 = vmul.f32 %v3520, %v3519
    %v3522 = vmul.f32 0.5, %v3521
    %v3523 = vsub.f32 1.5, %v3522
    %v3524 = vmul.f32 %v3519, %v3523
    %vm3525 = vweird.f32 %v3517
    %vm3526 = vweird.f32 %v3519
    %vm3527 = vmor %vm3525, %vm3526
    %v3528 = vsel %vm3527, %v3519, %v3524
    %v3529 = vrsqrt.pop %v3518
    %v3530 = vmul.f32 %v3529, %v3518
    %v3531 = vmul.f32 %v3530, %v3529
    %v3532 = vmul.f32 0.5, %v3531
    %v3533 = vsub.f32 1.5, %v3532
    %v3534 = vmul.f32 %v3529, %v3533
    %vm3535 = vweird.f32 %v3518
    %vm3536 = vweird.f32 %v3529
    %vm3537 = vmor %vm3535, %vm3536
    %v3538 = vsel %vm3537, %v3529, %v3534
    %v3539 = vld [vmem:[#allocation15] sm:$0x3]
    %v3541 = vperm.slane %v3539, 0
    %v3542 = vperm.slane %v3539, 1
    %v3545 = vmul.f32 %v3528, %v3541
    %v3546 = vmul.f32 %v3538, %v3542
    %v3547 = vperm.slane %v3545, 0
    %v3548 = vperm.slane %v3546, 0
    %v3549 = vmul.f32 %v3477, %v3547
    %v3550 = vmul.f32 %v3478, %v3548
    %v3551 = vld [vmem:[#allocation17] sm:$0x3]
    %v3553 = vperm.slane %v3551, 0
    %v3554 = vperm.slane %v3551, 1
    %v3557 = vadd.f32 %v3549, %v3553
    %v3558 = vadd.f32 %v3550, %v3554
    %v3559 = vmul.f32 %v3479, %v3547
    %v3560 = vmul.f32 %v3480, %v3548
    %v3561 = vadd.f32 %v3559, %v3553
    %v3562 = vadd.f32 %v3560, %v3554
    %s3563 = smul.u32 4, 4
    %s3564 = smul.u32 %s3563, 32
    %s3565 = smul.u32 %s3564, 1
    %s3566 = sshll.u32 %s3565, 4
    %3567 = dma.done %s180, %s3566
    %v3568 = vpack.c.bf16 %v3557, %v3557
    %v3569 = vpack.c.bf16 %v3558, %v3558
    %v3570 = vld [vmem:[#allocation4] sm:$0xf]
    %v3571 = vld [vmem:[#allocation4 + $0x4] sm:$0xf]
    %v3572 = vld [vmem:[#allocation4 + $0x8] sm:$0xf]
    %v3573 = vld [vmem:[#allocation4 + $0xc] sm:$0xf]
    %v3574 = vld [vmem:[#allocation4 + $0x10] sm:$0xf]
    %v3575 = vld [vmem:[#allocation4 + $0x14] sm:$0xf]
    %v3576 = vld [vmem:[#allocation4 + $0x18] sm:$0xf]
    %v3577 = vld [vmem:[#allocation4 + $0x1c] sm:$0xf]
    %v3578 = vld [vmem:[#allocation4 + $0x20] sm:$0xf]
    %v3579 = vld [vmem:[#allocation4 + $0x24] sm:$0xf]
    %v3580 = vld [vmem:[#allocation4 + $0x28] sm:$0xf]
    %v3581 = vld [vmem:[#allocation4 + $0x2c] sm:$0xf]
    %v3582 = vld [vmem:[#allocation4 + $0x30] sm:$0xf]
    %v3583 = vld [vmem:[#allocation4 + $0x34] sm:$0xf]
    %v3584 = vld [vmem:[#allocation4 + $0x38] sm:$0xf]
    %v3585 = vld [vmem:[#allocation4 + $0x3c] sm:$0xf]
    %v3586 = vld [vmem:[#allocation4 + $0x40] sm:$0xf]
    %v3587 = vld [vmem:[#allocation4 + $0x44] sm:$0xf]
    %v3588 = vld [vmem:[#allocation4 + $0x48] sm:$0xf]
    %v3589 = vld [vmem:[#allocation4 + $0x4c] sm:$0xf]
    %v3590 = vld [vmem:[#allocation4 + $0x50] sm:$0xf]
    %v3591 = vld [vmem:[#allocation4 + $0x54] sm:$0xf]
    %v3592 = vld [vmem:[#allocation4 + $0x58] sm:$0xf]
    %v3593 = vld [vmem:[#allocation4 + $0x5c] sm:$0xf]
    %v3594 = vld [vmem:[#allocation4 + $0x60] sm:$0xf]
    %v3595 = vld [vmem:[#allocation4 + $0x64] sm:$0xf]
    %v3596 = vld [vmem:[#allocation4 + $0x68] sm:$0xf]
    %v3597 = vld [vmem:[#allocation4 + $0x6c] sm:$0xf]
    %v3598 = vld [vmem:[#allocation4 + $0x70] sm:$0xf]
    %v3599 = vld [vmem:[#allocation4 + $0x74] sm:$0xf]
    %v3600 = vld [vmem:[#allocation4 + $0x78] sm:$0xf]
    %v3601 = vld [vmem:[#allocation4 + $0x7c] sm:$0xf]
    %s3602 = scalar_lea.vmem [#allocation4], 128
    %v3603 = vld [vmem:[%s3602] sm:$0xf]
    %v3604 = vld [vmem:[%s3602 + $0x4] sm:$0xf]
    %v3605 = vld [vmem:[%s3602 + $0x8] sm:$0xf]
    %v3606 = vld [vmem:[%s3602 + $0xc] sm:$0xf]
    %v3607 = vld [vmem:[%s3602 + $0x10] sm:$0xf]
    %v3608 = vld [vmem:[%s3602 + $0x14] sm:$0xf]
    %v3609 = vld [vmem:[%s3602 + $0x18] sm:$0xf]
    %v3610 = vld [vmem:[%s3602 + $0x1c] sm:$0xf]
    %v3611 = vld [vmem:[%s3602 + $0x20] sm:$0xf]
    %v3612 = vld [vmem:[%s3602 + $0x24] sm:$0xf]
    %v3613 = vld [vmem:[%s3602 + $0x28] sm:$0xf]
    %v3614 = vld [vmem:[%s3602 + $0x2c] sm:$0xf]
    %v3615 = vld [vmem:[%s3602 + $0x30] sm:$0xf]
    %v3616 = vld [vmem:[%s3602 + $0x34] sm:$0xf]
    %v3617 = vld [vmem:[%s3602 + $0x38] sm:$0xf]
    %v3618 = vld [vmem:[%s3602 + $0x3c] sm:$0xf]
    %v3619 = vld [vmem:[%s3602 + $0x40] sm:$0xf]
    %v3620 = vld [vmem:[%s3602 + $0x44] sm:$0xf]
    %v3621 = vld [vmem:[%s3602 + $0x48] sm:$0xf]
    %v3622 = vld [vmem:[%s3602 + $0x4c] sm:$0xf]
    %v3623 = vld [vmem:[%s3602 + $0x50] sm:$0xf]
    %v3624 = vld [vmem:[%s3602 + $0x54] sm:$0xf]
    %v3625 = vld [vmem:[%s3602 + $0x58] sm:$0xf]
    %v3626 = vld [vmem:[%s3602 + $0x5c] sm:$0xf]
    %v3627 = vld [vmem:[%s3602 + $0x60] sm:$0xf]
    %v3628 = vld [vmem:[%s3602 + $0x64] sm:$0xf]
    %v3629 = vld [vmem:[%s3602 + $0x68] sm:$0xf]
    %v3630 = vld [vmem:[%s3602 + $0x6c] sm:$0xf]
    %v3631 = vld [vmem:[%s3602 + $0x70] sm:$0xf]
    %v3632 = vld [vmem:[%s3602 + $0x74] sm:$0xf]
    %v3633 = vld [vmem:[%s3602 + $0x78] sm:$0xf]
    %v3634 = vld [vmem:[%s3602 + $0x7c] sm:$0xf]
    %v3637 = vrot.slane %v3568, 1
    %v3638 = vrot.slane %v3569, 1
    %v3673 = vunpack.c.l.b16 %v3603
    %v3674 = vunpack.c.l.b16 %v3604
    %v3675 = vunpack.c.l.b16 %v3605
    %v3676 = vunpack.c.l.b16 %v3606
    %v3677 = vunpack.c.l.b16 %v3607
    %v3678 = vunpack.c.l.b16 %v3608
    %v3679 = vunpack.c.l.b16 %v3609
    %v3680 = vunpack.c.l.b16 %v3610
    %v3681 = vunpack.c.l.b16 %v3611
    %v3682 = vunpack.c.l.b16 %v3612
    %v3683 = vunpack.c.l.b16 %v3613
    %v3684 = vunpack.c.l.b16 %v3614
    %v3685 = vunpack.c.l.b16 %v3615
    %v3686 = vunpack.c.l.b16 %v3616
    %v3687 = vunpack.c.l.b16 %v3617
    %v3688 = vunpack.c.l.b16 %v3618
    %v3689 = vunpack.c.l.b16 %v3619
    %v3690 = vunpack.c.l.b16 %v3620
    %v3691 = vunpack.c.l.b16 %v3621
    %v3692 = vunpack.c.l.b16 %v3622
    %v3693 = vunpack.c.l.b16 %v3623
    %v3694 = vunpack.c.l.b16 %v3624
    %v3695 = vunpack.c.l.b16 %v3625
    %v3696 = vunpack.c.l.b16 %v3626
    %v3697 = vunpack.c.l.b16 %v3627
    %v3698 = vunpack.c.l.b16 %v3628
    %v3699 = vunpack.c.l.b16 %v3629
    %v3700 = vunpack.c.l.b16 %v3630
    %v3701 = vunpack.c.l.b16 %v3631
    %v3702 = vunpack.c.l.b16 %v3632
    %v3703 = vunpack.c.l.b16 %v3633
    %v3704 = vunpack.c.l.b16 %v3634
    %v3705 = vpack.c.b16 %v3674, %v3673
    %v3706 = vpack.c.b16 %v3676, %v3675
    %v3707 = vpack.c.b16 %v3678, %v3677
    %v3708 = vpack.c.b16 %v3680, %v3679
    %v3709 = vpack.c.b16 %v3682, %v3681
    %v3710 = vpack.c.b16 %v3684, %v3683
    %v3711 = vpack.c.b16 %v3686, %v3685
    %v3712 = vpack.c.b16 %v3688, %v3687
    %v3713 = vpack.c.b16 %v3690, %v3689
    %v3714 = vpack.c.b16 %v3692, %v3691
    %v3715 = vpack.c.b16 %v3694, %v3693
    %v3716 = vpack.c.b16 %v3696, %v3695
    %v3717 = vpack.c.b16 %v3698, %v3697
    %v3718 = vpack.c.b16 %v3700, %v3699
    %v3719 = vpack.c.b16 %v3702, %v3701
    %v3720 = vpack.c.b16 %v3704, %v3703
    %3737 = vmatpush.bf16.msra.mxu0 %v3712
    %3738 = vmatpush.bf16.msra.mxu0 %v3711
    %3739 = vmatpush.bf16.msra.mxu0 %v3710
    %3740 = vmatpush.bf16.msra.mxu0 %v3709
    %3741 = vmatpush.bf16.msra.mxu0 %v3708
    %3742 = vmatpush.bf16.msra.mxu0 %v3707
    %3743 = vmatpush.bf16.msra.mxu0 %v3706
    %3744 = vmatpush.bf16.msra.mxu0 %v3705
    %3745 = vmatmul.bf16.gmra.mxu0 %v3637
    %v3746 = vpop.f32.mrf.mxu0
    %v3747 = vadd.f32 0.0, %v3746
    %v3748 = vpop.f32.mrf.mxu0
    %3749 = vdwg.mxu0
    %3750 = vmatpush.bf16.msra.mxu0 %v3720
    %3751 = vmatpush.bf16.msra.mxu0 %v3719
    %3752 = vmatpush.bf16.msra.mxu0 %v3718
    %3753 = vmatpush.bf16.msra.mxu0 %v3717
    %3754 = vmatpush.bf16.msra.mxu0 %v3716
    %3755 = vmatpush.bf16.msra.mxu0 %v3715
    %3756 = vmatpush.bf16.msra.mxu0 %v3714
    %3757 = vmatpush.bf16.msra.mxu0 %v3713
    %3758 = vmatmul.bf16.gmra.mxu0 %v3638
    %v3759 = vpop.f32.mrf.mxu0
    %v3760 = vadd.f32 %v3747, %v3759
    %v3761 = vpop.f32.mrf.mxu0
    %3762 = vdwg.mxu0
    %v3795 = vunpack.c.l.b16 %v3570
    %v3796 = vunpack.c.l.b16 %v3571
    %v3797 = vunpack.c.l.b16 %v3572
    %v3798 = vunpack.c.l.b16 %v3573
    %v3799 = vunpack.c.l.b16 %v3574
    %v3800 = vunpack.c.l.b16 %v3575
    %v3801 = vunpack.c.l.b16 %v3576
    %v3802 = vunpack.c.l.b16 %v3577
    %v3803 = vunpack.c.l.b16 %v3578
    %v3804 = vunpack.c.l.b16 %v3579
    %v3805 = vunpack.c.l.b16 %v3580
    %v3806 = vunpack.c.l.b16 %v3581
    %v3807 = vunpack.c.l.b16 %v3582
    %v3808 = vunpack.c.l.b16 %v3583
    %v3809 = vunpack.c.l.b16 %v3584
    %v3810 = vunpack.c.l.b16 %v3585
    %v3811 = vunpack.c.l.b16 %v3586
    %v3812 = vunpack.c.l.b16 %v3587
    %v3813 = vunpack.c.l.b16 %v3588
    %v3814 = vunpack.c.l.b16 %v3589
    %v3815 = vunpack.c.l.b16 %v3590
    %v3816 = vunpack.c.l.b16 %v3591
    %v3817 = vunpack.c.l.b16 %v3592
    %v3818 = vunpack.c.l.b16 %v3593
    %v3819 = vunpack.c.l.b16 %v3594
    %v3820 = vunpack.c.l.b16 %v3595
    %v3821 = vunpack.c.l.b16 %v3596
    %v3822 = vunpack.c.l.b16 %v3597
    %v3823 = vunpack.c.l.b16 %v3598
    %v3824 = vunpack.c.l.b16 %v3599
    %v3825 = vunpack.c.l.b16 %v3600
    %v3826 = vunpack.c.l.b16 %v3601
    %v3827 = vpack.c.b16 %v3796, %v3795
    %v3828 = vpack.c.b16 %v3798, %v3797
    %v3829 = vpack.c.b16 %v3800, %v3799
    %v3830 = vpack.c.b16 %v3802, %v3801
    %v3831 = vpack.c.b16 %v3804, %v3803
    %v3832 = vpack.c.b16 %v3806, %v3805
    %v3833 = vpack.c.b16 %v3808, %v3807
    %v3834 = vpack.c.b16 %v3810, %v3809
    %v3835 = vpack.c.b16 %v3812, %v3811
    %v3836 = vpack.c.b16 %v3814, %v3813
    %v3837 = vpack.c.b16 %v3816, %v3815
    %v3838 = vpack.c.b16 %v3818, %v3817
    %v3839 = vpack.c.b16 %v3820, %v3819
    %v3840 = vpack.c.b16 %v3822, %v3821
    %v3841 = vpack.c.b16 %v3824, %v3823
    %v3842 = vpack.c.b16 %v3826, %v3825
    %3859 = vmatpush.bf16.msra.mxu0 %v3834
    %3860 = vmatpush.bf16.msra.mxu0 %v3833
    %3861 = vmatpush.bf16.msra.mxu0 %v3832
    %3862 = vmatpush.bf16.msra.mxu0 %v3831
    %3863 = vmatpush.bf16.msra.mxu0 %v3830
    %3864 = vmatpush.bf16.msra.mxu0 %v3829
    %3865 = vmatpush.bf16.msra.mxu0 %v3828
    %3866 = vmatpush.bf16.msra.mxu0 %v3827
    %3867 = vmatmul.bf16.gmra.mxu0 %v3568
    %v3868 = vpop.f32.mrf.mxu0
    %v3869 = vadd.f32 %v3760, %v3868
    %v3870 = vpop.f32.mrf.mxu0
    %3871 = vdwg.mxu0
    %3872 = vmatpush.bf16.msra.mxu0 %v3842
    %3873 = vmatpush.bf16.msra.mxu0 %v3841
    %3874 = vmatpush.bf16.msra.mxu0 %v3840
    %3875 = vmatpush.bf16.msra.mxu0 %v3839
    %3876 = vmatpush.bf16.msra.mxu0 %v3838
    %3877 = vmatpush.bf16.msra.mxu0 %v3837
    %3878 = vmatpush.bf16.msra.mxu0 %v3836
    %3879 = vmatpush.bf16.msra.mxu0 %v3835
    %3880 = vmatmul.bf16.gmra.mxu0 %v3569
    %v3881 = vpop.f32.mrf.mxu0
    %v3882 = vadd.f32 %v3869, %v3881
    %v3883 = vpop.f32.mrf.mxu0
    %3884 = vdwg.mxu0
    %v3885 = vpack.c.bf16 %v3561, %v3561
    %v3886 = vpack.c.bf16 %v3562, %v3562
    %s3887 = scalar_lea.vmem [#allocation4], 256
    %v3888 = vld [vmem:[%s3887] sm:$0xf]
    %v3889 = vld [vmem:[%s3887 + $0x4] sm:$0xf]
    %v3890 = vld [vmem:[%s3887 + $0x8] sm:$0xf]
    %v3891 = vld [vmem:[%s3887 + $0xc] sm:$0xf]
    %v3892 = vld [vmem:[%s3887 + $0x10] sm:$0xf]
    %v3893 = vld [vmem:[%s3887 + $0x14] sm:$0xf]
    %v3894 = vld [vmem:[%s3887 + $0x18] sm:$0xf]
    %v3895 = vld [vmem:[%s3887 + $0x1c] sm:$0xf]
    %v3896 = vld [vmem:[%s3887 + $0x20] sm:$0xf]
    %v3897 = vld [vmem:[%s3887 + $0x24] sm:$0xf]
    %v3898 = vld [vmem:[%s3887 + $0x28] sm:$0xf]
    %v3899 = vld [vmem:[%s3887 + $0x2c] sm:$0xf]
    %v3900 = vld [vmem:[%s3887 + $0x30] sm:$0xf]
    %v3901 = vld [vmem:[%s3887 + $0x34] sm:$0xf]
    %v3902 = vld [vmem:[%s3887 + $0x38] sm:$0xf]
    %v3903 = vld [vmem:[%s3887 + $0x3c] sm:$0xf]
    %v3904 = vld [vmem:[%s3887 + $0x40] sm:$0xf]
    %v3905 = vld [vmem:[%s3887 + $0x44] sm:$0xf]
    %v3906 = vld [vmem:[%s3887 + $0x48] sm:$0xf]
    %v3907 = vld [vmem:[%s3887 + $0x4c] sm:$0xf]
    %v3908 = vld [vmem:[%s3887 + $0x50] sm:$0xf]
    %v3909 = vld [vmem:[%s3887 + $0x54] sm:$0xf]
    %v3910 = vld [vmem:[%s3887 + $0x58] sm:$0xf]
    %v3911 = vld [vmem:[%s3887 + $0x5c] sm:$0xf]
    %v3912 = vld [vmem:[%s3887 + $0x60] sm:$0xf]
    %v3913 = vld [vmem:[%s3887 + $0x64] sm:$0xf]
    %v3914 = vld [vmem:[%s3887 + $0x68] sm:$0xf]
    %v3915 = vld [vmem:[%s3887 + $0x6c] sm:$0xf]
    %v3916 = vld [vmem:[%s3887 + $0x70] sm:$0xf]
    %v3917 = vld [vmem:[%s3887 + $0x74] sm:$0xf]
    %v3918 = vld [vmem:[%s3887 + $0x78] sm:$0xf]
    %v3919 = vld [vmem:[%s3887 + $0x7c] sm:$0xf]
    %v3952 = vunpack.c.l.b16 %v3888
    %v3953 = vunpack.c.l.b16 %v3889
    %v3954 = vunpack.c.l.b16 %v3890
    %v3955 = vunpack.c.l.b16 %v3891
    %v3956 = vunpack.c.l.b16 %v3892
    %v3957 = vunpack.c.l.b16 %v3893
    %v3958 = vunpack.c.l.b16 %v3894
    %v3959 = vunpack.c.l.b16 %v3895
    %v3960 = vunpack.c.l.b16 %v3896
    %v3961 = vunpack.c.l.b16 %v3897
    %v3962 = vunpack.c.l.b16 %v3898
    %v3963 = vunpack.c.l.b16 %v3899
    %v3964 = vunpack.c.l.b16 %v3900
    %v3965 = vunpack.c.l.b16 %v3901
    %v3966 = vunpack.c.l.b16 %v3902
    %v3967 = vunpack.c.l.b16 %v3903
    %v3968 = vunpack.c.l.b16 %v3904
    %v3969 = vunpack.c.l.b16 %v3905
    %v3970 = vunpack.c.l.b16 %v3906
    %v3971 = vunpack.c.l.b16 %v3907
    %v3972 = vunpack.c.l.b16 %v3908
    %v3973 = vunpack.c.l.b16 %v3909
    %v3974 = vunpack.c.l.b16 %v3910
    %v3975 = vunpack.c.l.b16 %v3911
    %v3976 = vunpack.c.l.b16 %v3912
    %v3977 = vunpack.c.l.b16 %v3913
    %v3978 = vunpack.c.l.b16 %v3914
    %v3979 = vunpack.c.l.b16 %v3915
    %v3980 = vunpack.c.l.b16 %v3916
    %v3981 = vunpack.c.l.b16 %v3917
    %v3982 = vunpack.c.l.b16 %v3918
    %v3983 = vunpack.c.l.b16 %v3919
    %v3984 = vpack.c.b16 %v3953, %v3952
    %v3985 = vpack.c.b16 %v3955, %v3954
    %v3986 = vpack.c.b16 %v3957, %v3956
    %v3987 = vpack.c.b16 %v3959, %v3958
    %v3988 = vpack.c.b16 %v3961, %v3960
    %v3989 = vpack.c.b16 %v3963, %v3962
    %v3990 = vpack.c.b16 %v3965, %v3964
    %v3991 = vpack.c.b16 %v3967, %v3966
    %v3992 = vpack.c.b16 %v3969, %v3968
    %v3993 = vpack.c.b16 %v3971, %v3970
    %v3994 = vpack.c.b16 %v3973, %v3972
    %v3995 = vpack.c.b16 %v3975, %v3974
    %v3996 = vpack.c.b16 %v3977, %v3976
    %v3997 = vpack.c.b16 %v3979, %v3978
    %v3998 = vpack.c.b16 %v3981, %v3980
    %v3999 = vpack.c.b16 %v3983, %v3982
    %4016 = vmatpush.bf16.msra.mxu0 %v3991
    %4017 = vmatpush.bf16.msra.mxu0 %v3990
    %4018 = vmatpush.bf16.msra.mxu0 %v3989
    %4019 = vmatpush.bf16.msra.mxu0 %v3988
    %4020 = vmatpush.bf16.msra.mxu0 %v3987
    %4021 = vmatpush.bf16.msra.mxu0 %v3986
    %4022 = vmatpush.bf16.msra.mxu0 %v3985
    %4023 = vmatpush.bf16.msra.mxu0 %v3984
    %4024 = vmatmul.bf16.gmra.mxu0 %v3885
    %v4025 = vpop.f32.mrf.mxu0
    %v4026 = vadd.f32 0.0, %v4025
    %v4027 = vpop.f32.mrf.mxu0
    %4028 = vdwg.mxu0
    %4029 = vmatpush.bf16.msra.mxu0 %v3999
    %4030 = vmatpush.bf16.msra.mxu0 %v3998
    %4031 = vmatpush.bf16.msra.mxu0 %v3997
    %4032 = vmatpush.bf16.msra.mxu0 %v3996
    %4033 = vmatpush.bf16.msra.mxu0 %v3995
    %4034 = vmatpush.bf16.msra.mxu0 %v3994
    %4035 = vmatpush.bf16.msra.mxu0 %v3993
    %4036 = vmatpush.bf16.msra.mxu0 %v3992
    %4037 = vmatmul.bf16.gmra.mxu0 %v3886
    %v4038 = vpop.f32.mrf.mxu0
    %v4039 = vadd.f32 %v4026, %v4038
    %v4040 = vpop.f32.mrf.mxu0
    %4041 = vdwg.mxu0
    %v4042 = vadd.f32 %v3882, %v4039
    %s4043 = scalar_lea.vmem [#allocation4], 384
    %v4044 = vld [vmem:[%s4043] sm:$0xf]
    %v4045 = vld [vmem:[%s4043 + $0x4] sm:$0xf]
    %v4046 = vld [vmem:[%s4043 + $0x8] sm:$0xf]
    %v4047 = vld [vmem:[%s4043 + $0xc] sm:$0xf]
    %v4048 = vld [vmem:[%s4043 + $0x10] sm:$0xf]
    %v4049 = vld [vmem:[%s4043 + $0x14] sm:$0xf]
    %v4050 = vld [vmem:[%s4043 + $0x18] sm:$0xf]
    %v4051 = vld [vmem:[%s4043 + $0x1c] sm:$0xf]
    %v4052 = vld [vmem:[%s4043 + $0x20] sm:$0xf]
    %v4053 = vld [vmem:[%s4043 + $0x24] sm:$0xf]
    %v4054 = vld [vmem:[%s4043 + $0x28] sm:$0xf]
    %v4055 = vld [vmem:[%s4043 + $0x2c] sm:$0xf]
    %v4056 = vld [vmem:[%s4043 + $0x30] sm:$0xf]
    %v4057 = vld [vmem:[%s4043 + $0x34] sm:$0xf]
    %v4058 = vld [vmem:[%s4043 + $0x38] sm:$0xf]
    %v4059 = vld [vmem:[%s4043 + $0x3c] sm:$0xf]
    %v4060 = vld [vmem:[%s4043 + $0x40] sm:$0xf]
    %v4061 = vld [vmem:[%s4043 + $0x44] sm:$0xf]
    %v4062 = vld [vmem:[%s4043 + $0x48] sm:$0xf]
    %v4063 = vld [vmem:[%s4043 + $0x4c] sm:$0xf]
    %v4064 = vld [vmem:[%s4043 + $0x50] sm:$0xf]
    %v4065 = vld [vmem:[%s4043 + $0x54] sm:$0xf]
    %v4066 = vld [vmem:[%s4043 + $0x58] sm:$0xf]
    %v4067 = vld [vmem:[%s4043 + $0x5c] sm:$0xf]
    %v4068 = vld [vmem:[%s4043 + $0x60] sm:$0xf]
    %v4069 = vld [vmem:[%s4043 + $0x64] sm:$0xf]
    %v4070 = vld [vmem:[%s4043 + $0x68] sm:$0xf]
    %v4071 = vld [vmem:[%s4043 + $0x6c] sm:$0xf]
    %v4072 = vld [vmem:[%s4043 + $0x70] sm:$0xf]
    %v4073 = vld [vmem:[%s4043 + $0x74] sm:$0xf]
    %v4074 = vld [vmem:[%s4043 + $0x78] sm:$0xf]
    %v4075 = vld [vmem:[%s4043 + $0x7c] sm:$0xf]
    %v4078 = vrot.slane %v3885, 1
    %v4079 = vrot.slane %v3886, 1
    %v4114 = vunpack.c.l.b16 %v4044
    %v4115 = vunpack.c.l.b16 %v4045
    %v4116 = vunpack.c.l.b16 %v4046
    %v4117 = vunpack.c.l.b16 %v4047
    %v4118 = vunpack.c.l.b16 %v4048
    %v4119 = vunpack.c.l.b16 %v4049
    %v4120 = vunpack.c.l.b16 %v4050
    %v4121 = vunpack.c.l.b16 %v4051
    %v4122 = vunpack.c.l.b16 %v4052
    %v4123 = vunpack.c.l.b16 %v4053
    %v4124 = vunpack.c.l.b16 %v4054
    %v4125 = vunpack.c.l.b16 %v4055
    %v4126 = vunpack.c.l.b16 %v4056
    %v4127 = vunpack.c.l.b16 %v4057
    %v4128 = vunpack.c.l.b16 %v4058
    %v4129 = vunpack.c.l.b16 %v4059
    %v4130 = vunpack.c.l.b16 %v4060
    %v4131 = vunpack.c.l.b16 %v4061
    %v4132 = vunpack.c.l.b16 %v4062
    %v4133 = vunpack.c.l.b16 %v4063
    %v4134 = vunpack.c.l.b16 %v4064
    %v4135 = vunpack.c.l.b16 %v4065
    %v4136 = vunpack.c.l.b16 %v4066
    %v4137 = vunpack.c.l.b16 %v4067
    %v4138 = vunpack.c.l.b16 %v4068
    %v4139 = vunpack.c.l.b16 %v4069
    %v4140 = vunpack.c.l.b16 %v4070
    %v4141 = vunpack.c.l.b16 %v4071
    %v4142 = vunpack.c.l.b16 %v4072
    %v4143 = vunpack.c.l.b16 %v4073
    %v4144 = vunpack.c.l.b16 %v4074
    %v4145 = vunpack.c.l.b16 %v4075
    %v4146 = vpack.c.b16 %v4115, %v4114
    %v4147 = vpack.c.b16 %v4117, %v4116
    %v4148 = vpack.c.b16 %v4119, %v4118
    %v4149 = vpack.c.b16 %v4121, %v4120
    %v4150 = vpack.c.b16 %v4123, %v4122
    %v4151 = vpack.c.b16 %v4125, %v4124
    %v4152 = vpack.c.b16 %v4127, %v4126
    %v4153 = vpack.c.b16 %v4129, %v4128
    %v4154 = vpack.c.b16 %v4131, %v4130
    %v4155 = vpack.c.b16 %v4133, %v4132
    %v4156 = vpack.c.b16 %v4135, %v4134
    %v4157 = vpack.c.b16 %v4137, %v4136
    %v4158 = vpack.c.b16 %v4139, %v4138
    %v4159 = vpack.c.b16 %v4141, %v4140
    %v4160 = vpack.c.b16 %v4143, %v4142
    %v4161 = vpack.c.b16 %v4145, %v4144
    %4178 = vmatpush.bf16.msra.mxu0 %v4153
    %4179 = vmatpush.bf16.msra.mxu0 %v4152
    %4180 = vmatpush.bf16.msra.mxu0 %v4151
    %4181 = vmatpush.bf16.msra.mxu0 %v4150
    %4182 = vmatpush.bf16.msra.mxu0 %v4149
    %4183 = vmatpush.bf16.msra.mxu0 %v4148
    %4184 = vmatpush.bf16.msra.mxu0 %v4147
    %4185 = vmatpush.bf16.msra.mxu0 %v4146
    %4186 = vmatmul.bf16.gmra.mxu0 %v4078
    %v4187 = vpop.f32.mrf.mxu0
    %v4188 = vadd.f32 0.0, %v4187
    %v4189 = vpop.f32.mrf.mxu0
    %4190 = vdwg.mxu0
    %4191 = vmatpush.bf16.msra.mxu0 %v4161
    %4192 = vmatpush.bf16.msra.mxu0 %v4160
    %4193 = vmatpush.bf16.msra.mxu0 %v4159
    %4194 = vmatpush.bf16.msra.mxu0 %v4158
    %4195 = vmatpush.bf16.msra.mxu0 %v4157
    %4196 = vmatpush.bf16.msra.mxu0 %v4156
    %4197 = vmatpush.bf16.msra.mxu0 %v4155
    %4198 = vmatpush.bf16.msra.mxu0 %v4154
    %4199 = vmatmul.bf16.gmra.mxu0 %v4079
    %v4200 = vpop.f32.mrf.mxu0
    %v4201 = vadd.f32 %v4188, %v4200
    %v4202 = vpop.f32.mrf.mxu0
    %4203 = vdwg.mxu0
    %v4204 = vadd.f32 %v4042, %v4201
    %v4205 = vld [vmem:[#allocation18] sm:$0x1]
    %v4207 = vperm.slane %v4205, 0
    %v4209 = vadd.f32 %v4204, %v4207
    %v4210 = vmax.f32 %v4209, 0.0
    %v4211 = vld [vmem:[#allocation20] sm:$0x1]
    %v4213 = vperm.slane %v4211, 0
    %v4215 = vmul.f32 %v4210, %v4213
    %vm4216 = vcmask 517120
    %v4217 = vsel %vm4216, %v4215, 0.0
    %4218 = vadd.xlane.f32.xlu0 %v4217
    %v4219 = vpop.xlane.xlu0 %4218
    %v4220 = vld [vmem:[#allocation6] sm:$0x1]
    %v4222 = vperm.slane %v4220, 0
    %v4224 = vadd.f32 %v4219, %v4222
    %vm4225 = vcmask 1024
    %4226 = vst.msk [vmem:[%s13] sm:$0x3] %vm4225, %v4224
    // Predicated region
    $region105: #{critic_forward.1} parent=1 // pred_check
      _
    $region106: #{critic_forward.1} parent=1 // pred_check_branch
      %4228 = sbr.rel (0) target = $region108
    $region107: #{critic_forward.1} parent=1 // pred_region
      _
    $region108: #{critic_forward.1} parent=1 // pred_fallthru
      _
    // Predicated region
    $region109: #{critic_forward.1} parent=1 // pred_check
      _
    $region110: #{critic_forward.1} parent=1 // pred_check_branch
      %4230 = sbr.rel (0) target = $region112
    $region111: #{critic_forward.1} parent=1 // pred_region
      _
    $region112: #{critic_forward.1} parent=1 // pred_fallthru
      _
    %4231 = vsyncpa [#allocation8], 1
    %4232 = vsyncpa [#allocation10], 1
    %4233 = vsyncpa [#allocation13], 1
    %4234 = vsyncpa [#allocation16], 1
    %4235 = vsyncpa [#allocation19], 1
  %4236 = vsyncmov [#allocation5]
  %s4237 = vpop.sfrf %4236
  %p4238 = scmp.eq.s32.totalorder %s4237, 0
  %p4239 = pneg %p4238
  %4241 = shalt.err (%p4239)
  %s4242 = scalar_lea.sflag [#allocation5], 1
  %4243 = vsyncmov %s4242
  %s4244 = vpop.sfrf %4243
  %p4245 = scmp.eq.s32.totalorder %s4244, 0
  %p4246 = pneg %p4245
  %4248 = shalt.err (%p4246)

</llo_original>
